<compile_context>
chip_gen: v6e
topology: v6e:2x2x1
jax: 0.10.0
libtpu: 0.0.40
codegen_flags: <defaults>
</compile_context>

<pallas_src>
import functools
import math

import jax
import jax.numpy as jnp
import numpy as np
from jax.experimental import pallas as pl
from jax.experimental.pallas import tpu as pltpu

# Make f32 matmuls deterministic/high-precision both in the kernel and the reference.
jax.config.update("jax_default_matmul_precision", "float32")


def _predictor_kernel(q_ref, aq_ref, whc_ref, whd_ref, whp_ref, wv_ref, bv_ref,
                      ctx_ref, mask_ref, out_ref, *, mm_dtype):
    # Per-grid-step views:
    #   q_ref    : [C, E]        (grid-invariant)
    #   aq_ref   : [C, 4E]       q @ Wh_q + bh (hoisted in the wrapper)
    #   whc/whd/whp : [E, 4E]    row blocks of Wh for the ctx / |q-c| / q*c segments
    #   wv_ref   : [1, 4E]
    #   bv_ref   : [1, 1]        SMEM scalar
    #   ctx_ref  : [TB, T, E]    TB batch elements per step
    #   mask_ref : [TB, 1, T]
    #   out_ref  : [1, TB, C]
    C, E = q_ref.shape
    FE = aq_ref.shape[1]
    TB, T, _ = ctx_ref.shape
    R = TB * C * T

    q = q_ref[...]            # [C, E]
    aq = aq_ref[...]          # [C, FE]
    whc = whc_ref[...]        # [E, FE]
    whd = whd_ref[...]        # [E, FE]
    whp = whp_ref[...]        # [E, FE]
    wv = wv_ref[...]          # [1, FE]
    bv = bv_ref[0, 0]         # scalar (SMEM)
    ctx = ctx_ref[...]        # [TB, T, E]
    mvalid = mask_ref[...]    # [TB, 1, T]

    def mm(x, w):
        # f32 accumulate; optionally bf16 inputs on v6e/v7x (mm_dtype=bf16).
        return jnp.dot(x.astype(mm_dtype), w.astype(mm_dtype),
                       preferred_element_type=jnp.float32)

    # ---- stage 1: scores over all (query c, context t) pairs ----
    # hid[b,c,t] = aq[c] + ctx[b,t]@Wh_c + |q[c]-ctx[b,t]|@Wh_d + (q[c]*ctx[b,t])@Wh_p
    ac = mm(ctx.reshape(TB * T, E), whc).reshape(TB, 1, T, FE)

    qb = q[None, :, None, :]                  # [1, C, 1, E]
    cb = ctx[:, None, :, :]                   # [TB, 1, T, E]
    dif = jnp.abs(qb - cb).reshape(R, E)      # [R, E]
    prd = (qb * cb).reshape(R, E)             # [R, E]
    hid = mm(dif, whd) + mm(prd, whp)         # [R, FE]
    # T == sublane tile (8) at the demo shapes, so these reshapes are layout-free.
    hid = hid.reshape(TB, C, T, FE) + ac + aq[None, :, None, :]

    # v projection (FE == 128 -> one cross-lane reduce on the XLU).
    # bv is omitted here: softmax is shift-invariant.
    scores = jnp.sum(jnp.tanh(hid) * wv, axis=-1)              # [TB, C, T]
    scores = jnp.where(mvalid < 1.0, jnp.float32(-1e10), scores)

    # softmax over T with normalization deferred to g (divide [C,E], not [C,T]).
    smax = jnp.max(scores, axis=-1, keepdims=True)             # [TB, C, 1]
    p_un = jnp.exp(scores - smax)                              # [TB, C, T]
    denom = jnp.sum(p_un, axis=-1, keepdims=True)              # [TB, C, 1]
    g_un = jnp.einsum("bct,bte->bce", p_un, ctx,
                      preferred_element_type=jnp.float32)      # [TB, C, E]
    # pl.reciprocal keeps the divide off the VALU (EUP path).  approx=True would
    # be faster still but only ~1e-3 accurate; exact keeps the 1e-4 validation.
    g = g_un * pl.reciprocal(denom, approx=False)              # [TB, C, E]

    # ---- stage 2: score (query, g) with the same split weights ----
    q3 = q[None, :, :]                                         # [1, C, E]
    g2 = g.reshape(TB * C, E)
    dif2 = jnp.abs(q3 - g).reshape(TB * C, E)
    prd2 = (q3 * g).reshape(TB * C, E)
    hid2 = mm(g2, whc) + mm(dif2, whd) + mm(prd2, whp)         # [TB*C, FE]
    hid2 = hid2.reshape(TB, C, FE) + aq[None, :, :]
    pred = jnp.sum(jnp.tanh(hid2) * wv, axis=-1) + bv          # [TB, C]

    out_ref[0] = pred.astype(out_ref.dtype)                    # lane-dense (TB, C) slab


def adaptive_addition_predictor(query, context, mask, Wh, bh, wv, bv,
                                *, batch_tile=None, matmul_dtype=jnp.float32):
    """Pallas wrapper. Returns [B, C] (same semantics as the PyTorch module)."""
    B, T, E = context.shape
    C = query.shape[0]
    FE = 4 * E

    # ---- batch tiling: >=128 feature-matmul rows per step, >=2 grid steps when possible ----
    if batch_tile is None:
        tb = max(1, -(-128 // (C * T)))        # ceil(128 / (C*T))
        tb = min(tb, max(1, B // 2))           # keep >=2 grid steps for dual-TC v7x
    else:
        tb = batch_tile
    tb = max(1, min(tb, B))
    G = -(-B // tb)
    Bp = G * tb

    # Pad batch to a multiple of tb (padded rows fully masked; sliced off at the end).
    if Bp != B:
        context = jnp.concatenate(
            [context, jnp.zeros((Bp - B, T, E), context.dtype)], axis=0)
        mask = jnp.concatenate(
            [mask, jnp.zeros((Bp - B, T), mask.dtype)], axis=0)

    mask3 = mask.astype(jnp.float32).reshape(Bp, 1, T)

    # Hoist query-invariant work out of the grid loop and split Wh into row
    # blocks so the kernel never builds the [rows, 4E] concatenated features.
    Wh = Wh.astype(jnp.float32)
    aq = query.astype(jnp.float32) @ Wh[:E] + bh.astype(jnp.float32)   # [C, FE]
    whc = Wh[E:2 * E]          # context segment rows
    whd = Wh[2 * E:3 * E]      # |q - c| segment rows
    whp = Wh[3 * E:]           # q * c segment rows

    kernel = functools.partial(_predictor_kernel, mm_dtype=matmul_dtype)

    # Advisory cost hint for the XLA scheduler.
    flops = 2 * Bp * (C * T * (2 * E * FE) + T * E * FE + C * (3 * E * FE) + C * T * E)
    transcendentals = Bp * C * (T * FE + T + FE)
    bytes_accessed = 4 * (Bp * T * E + Bp * T + C * E + C * FE + 3 * E * FE + FE + 1 + Bp * C)

    out = pl.pallas_call(
        kernel,
        out_shape=jax.ShapeDtypeStruct((G, tb, C), jnp.float32),
        grid_spec=pltpu.PrefetchScalarGridSpec(
            num_scalar_prefetch=0,
            grid=(G,),
            in_specs=[
                pl.BlockSpec((C, E), lambda i: (0, 0)),             # query (grid-invariant)
                pl.BlockSpec((C, FE), lambda i: (0, 0)),            # q @ Wh_q + bh
                pl.BlockSpec((E, FE), lambda i: (0, 0)),            # Wh_c
                pl.BlockSpec((E, FE), lambda i: (0, 0)),            # Wh_d
                pl.BlockSpec((E, FE), lambda i: (0, 0)),            # Wh_p
                pl.BlockSpec((1, FE), lambda i: (0, 0)),            # wv row
                pl.BlockSpec(memory_space=pltpu.MemorySpace.SMEM),  # bv scalar in SMEM
                pl.BlockSpec((tb, T, E), lambda i: (i, 0, 0)),      # context tile (tb batches)
                pl.BlockSpec((tb, 1, T), lambda i: (i, 0, 0)),      # mask tile
            ],
            out_specs=pl.BlockSpec((1, tb, C), lambda i: (i, 0, 0)),
        ),
        compiler_params=pltpu.CompilerParams(
            dimension_semantics=("parallel",),
            # Tiny footprint here; explicit limit keeps headroom on v7x's 64 MiB VMEM.
            vmem_limit_bytes=32 * 1024 * 1024,
        ),
        cost_estimate=pl.CostEstimate(
            flops=flops, transcendentals=transcendentals,
            bytes_accessed=bytes_accessed),
    )(query.astype(jnp.float32), aq, whc, whd, whp,
      wv.astype(jnp.float32), bv.astype(jnp.float32),
      context.astype(jnp.float32), mask3)

    return out.reshape(Bp, C)[:B]


def reference(query, context, mask, Wh, bh, wv, bv):
    """Pure-JAX port of the PyTorch forward, for validation."""
    B, T, E = context.shape
    C = query.shape[0]
    ctx_ = jnp.broadcast_to(context[:, None, :, :], (B, C, T, E))
    q_ = jnp.broadcast_to(query[None, :, None, :], (B, C, T, E))
    feat = jnp.concatenate([q_, ctx_, jnp.abs(q_ - ctx_), q_ * ctx_], axis=-1)
    hid = jnp.tanh(feat @ Wh + bh[0])
    scores = jnp.sum(hid * wv[0], axis=-1) + bv[0, 0]                 # [B, C, T]
    scores = jnp.where((mask < 1.0)[:, None, :], jnp.float32(-1e10), scores)
    p = jax.nn.softmax(scores, axis=-1)
    g = jnp.einsum("bct,bte->bce", p, context)
    q2 = jnp.broadcast_to(query[None], (B, C, E))
    feat2 = jnp.concatenate([q2, g, jnp.abs(q2 - g), q2 * g], axis=-1)
    pred = jnp.sum(jnp.tanh(feat2 @ Wh + bh[0]) * wv[0], axis=-1) + bv[0, 0]
    return pred                                                        # [B, C]


if __name__ == "__main__":
    # Small, module-consistent shapes: hidden_size E = 32 -> feature dim 4E = 128.
    # B=4 with batch_tile=2 gives 128 feature rows per grid step and 2 parallel steps.
    B, C, T, E = 4, 8, 8, 32
    FE = 4 * E

    key = jax.random.PRNGKey(0)
    k1, k2, k3, k4, k5, k6, k7 = jax.random.split(key, 7)

    query = jax.random.normal(k1, (C, E), jnp.float32)
    context = jax.random.normal(k2, (B, T, E), jnp.float32)
    mask = (jax.random.uniform(k3, (B, T)) > 0.3).astype(jnp.float32)
    mask = mask.at[:, 0].set(1.0)  # keep at least one unmasked position per batch

    # Deterministic synthetic parameters (shapes from nn.Linear(4E,4E) and nn.Linear(4E,1)).
    Wh = jax.random.normal(k4, (FE, FE), jnp.float32) * (1.0 / math.sqrt(FE))
    bh = jax.random.normal(k5, (1, FE), jnp.float32) * 0.01
    wv = jax.random.normal(k6, (1, FE), jnp.float32) * (1.0 / math.sqrt(FE))
    bv = jax.random.normal(k7, (1, 1), jnp.float32) * 0.01

    out = adaptive_addition_predictor(query, context, mask, Wh, bh, wv, bv)
    out = jax.block_until_ready(out)

    ref = jax.block_until_ready(reference(query, context, mask, Wh, bh, wv, bv))
    np.testing.assert_allclose(np.asarray(out), np.asarray(ref), rtol=1e-4, atol=1e-4)

    print("KERNEL_OK")
</pallas_src>

<mosaic_0001>
module attributes {stable_mosaic.version = 11 : i64} {
  func.func @_predictor_kernel(%arg0: i32, %arg1: memref<8x32xf32, #tpu.memory_space<vmem>>, %arg2: memref<8x128xf32, #tpu.memory_space<vmem>>, %arg3: memref<32x128xf32, #tpu.memory_space<vmem>>, %arg4: memref<32x128xf32, #tpu.memory_space<vmem>>, %arg5: memref<32x128xf32, #tpu.memory_space<vmem>>, %arg6: memref<1x128xf32, #tpu.memory_space<vmem>>, %arg7: memref<1x1xf32, #tpu.memory_space<smem>>, %arg8: memref<2x8x32xf32, #tpu.memory_space<vmem>>, %arg9: memref<2x1x8xf32, #tpu.memory_space<vmem>>, %arg10: memref<1x2x8xf32, #tpu.memory_space<vmem>>) attributes {dimension_semantics = [#tpu.dimension_semantics<parallel>], iteration_bounds = array<i64: 2>, scalar_prefetch = 0 : i64, scratch_operands = 0 : i64, tpu.core_type = #tpu.core_type<tc>, window_params = [{pipeline_mode = #tpu.pipeline_mode<synchronous>, transform_indices = @transform_0, window_bounds = array<i64: 8, 32>}, {pipeline_mode = #tpu.pipeline_mode<synchronous>, transform_indices = @transform_1, window_bounds = array<i64: 8, 128>}, {pipeline_mode = #tpu.pipeline_mode<synchronous>, transform_indices = @transform_2, window_bounds = array<i64: 32, 128>}, {pipeline_mode = #tpu.pipeline_mode<synchronous>, transform_indices = @transform_3, window_bounds = array<i64: 32, 128>}, {pipeline_mode = #tpu.pipeline_mode<synchronous>, transform_indices = @transform_4, window_bounds = array<i64: 32, 128>}, {pipeline_mode = #tpu.pipeline_mode<synchronous>, transform_indices = @transform_5, window_bounds = array<i64: 1, 128>}, {transform_indices = @transform_6, window_bounds = array<i64: 1, 1>}, {transform_indices = @transform_7, window_bounds = array<i64: 2, 8, 32>}, {transform_indices = @transform_8, window_bounds = array<i64: 2, 1, 8>}, {transform_indices = @transform_9, window_bounds = array<i64: 1, 2, 8>}]} {
    %c0 = arith.constant 0 : index
    %c0_0 = arith.constant 0 : index
    %0 = vector.load %arg1[%c0, %c0_0] : memref<8x32xf32, #tpu.memory_space<vmem>>, vector<8x32xf32>
    %c0_1 = arith.constant 0 : index
    %c0_2 = arith.constant 0 : index
    %1 = vector.load %arg2[%c0_1, %c0_2] : memref<8x128xf32, #tpu.memory_space<vmem>>, vector<8x128xf32>
    %c0_3 = arith.constant 0 : index
    %c0_4 = arith.constant 0 : index
    %2 = vector.load %arg3[%c0_3, %c0_4] : memref<32x128xf32, #tpu.memory_space<vmem>>, vector<32x128xf32>
    %c0_5 = arith.constant 0 : index
    %c0_6 = arith.constant 0 : index
    %3 = vector.load %arg4[%c0_5, %c0_6] : memref<32x128xf32, #tpu.memory_space<vmem>>, vector<32x128xf32>
    %c0_7 = arith.constant 0 : index
    %c0_8 = arith.constant 0 : index
    %4 = vector.load %arg5[%c0_7, %c0_8] : memref<32x128xf32, #tpu.memory_space<vmem>>, vector<32x128xf32>
    %c0_9 = arith.constant 0 : index
    %c0_10 = arith.constant 0 : index
    %5 = vector.load %arg6[%c0_9, %c0_10] : memref<1x128xf32, #tpu.memory_space<vmem>>, vector<1x128xf32>
    %c0_11 = arith.constant 0 : index
    %c0_12 = arith.constant 0 : index
    %6 = memref.load %arg7[%c0_11, %c0_12] : memref<1x1xf32, #tpu.memory_space<smem>>
    %c0_13 = arith.constant 0 : index
    %c0_14 = arith.constant 0 : index
    %c0_15 = arith.constant 0 : index
    %7 = vector.load %arg8[%c0_13, %c0_14, %c0_15] : memref<2x8x32xf32, #tpu.memory_space<vmem>>, vector<2x8x32xf32>
    %c0_16 = arith.constant 0 : index
    %c0_17 = arith.constant 0 : index
    %c0_18 = arith.constant 0 : index
    %8 = vector.load %arg9[%c0_16, %c0_17, %c0_18] : memref<2x1x8xf32, #tpu.memory_space<vmem>>, vector<2x1x8xf32>
    %9 = vector.shape_cast %7 : vector<2x8x32xf32> to vector<16x32xf32>
    %cst = arith.constant dense<0.000000e+00> : vector<16x128xf32>
    %10 = tpu.matmul %9, %2, %cst {dimension_numbers = #tpu.dot_dimension_numbers<[1], [0], [0], [1], [0, 0, 1, 1], [], []>, precision = #tpu.contract_precision<fp32>} : vector<16x32xf32>, vector<32x128xf32>, vector<16x128xf32> -> vector<16x128xf32>
    %11 = vector.shape_cast %10 : vector<16x128xf32> to vector<2x1x8x128xf32>
    %12 = vector.shape_cast %0 : vector<8x32xf32> to vector<1x8x1x32xf32>
    %13 = vector.shape_cast %7 : vector<2x8x32xf32> to vector<2x1x8x32xf32>
    %14 = vector.broadcast %12 : vector<1x8x1x32xf32> to vector<2x8x8x32xf32>
    %15 = vector.broadcast %13 : vector<2x1x8x32xf32> to vector<2x8x8x32xf32>
    %16 = arith.subf %14, %15 : vector<2x8x8x32xf32>
    %17 = math.absf %16 : vector<2x8x8x32xf32>
    %18 = vector.shape_cast %17 : vector<2x8x8x32xf32> to vector<128x32xf32>
    %19 = vector.broadcast %12 : vector<1x8x1x32xf32> to vector<2x8x8x32xf32>
    %20 = vector.broadcast %13 : vector<2x1x8x32xf32> to vector<2x8x8x32xf32>
    %21 = arith.mulf %19, %20 : vector<2x8x8x32xf32>
    %22 = vector.shape_cast %21 : vector<2x8x8x32xf32> to vector<128x32xf32>
    %cst_19 = arith.constant dense<0.000000e+00> : vector<128x128xf32>
    %23 = tpu.matmul %18, %3, %cst_19 {dimension_numbers = #tpu.dot_dimension_numbers<[1], [0], [0], [1], [0, 0, 1, 1], [], []>, precision = #tpu.contract_precision<fp32>} : vector<128x32xf32>, vector<32x128xf32>, vector<128x128xf32> -> vector<128x128xf32>
    %cst_20 = arith.constant dense<0.000000e+00> : vector<128x128xf32>
    %24 = tpu.matmul %22, %4, %cst_20 {dimension_numbers = #tpu.dot_dimension_numbers<[1], [0], [0], [1], [0, 0, 1, 1], [], []>, precision = #tpu.contract_precision<fp32>} : vector<128x32xf32>, vector<32x128xf32>, vector<128x128xf32> -> vector<128x128xf32>
    %25 = arith.addf %23, %24 : vector<128x128xf32>
    %26 = vector.shape_cast %25 : vector<128x128xf32> to vector<2x8x8x128xf32>
    %27 = vector.broadcast %11 : vector<2x1x8x128xf32> to vector<2x8x8x128xf32>
    %28 = arith.addf %26, %27 : vector<2x8x8x128xf32>
    %29 = vector.shape_cast %1 : vector<8x128xf32> to vector<1x8x1x128xf32>
    %30 = vector.broadcast %29 : vector<1x8x1x128xf32> to vector<2x8x8x128xf32>
    %31 = arith.addf %28, %30 : vector<2x8x8x128xf32>
    %32 = math.tanh %31 : vector<2x8x8x128xf32>
    %33 = vector.shape_cast %5 : vector<1x128xf32> to vector<1x1x1x128xf32>
    %34 = vector.broadcast %33 : vector<1x1x1x128xf32> to vector<2x8x8x128xf32>
    %35 = arith.mulf %32, %34 : vector<2x8x8x128xf32>
    %cst_21 = arith.constant dense<0.000000e+00> : vector<2x8x8xf32>
    %36 = vector.multi_reduction <add>, %35, %cst_21 [3] : vector<2x8x8x128xf32> to vector<2x8x8xf32>
    %cst_22 = arith.constant 1.000000e+00 : f32
    %37 = vector.broadcast %cst_22 : f32 to vector<2x1x8xf32>
    %38 = arith.cmpf olt, %8, %37 : vector<2x1x8xf32>
    %cst_23 = arith.constant -1.000000e+10 : f32
    %39 = vector.shape_cast %38 : vector<2x1x8xi1> to vector<2x1x8xi1>
    %40 = vector.broadcast %39 : vector<2x1x8xi1> to vector<2x8x8xi1>
    %41 = vector.broadcast %cst_23 : f32 to vector<2x8x8xf32>
    %42 = arith.select %40, %41, %36 : vector<2x8x8xi1>, vector<2x8x8xf32>
    %cst_24 = arith.constant dense<0xFF800000> : vector<2x8xf32>
    %43 = vector.multi_reduction <maximumf>, %42, %cst_24 [2] : vector<2x8x8xf32> to vector<2x8xf32>
    %44 = vector.shape_cast %43 : vector<2x8xf32> to vector<2x8x1xf32>
    %45 = vector.broadcast %44 : vector<2x8x1xf32> to vector<2x8x8xf32>
    %46 = arith.subf %42, %45 : vector<2x8x8xf32>
    %47 = math.exp %46 : vector<2x8x8xf32>
    %cst_25 = arith.constant dense<0.000000e+00> : vector<2x8xf32>
    %48 = vector.multi_reduction <add>, %47, %cst_25 [2] : vector<2x8x8xf32> to vector<2x8xf32>
    %49 = vector.shape_cast %48 : vector<2x8xf32> to vector<2x8x1xf32>
    "tpu.trace_start"() <{level = 10 : i32, message = "bct,bte->bce"}> : () -> ()
    %cst_26 = arith.constant dense<0.000000e+00> : vector<2x8x32xf32>
    %50 = tpu.matmul %47, %7, %cst_26 {dimension_numbers = #tpu.dot_dimension_numbers<[2], [1], [1], [2], [0, 0, 0, 1, 1, 2], [0], [0]>, precision = #tpu.contract_precision<fp32>} : vector<2x8x8xf32>, vector<2x8x32xf32>, vector<2x8x32xf32> -> vector<2x8x32xf32>
    "tpu.trace_stop"() : () -> ()
    %51 = tpu.reciprocal %49 : vector<2x8x1xf32> -> vector<2x8x1xf32>
    %52 = vector.broadcast %51 : vector<2x8x1xf32> to vector<2x8x32xf32>
    %53 = arith.mulf %50, %52 : vector<2x8x32xf32>
    %54 = vector.shape_cast %0 : vector<8x32xf32> to vector<1x8x32xf32>
    %55 = vector.shape_cast %53 : vector<2x8x32xf32> to vector<16x32xf32>
    %56 = vector.broadcast %54 : vector<1x8x32xf32> to vector<2x8x32xf32>
    %57 = arith.subf %56, %53 : vector<2x8x32xf32>
    %58 = math.absf %57 : vector<2x8x32xf32>
    %59 = vector.shape_cast %58 : vector<2x8x32xf32> to vector<16x32xf32>
    %60 = vector.broadcast %54 : vector<1x8x32xf32> to vector<2x8x32xf32>
    %61 = arith.mulf %60, %53 : vector<2x8x32xf32>
    %62 = vector.shape_cast %61 : vector<2x8x32xf32> to vector<16x32xf32>
    %cst_27 = arith.constant dense<0.000000e+00> : vector<16x128xf32>
    %63 = tpu.matmul %55, %2, %cst_27 {dimension_numbers = #tpu.dot_dimension_numbers<[1], [0], [0], [1], [0, 0, 1, 1], [], []>, precision = #tpu.contract_precision<fp32>} : vector<16x32xf32>, vector<32x128xf32>, vector<16x128xf32> -> vector<16x128xf32>
    %cst_28 = arith.constant dense<0.000000e+00> : vector<16x128xf32>
    %64 = tpu.matmul %59, %3, %cst_28 {dimension_numbers = #tpu.dot_dimension_numbers<[1], [0], [0], [1], [0, 0, 1, 1], [], []>, precision = #tpu.contract_precision<fp32>} : vector<16x32xf32>, vector<32x128xf32>, vector<16x128xf32> -> vector<16x128xf32>
    %65 = arith.addf %63, %64 : vector<16x128xf32>
    %cst_29 = arith.constant dense<0.000000e+00> : vector<16x128xf32>
    %66 = tpu.matmul %62, %4, %cst_29 {dimension_numbers = #tpu.dot_dimension_numbers<[1], [0], [0], [1], [0, 0, 1, 1], [], []>, precision = #tpu.contract_precision<fp32>} : vector<16x32xf32>, vector<32x128xf32>, vector<16x128xf32> -> vector<16x128xf32>
    %67 = arith.addf %65, %66 : vector<16x128xf32>
    %68 = vector.shape_cast %67 : vector<16x128xf32> to vector<2x8x128xf32>
    %69 = vector.shape_cast %1 : vector<8x128xf32> to vector<1x8x128xf32>
    %70 = vector.broadcast %69 : vector<1x8x128xf32> to vector<2x8x128xf32>
    %71 = arith.addf %68, %70 : vector<2x8x128xf32>
    %72 = math.tanh %71 : vector<2x8x128xf32>
    %73 = vector.shape_cast %5 : vector<1x128xf32> to vector<1x1x128xf32>
    %74 = vector.broadcast %73 : vector<1x1x128xf32> to vector<2x8x128xf32>
    %75 = arith.mulf %72, %74 : vector<2x8x128xf32>
    %cst_30 = arith.constant dense<0.000000e+00> : vector<2x8xf32>
    %76 = vector.multi_reduction <add>, %75, %cst_30 [2] : vector<2x8x128xf32> to vector<2x8xf32>
    %77 = vector.broadcast %6 : f32 to vector<2x8xf32>
    %78 = arith.addf %76, %77 : vector<2x8xf32>
    %c0_31 = arith.constant 0 : index
    %c0_32 = arith.constant 0 : index
    %c0_33 = arith.constant 0 : index
    %79 = vector.load %arg10[%c0_31, %c0_32, %c0_33] : memref<1x2x8xf32, #tpu.memory_space<vmem>>, vector<1x2x8xf32>
    %80 = vector.shape_cast %79 : vector<1x2x8xf32> to vector<2x8xf32>
    %81 = vector.shape_cast %78 : vector<2x8xf32> to vector<1x2x8xf32>
    tpu.vector_store %arg10[%c0_31, %c0_32, %c0_33], %81 {strides = array<i32>} : memref<1x2x8xf32, #tpu.memory_space<vmem>>, vector<1x2x8xf32>,
    return
  }
  func.func @transform_0(%arg0: i32) -> (i32, i32) {
    %c0_i32 = arith.constant 0 : i32
    %c0_i32_0 = arith.constant 0 : i32
    %c0_i32_1 = arith.constant 0 : i32
    return %c0_i32, %c0_i32_0 : i32, i32
  }
  func.func @transform_1(%arg0: i32) -> (i32, i32) {
    %c0_i32 = arith.constant 0 : i32
    %c0_i32_0 = arith.constant 0 : i32
    %c0_i32_1 = arith.constant 0 : i32
    return %c0_i32, %c0_i32_0 : i32, i32
  }
  func.func @transform_2(%arg0: i32) -> (i32, i32) {
    %c0_i32 = arith.constant 0 : i32
    %c0_i32_0 = arith.constant 0 : i32
    %c0_i32_1 = arith.constant 0 : i32
    return %c0_i32, %c0_i32_0 : i32, i32
  }
  func.func @transform_3(%arg0: i32) -> (i32, i32) {
    %c0_i32 = arith.constant 0 : i32
    %c0_i32_0 = arith.constant 0 : i32
    %c0_i32_1 = arith.constant 0 : i32
    return %c0_i32, %c0_i32_0 : i32, i32
  }
  func.func @transform_4(%arg0: i32) -> (i32, i32) {
    %c0_i32 = arith.constant 0 : i32
    %c0_i32_0 = arith.constant 0 : i32
    %c0_i32_1 = arith.constant 0 : i32
    return %c0_i32, %c0_i32_0 : i32, i32
  }
  func.func @transform_5(%arg0: i32) -> (i32, i32) {
    %c0_i32 = arith.constant 0 : i32
    %c0_i32_0 = arith.constant 0 : i32
    %c0_i32_1 = arith.constant 0 : i32
    return %c0_i32, %c0_i32_0 : i32, i32
  }
  func.func @transform_6(%arg0: i32) -> (i32, i32) {
    %c0_i32 = arith.constant 0 : i32
    %c0_i32_0 = arith.constant 0 : i32
    %c0_i32_1 = arith.constant 0 : i32
    return %c0_i32, %c0_i32_0 : i32, i32
  }
  func.func @transform_7(%arg0: i32) -> (i32, i32, i32) {
    %c0_i32 = arith.constant 0 : i32
    %c0_i32_0 = arith.constant 0 : i32
    %c0_i32_1 = arith.constant 0 : i32
    return %arg0, %c0_i32, %c0_i32_0 : i32, i32, i32
  }
  func.func @transform_8(%arg0: i32) -> (i32, i32, i32) {
    %c0_i32 = arith.constant 0 : i32
    %c0_i32_0 = arith.constant 0 : i32
    %c0_i32_1 = arith.constant 0 : i32
    return %arg0, %c0_i32, %c0_i32_0 : i32, i32, i32
  }
  func.func @transform_9(%arg0: i32) -> (i32, i32, i32) {
    %c0_i32 = arith.constant 0 : i32
    %c0_i32_0 = arith.constant 0 : i32
    %c0_i32_1 = arith.constant 0 : i32
    return %arg0, %c0_i32, %c0_i32_0 : i32, i32, i32
  }
}

</mosaic_0001>

<llo_original>
// kernel: tpu_custom_call.1
$region0: #{tpu_custom_call.1}
  #allocation0 [shape = 'u32[]', space=smem, size = 0x4, offset = 0x4, fixed_abs, tag = 'smem constant byte address 0x4 - core index']
  #allocation1 [shape = 'u32[144,128]{1,0:T(1,128)}', space=vmem, size = 0x12000, scoped, tag = 'internal scratch']
  #allocation2 [shape = 'f32[1,1]{1,0:T(1,128)S(6)}', space=smem, size = 0x200, scoped, tag = 'scoped memory for tpu_custom_call.1']
  %s0 = inlined_call_operand.hbm [shape: f32[8,32], index: 0, kind: input, shape index: {}]
  %s1 = inlined_call_operand.hbm [shape: f32[8,128], index: 1, kind: input, shape index: {}]
  %s2 = inlined_call_operand.hbm [shape: f32[32,128], index: 2, kind: input, shape index: {}]
  %s3 = inlined_call_operand.hbm [shape: f32[32,128], index: 3, kind: input, shape index: {}]
  %s4 = inlined_call_operand.hbm [shape: f32[32,128], index: 4, kind: input, shape index: {}]
  %s5 = inlined_call_operand.vmem [shape: f32[1,128], index: 5, kind: input, shape index: {}]
  %s6 = inlined_call_operand.<no memory space> [shape: f32[1,1], index: 6, kind: input, shape index: {}]
  %s7 = inlined_call_operand.hbm [shape: f32[4,8,32], index: 7, kind: input, shape index: {}]
  %s8 = inlined_call_operand.vmem [shape: f32[4,1,8], index: 8, kind: input, shape index: {}]
  %s9 = inlined_call_operand.hbm [shape: f32[2,2,8], index: 9, kind: output, shape index: {}]
  %s10 = sld [smem:[#allocation0]]
  $region93: #{tpu_custom_call.1} parent=0
    _
  %s12 = ssub.s32 1, %s10
  %s13 = scalar_select 0, %s12, %s10
  %14 = sst [smem:[#allocation2]] %s6
  $region1: #{tpu_custom_call.1} parent=0
    #allocation3 [shape = 'u8[4096]{0}', space=vmem, size = 0x1000, scoped, tag = 'input window, operand 0, single buffered']
    #allocation4 [shape = 's32[2]{0}', space=sflag, size = 0x8, scoped, tag = 'scoped memory for tpu_custom_call.1']
    #allocation5 [shape = 's32[2]{0}', space=sflag, size = 0x8, scoped, tag = 'scoped memory for tpu_custom_call.1']
    #allocation6 [shape = 'u8[4096]{0}', space=vmem, size = 0x1000, scoped, tag = 'input window, operand 1, single buffered']
    #allocation7 [shape = 's32[1]{0}', space=sflag, size = 0x4, scoped, tag = 'scoped memory for tpu_custom_call.1']
    #allocation8 [shape = 'u8[16384]{0}', space=vmem, size = 0x4000, scoped, tag = 'input window, operand 2, single buffered']
    #allocation9 [shape = 'u8[16384]{0}', space=vmem, size = 0x4000, scoped, tag = 'input window, operand 3, single buffered']
    #allocation10 [shape = 's32[1]{0}', space=sflag, size = 0x4, scoped, tag = 'scoped memory for tpu_custom_call.1']
    #allocation11 [shape = 'u8[16384]{0}', space=vmem, size = 0x4000, scoped, tag = 'input window, operand 4, single buffered']
    #allocation12 [shape = 'u8[16384]{0}', space=vmem, size = 0x4000, scoped, tag = 'input window, operand 7']
    #allocation13 [shape = 's32[2]{0}', space=sflag, size = 0x8, scoped, tag = 'scoped memory for tpu_custom_call.1']
    #allocation14 [shape = 'u8[2048]{0}', space=vmem, size = 0x800, scoped, tag = 'output window, operand 0']
    %15 = vsyncpa [#allocation4], 0
    %16 = vsyncpa [#allocation7], 0
    %17 = vsyncpa [#allocation10], 0
    %18 = vsyncpa [#allocation13], 0
    %s19 = scalar_lea.sflag [#allocation13], 1
    %20 = vsyncpa %s19, 0
    %21 = vsyncpa [#allocation5], 0
    %s22 = scalar_lea.sflag [#allocation5], 1
    %23 = vsyncpa %s22, 0
    loop: start=0, step=1, limit=4
    $region2: #{tpu_custom_call.1} parent=1 // loop_pre_header
      _
    $region3: #{tpu_custom_call.1} parent=1 // loop_header
      %s25 = sphi 0, %s29
      %p26 = scmp.ge.s32.totalorder %s25, 4
      %s33 = sphi 0, %s33
      %s35 = sphi 0, %s33
      %s36 = sphi 0, %s35
      %s50 = sphi 0, %s36
      %s54 = sphi 0, %s54
      %s56 = sphi 0, %s54
      %s57 = sphi 0, %s56
      %s71 = sphi 0, %s57
      %s75 = sphi 0, %s75
      %s77 = sphi 0, %s75
      %s78 = sphi 0, %s77
      %s92 = sphi 0, %s78
      %s96 = sphi 0, %s96
      %s98 = sphi 0, %s96
      %s99 = sphi 0, %s98
      %s113 = sphi 0, %s99
      %s117 = sphi 0, %s117
      %s119 = sphi 0, %s117
      %s120 = sphi 0, %s119
      %s134 = sphi 0, %s120
      %s138 = sphi 0, %s138
      %s140 = sphi 0, %s138
      %s141 = sphi 0, %s140
      %s155 = sphi 0, %s141
      %s159 = sphi 0, %s159
      %s161 = sphi 0, %s159
      %s162 = sphi 0, %s161
      %s176 = sphi 0, %s162
      %s182 = sphi 0, %s184
      %s185 = sphi 0, %s182
      %s186 = sphi 0, %s185
      %s202 = sphi 0, %s186
      %s208 = sphi 0, %s210
      %s211 = sphi 0, %s208
      %s212 = sphi 0, %s211
      %s228 = sphi 0, %s212
      %s234 = sphi 0, %s236
      %s237 = sphi 0, %s234
      %s238 = sphi 0, %s237
      %s254 = sphi 0, %s238
    $region4: #{tpu_custom_call.1} parent=1 // loop_header_branch
      %28 = sbr.rel (%p26) target = $region8
    $region5: #{tpu_custom_call.1} parent=1 // loop_body
      %s30 = ssub.s32 %s25, 1
      %s31 = ssub.s32 %s25, 2
      %s32 = sadd.s32 %s25, 1
      %s34 = sadd.s32 %s33, 1
      %p37 = scmp.eq.s32.totalorder %s25, 1
      %p38 = scmp.ne.s32.totalorder %s33, %s35
      %p39 = scmp.eq.s32.totalorder %s25, 0
      %p40 = por %p38, %p39
      %p41 = scmp.ne.s32.totalorder %s33, %s35
      %p42 = scmp.eq.s32.totalorder %s30, 1
      %p43 = por %p41, %p42
      %p44 = scmp.ne.s32.totalorder %s35, %s36
      %p45 = scmp.eq.s32.totalorder %s30, 0
      %p46 = por %p44, %p45
      %p47 = scmp.ne.s32.totalorder %s35, %s36
      %p48 = scmp.eq.s32.totalorder %s31, 1
      %p49 = por %p47, %p48
      %p51 = scmp.ne.s32.totalorder %s36, %s50
      %p52 = scmp.eq.s32.totalorder %s31, 0
      %p53 = por %p51, %p52
      %s55 = sadd.s32 %s54, 1
      %p58 = scmp.eq.s32.totalorder %s25, 1
      %p59 = scmp.ne.s32.totalorder %s54, %s56
      %p60 = scmp.eq.s32.totalorder %s25, 0
      %p61 = por %p59, %p60
      %p62 = scmp.ne.s32.totalorder %s54, %s56
      %p63 = scmp.eq.s32.totalorder %s30, 1
      %p64 = por %p62, %p63
      %p65 = scmp.ne.s32.totalorder %s56, %s57
      %p66 = scmp.eq.s32.totalorder %s30, 0
      %p67 = por %p65, %p66
      %p68 = scmp.ne.s32.totalorder %s56, %s57
      %p69 = scmp.eq.s32.totalorder %s31, 1
      %p70 = por %p68, %p69
      %p72 = scmp.ne.s32.totalorder %s57, %s71
      %p73 = scmp.eq.s32.totalorder %s31, 0
      %p74 = por %p72, %p73
      %s76 = sadd.s32 %s75, 1
      %p79 = scmp.eq.s32.totalorder %s25, 1
      %p80 = scmp.ne.s32.totalorder %s75, %s77
      %p81 = scmp.eq.s32.totalorder %s25, 0
      %p82 = por %p80, %p81
      %p83 = scmp.ne.s32.totalorder %s75, %s77
      %p84 = scmp.eq.s32.totalorder %s30, 1
      %p85 = por %p83, %p84
      %p86 = scmp.ne.s32.totalorder %s77, %s78
      %p87 = scmp.eq.s32.totalorder %s30, 0
      %p88 = por %p86, %p87
      %p89 = scmp.ne.s32.totalorder %s77, %s78
      %p90 = scmp.eq.s32.totalorder %s31, 1
      %p91 = por %p89, %p90
      %p93 = scmp.ne.s32.totalorder %s78, %s92
      %p94 = scmp.eq.s32.totalorder %s31, 0
      %p95 = por %p93, %p94
      %s97 = sadd.s32 %s96, 1
      %p100 = scmp.eq.s32.totalorder %s25, 1
      %p101 = scmp.ne.s32.totalorder %s96, %s98
      %p102 = scmp.eq.s32.totalorder %s25, 0
      %p103 = por %p101, %p102
      %p104 = scmp.ne.s32.totalorder %s96, %s98
      %p105 = scmp.eq.s32.totalorder %s30, 1
      %p106 = por %p104, %p105
      %p107 = scmp.ne.s32.totalorder %s98, %s99
      %p108 = scmp.eq.s32.totalorder %s30, 0
      %p109 = por %p107, %p108
      %p110 = scmp.ne.s32.totalorder %s98, %s99
      %p111 = scmp.eq.s32.totalorder %s31, 1
      %p112 = por %p110, %p111
      %p114 = scmp.ne.s32.totalorder %s99, %s113
      %p115 = scmp.eq.s32.totalorder %s31, 0
      %p116 = por %p114, %p115
      %s118 = sadd.s32 %s117, 1
      %p121 = scmp.eq.s32.totalorder %s25, 1
      %p122 = scmp.ne.s32.totalorder %s117, %s119
      %p123 = scmp.eq.s32.totalorder %s25, 0
      %p124 = por %p122, %p123
      %p125 = scmp.ne.s32.totalorder %s117, %s119
      %p126 = scmp.eq.s32.totalorder %s30, 1
      %p127 = por %p125, %p126
      %p128 = scmp.ne.s32.totalorder %s119, %s120
      %p129 = scmp.eq.s32.totalorder %s30, 0
      %p130 = por %p128, %p129
      %p131 = scmp.ne.s32.totalorder %s119, %s120
      %p132 = scmp.eq.s32.totalorder %s31, 1
      %p133 = por %p131, %p132
      %p135 = scmp.ne.s32.totalorder %s120, %s134
      %p136 = scmp.eq.s32.totalorder %s31, 0
      %p137 = por %p135, %p136
      %s139 = sadd.s32 %s138, 1
      %p142 = scmp.eq.s32.totalorder %s25, 1
      %p143 = scmp.ne.s32.totalorder %s138, %s140
      %p144 = scmp.eq.s32.totalorder %s25, 0
      %p145 = por %p143, %p144
      %p146 = scmp.ne.s32.totalorder %s138, %s140
      %p147 = scmp.eq.s32.totalorder %s30, 1
      %p148 = por %p146, %p147
      %p149 = scmp.ne.s32.totalorder %s140, %s141
      %p150 = scmp.eq.s32.totalorder %s30, 0
      %p151 = por %p149, %p150
      %p152 = scmp.ne.s32.totalorder %s140, %s141
      %p153 = scmp.eq.s32.totalorder %s31, 1
      %p154 = por %p152, %p153
      %p156 = scmp.ne.s32.totalorder %s141, %s155
      %p157 = scmp.eq.s32.totalorder %s31, 0
      %p158 = por %p156, %p157
      %s160 = sadd.s32 %s159, 1
      %p163 = scmp.eq.s32.totalorder %s25, 1
      %p164 = scmp.ne.s32.totalorder %s159, %s161
      %p165 = scmp.eq.s32.totalorder %s25, 0
      %p166 = por %p164, %p165
      %p167 = scmp.ne.s32.totalorder %s159, %s161
      %p168 = scmp.eq.s32.totalorder %s30, 1
      %p169 = por %p167, %p168
      %p170 = scmp.ne.s32.totalorder %s161, %s162
      %p171 = scmp.eq.s32.totalorder %s30, 0
      %p172 = por %p170, %p171
      %p173 = scmp.ne.s32.totalorder %s161, %s162
      %p174 = scmp.eq.s32.totalorder %s31, 1
      %p175 = por %p173, %p174
      %p177 = scmp.ne.s32.totalorder %s162, %s176
      %p178 = scmp.eq.s32.totalorder %s31, 0
      %p179 = por %p177, %p178
      %s180 = ssub.s32 %s25, %s32
      %p181 = scmp.eq.s32.totalorder %s180, 0
      %s183 = sadd.s32 %s182, 1
      %s184 = scalar_select %p181, %s182, %s183
      %p187 = pneg %p181
      %p188 = scmp.eq.s32.totalorder %s25, 1
      %p189 = por %p187, %p188
      %p190 = scmp.ne.s32.totalorder %s182, %s185
      %p191 = scmp.eq.s32.totalorder %s25, 0
      %p192 = por %p190, %p191
      %p193 = scmp.ne.s32.totalorder %s182, %s185
      %p194 = scmp.eq.s32.totalorder %s30, 1
      %p195 = por %p193, %p194
      %p196 = scmp.ne.s32.totalorder %s185, %s186
      %p197 = scmp.eq.s32.totalorder %s30, 0
      %p198 = por %p196, %p197
      %p199 = scmp.ne.s32.totalorder %s185, %s186
      %p200 = scmp.eq.s32.totalorder %s31, 1
      %p201 = por %p199, %p200
      %p203 = scmp.ne.s32.totalorder %s186, %s202
      %p204 = scmp.eq.s32.totalorder %s31, 0
      %p205 = por %p203, %p204
      %s206 = ssub.s32 %s25, %s32
      %p207 = scmp.eq.s32.totalorder %s206, 0
      %s209 = sadd.s32 %s208, 1
      %s210 = scalar_select %p207, %s208, %s209
      %p213 = pneg %p207
      %p214 = scmp.eq.s32.totalorder %s25, 1
      %p215 = por %p213, %p214
      %p216 = scmp.ne.s32.totalorder %s208, %s211
      %p217 = scmp.eq.s32.totalorder %s25, 0
      %p218 = por %p216, %p217
      %p219 = scmp.ne.s32.totalorder %s208, %s211
      %p220 = scmp.eq.s32.totalorder %s30, 1
      %p221 = por %p219, %p220
      %p222 = scmp.ne.s32.totalorder %s211, %s212
      %p223 = scmp.eq.s32.totalorder %s30, 0
      %p224 = por %p222, %p223
      %p225 = scmp.ne.s32.totalorder %s211, %s212
      %p226 = scmp.eq.s32.totalorder %s31, 1
      %p227 = por %p225, %p226
      %p229 = scmp.ne.s32.totalorder %s212, %s228
      %p230 = scmp.eq.s32.totalorder %s31, 0
      %p231 = por %p229, %p230
      %s232 = ssub.s32 %s25, %s32
      %p233 = scmp.eq.s32.totalorder %s232, 0
      %s235 = sadd.s32 %s234, 1
      %s236 = scalar_select %p233, %s234, %s235
      %p239 = pneg %p233
      %p240 = scmp.eq.s32.totalorder %s25, 1
      %p241 = por %p239, %p240
      %p242 = scmp.ne.s32.totalorder %s234, %s237
      %p243 = scmp.eq.s32.totalorder %s25, 0
      %p244 = por %p242, %p243
      %p245 = scmp.ne.s32.totalorder %s234, %s237
      %p246 = scmp.eq.s32.totalorder %s30, 1
      %p247 = por %p245, %p246
      %p248 = scmp.ne.s32.totalorder %s237, %s238
      %p249 = scmp.eq.s32.totalorder %s30, 0
      %p250 = por %p248, %p249
      %p251 = scmp.ne.s32.totalorder %s237, %s238
      %p252 = scmp.eq.s32.totalorder %s31, 1
      %p253 = por %p251, %p252
      %p255 = scmp.ne.s32.totalorder %s238, %s254
      %p256 = scmp.eq.s32.totalorder %s31, 0
      %p257 = por %p255, %p256
      %p258 = scmp.le.s32.totalorder 1, %s25
      %p259 = scmp.lt.s32.totalorder %s25, 3
      %p260 = pnand %p258, %p259
      %p261 = pneg %p260
      // Predicated region
      $region9: #{tpu_custom_call.1} parent=5 // pred_check
        _
      $region10: #{tpu_custom_call.1} parent=5 // pred_check_branch
        %263 = sbr.rel (%p260) target = $region12
      $region11: #{tpu_custom_call.1} parent=5 // pred_region
        %s264 = ssub.s32 %s25, 1
        // Predicated region
        $region13: #{tpu_custom_call.1} parent=11 // pred_check
          %p265 = pneg %p46
        $region14: #{tpu_custom_call.1} parent=11 // pred_check_branch
          %267 = sbr.rel (%p265) target = $region16
        $region15: #{tpu_custom_call.1} parent=11 // pred_region
          %s269 = ssub.s32 128, 128
          %270 = vsyncadd [#allocation4], %s269
          %s272 = sshll.u32 [#allocation3], 4
          %s273 = int_to_ptr.vmem [resolvable:$true] %s272
          %275 = dma.hbm_to_vmem [thread:$0]  %s0, 128, %s273, [#allocation4]
        $region16: #{tpu_custom_call.1} parent=11 // pred_fallthru
          _
        // Predicated region
        $region17: #{tpu_custom_call.1} parent=11 // pred_check
          %p276 = pneg %p67
        $region18: #{tpu_custom_call.1} parent=11 // pred_check_branch
          %278 = sbr.rel (%p276) target = $region20
        $region19: #{tpu_custom_call.1} parent=11 // pred_region
          %s280 = ssub.s32 128, 128
          %281 = vsyncadd [#allocation7], %s280
          %s283 = sshll.u32 [#allocation6], 4
          %s284 = int_to_ptr.vmem [resolvable:$true] %s283
          %286 = dma.hbm_to_vmem [thread:$0]  %s1, 128, %s284, [#allocation7]
        $region20: #{tpu_custom_call.1} parent=11 // pred_fallthru
          _
        // Predicated region
        $region21: #{tpu_custom_call.1} parent=11 // pred_check
          %p287 = pneg %p88
        $region22: #{tpu_custom_call.1} parent=11 // pred_check_branch
          %289 = sbr.rel (%p287) target = $region24
        $region23: #{tpu_custom_call.1} parent=11 // pred_region
          %s291 = ssub.s32 512, 512
          %292 = vsyncadd [#allocation7], %s291
          %s293 = sshll.u32 [#allocation8], 4
          %s294 = int_to_ptr.vmem [resolvable:$true] %s293
          %299 = dma.hbm_to_vmem [thread:$0]  %s2, 512, %s294, [#allocation7], 128, 128, 8
        $region24: #{tpu_custom_call.1} parent=11 // pred_fallthru
          _
        // Predicated region
        $region25: #{tpu_custom_call.1} parent=11 // pred_check
          %p300 = pneg %p109
        $region26: #{tpu_custom_call.1} parent=11 // pred_check_branch
          %302 = sbr.rel (%p300) target = $region28
        $region27: #{tpu_custom_call.1} parent=11 // pred_region
          %s304 = ssub.s32 512, 512
          %305 = vsyncadd [#allocation10], %s304
          %s306 = sshll.u32 [#allocation9], 4
          %s307 = int_to_ptr.vmem [resolvable:$true] %s306
          %312 = dma.hbm_to_vmem [thread:$0]  %s3, 512, %s307, [#allocation10], 128, 128, 8
        $region28: #{tpu_custom_call.1} parent=11 // pred_fallthru
          _
        // Predicated region
        $region29: #{tpu_custom_call.1} parent=11 // pred_check
          %p313 = pneg %p130
        $region30: #{tpu_custom_call.1} parent=11 // pred_check_branch
          %315 = sbr.rel (%p313) target = $region32
        $region31: #{tpu_custom_call.1} parent=11 // pred_region
          %s317 = ssub.s32 512, 512
          %318 = vsyncadd [#allocation10], %s317
          %s319 = sshll.u32 [#allocation11], 4
          %s320 = int_to_ptr.vmem [resolvable:$true] %s319
          %325 = dma.hbm_to_vmem [thread:$0]  %s4, 512, %s320, [#allocation10], 128, 128, 8
        $region32: #{tpu_custom_call.1} parent=11 // pred_fallthru
          _
        // Predicated region
        $region33: #{tpu_custom_call.1} parent=11 // pred_check
          %p326 = pneg %p151
        $region34: #{tpu_custom_call.1} parent=11 // pred_check_branch
          %328 = sbr.rel (%p326) target = $region36
        $region35: #{tpu_custom_call.1} parent=11 // pred_region
          _
        $region36: #{tpu_custom_call.1} parent=11 // pred_fallthru
          _
        // Predicated region
        $region37: #{tpu_custom_call.1} parent=11 // pred_check
          %p329 = pneg %p172
        $region38: #{tpu_custom_call.1} parent=11 // pred_check_branch
          %331 = sbr.rel (%p329) target = $region40
        $region39: #{tpu_custom_call.1} parent=11 // pred_region
          _
        $region40: #{tpu_custom_call.1} parent=11 // pred_fallthru
          _
      $region12: #{tpu_custom_call.1} parent=5 // pred_fallthru
        _
      %p332 = scmp.lt.s32.totalorder %s25, 2
      // Predicated region
      $region41: #{tpu_custom_call.1} parent=5 // pred_check
        %p333 = pneg %p332
      $region42: #{tpu_custom_call.1} parent=5 // pred_check_branch
        %335 = sbr.rel (%p333) target = $region44
      $region43: #{tpu_custom_call.1} parent=5 // pred_region
        // Predicated region
        $region45: #{tpu_custom_call.1} parent=43 // pred_check
          %p336 = pneg %p192
        $region46: #{tpu_custom_call.1} parent=43 // pred_check_branch
          %338 = sbr.rel (%p336) target = $region48
        $region47: #{tpu_custom_call.1} parent=43 // pred_region
          %s339 = sand.u32 %s182, 1
          %s340 = scalar_lea.sflag [#allocation13], %s339
          %s341 = sand.u32 %s182, 1
          %s342 = smul.addr %s341, 16
          %s343 = scalar_lea.vmem [#allocation12], %s342
          %s344 = smul.u32 2, %s25
          %s346 = ssub.s32 256, 256
          %347 = vsyncadd %s340, %s346
          %s348 = smul.addr %s344, 128
          %s349 = scalar_lea.hbm %s7, %s348
          %s350 = sshll.u32 %s343, 4
          %s351 = int_to_ptr.vmem [resolvable:$true] %s350
          %356 = dma.hbm_to_vmem [thread:$0]  %s349, 256, %s351, %s340, 128, 128, 8
        $region48: #{tpu_custom_call.1} parent=43 // pred_fallthru
          _
        // Predicated region
        $region49: #{tpu_custom_call.1} parent=43 // pred_check
          %p357 = pneg %p218
        $region50: #{tpu_custom_call.1} parent=43 // pred_check_branch
          %359 = sbr.rel (%p357) target = $region52
        $region51: #{tpu_custom_call.1} parent=43 // pred_region
          %s360 = smul.u32 2, %s25
          %p361 = scmp.lt.s32.totalorder %s360, 3
          %s362 = scalar_select %p361, %s360, 3
          %s363 = scalar_lea.vmem %s8, %s362
          %s364 = smul.u32 2, %s25
        $region52: #{tpu_custom_call.1} parent=43 // pred_fallthru
          _
      $region44: #{tpu_custom_call.1} parent=5 // pred_fallthru
        _
      %p365 = scmp.le.s32.totalorder 1, %s25
      %p366 = scmp.lt.s32.totalorder %s25, 3
      %p367 = pnand %p365, %p366
      %p368 = pneg %p367
      // Predicated region
      $region53: #{tpu_custom_call.1} parent=5 // pred_check
        _
      $region54: #{tpu_custom_call.1} parent=5 // pred_check_branch
        %370 = sbr.rel (%p367) target = $region56
      $region55: #{tpu_custom_call.1} parent=5 // pred_region
        %s371 = ssub.s32 %s25, 1
        // Predicated region
        $region57: #{tpu_custom_call.1} parent=55 // pred_check
          %p372 = pneg %p46
        $region58: #{tpu_custom_call.1} parent=55 // pred_check_branch
          %374 = sbr.rel (%p372) target = $region60
        $region59: #{tpu_custom_call.1} parent=55 // pred_region
          %375 = dma.done [#allocation4], 128
        $region60: #{tpu_custom_call.1} parent=55 // pred_fallthru
          _
        // Predicated region
        $region61: #{tpu_custom_call.1} parent=55 // pred_check
          %p376 = pneg %p67
        $region62: #{tpu_custom_call.1} parent=55 // pred_check_branch
          %378 = sbr.rel (%p376) target = $region64
        $region63: #{tpu_custom_call.1} parent=55 // pred_region
          %379 = dma.done [#allocation7], 128
        $region64: #{tpu_custom_call.1} parent=55 // pred_fallthru
          _
        // Predicated region
        $region65: #{tpu_custom_call.1} parent=55 // pred_check
          %p380 = pneg %p88
        $region66: #{tpu_custom_call.1} parent=55 // pred_check_branch
          %382 = sbr.rel (%p380) target = $region68
        $region67: #{tpu_custom_call.1} parent=55 // pred_region
          %383 = dma.done [#allocation7], 512
        $region68: #{tpu_custom_call.1} parent=55 // pred_fallthru
          _
        // Predicated region
        $region69: #{tpu_custom_call.1} parent=55 // pred_check
          %p384 = pneg %p109
        $region70: #{tpu_custom_call.1} parent=55 // pred_check_branch
          %386 = sbr.rel (%p384) target = $region72
        $region71: #{tpu_custom_call.1} parent=55 // pred_region
          %387 = dma.done [#allocation10], 512
        $region72: #{tpu_custom_call.1} parent=55 // pred_fallthru
          _
        // Predicated region
        $region73: #{tpu_custom_call.1} parent=55 // pred_check
          %p388 = pneg %p130
        $region74: #{tpu_custom_call.1} parent=55 // pred_check_branch
          %390 = sbr.rel (%p388) target = $region76
        $region75: #{tpu_custom_call.1} parent=55 // pred_region
          %391 = dma.done [#allocation10], 512
        $region76: #{tpu_custom_call.1} parent=55 // pred_fallthru
          _
        %s392 = sand.u32 %s185, 1
        %s393 = scalar_lea.sflag [#allocation13], %s392
        %s394 = sand.u32 %s185, 1
        %s395 = smul.addr %s394, 16
        %s396 = scalar_lea.vmem [#allocation12], %s395
        // Predicated region
        $region77: #{tpu_custom_call.1} parent=55 // pred_check
          %p397 = pneg %p198
        $region78: #{tpu_custom_call.1} parent=55 // pred_check_branch
          %399 = sbr.rel (%p397) target = $region80
        $region79: #{tpu_custom_call.1} parent=55 // pred_region
          %400 = dma.done %s393, 256
        $region80: #{tpu_custom_call.1} parent=55 // pred_fallthru
          _
        %p401 = pneg %p46
        %p402 = pneg %p43
        %p403 = pneg %p67
        %p404 = pneg %p64
        %p405 = pneg %p88
        %p406 = pneg %p85
        %p407 = pneg %p109
        %p408 = pneg %p106
        %p409 = pneg %p130
        %p410 = pneg %p127
        %p411 = pneg %p151
        %p412 = pneg %p148
        %p413 = pneg %p172
        %p414 = pneg %p169
        %s415 = sand.u32 %s185, 1
        %s416 = scalar_lea.sflag [#allocation13], %s415
        %s417 = sand.u32 %s185, 1
        %s418 = smul.addr %s417, 16
        %s419 = scalar_lea.vmem [#allocation12], %s418
        %p420 = pneg %p198
        %p421 = pneg %p195
        %s422 = smul.u32 2, %s30
        %p423 = scmp.lt.s32.totalorder %s422, 3
        %s424 = scalar_select %p423, %s422, 3
        %s425 = scalar_lea.vmem %s8, %s424
        %p426 = pneg %p224
        %p427 = pneg %p221
        %p428 = pneg %p250
        %p429 = pneg %p247
        %s430 = sand.u32 %s237, 1
        %s431 = scalar_lea.sflag [#allocation5], %s430
        %s432 = sand.u32 %s237, 1
        %s433 = smul.addr %s432, 2
        %s434 = scalar_lea.vmem [#allocation14], %s433
        %s435 = smul.u32 2, %s30
        %s436 = smul.u32 2, %s30
        %p437 = scmp.lt.s32.totalorder %s436, 3
        %s438 = scalar_select %p437, %s436, 3
        %s439 = scalar_lea.vmem %s8, %s438
        %s440 = smul.u32 2, %s30
        %v441 = vld [vmem:[#allocation3] sm:$0xff]
        %v442 = vld [vmem:[#allocation6] sm:$0xff]
        %v443 = vld [vmem:[#allocation8] sm:$0xff]
        %v444 = vld [vmem:[#allocation8 + $0x8] sm:$0xff]
        %v445 = vld [vmem:[#allocation8 + $0x10] sm:$0xff]
        %v446 = vld [vmem:[#allocation8 + $0x18] sm:$0xff]
        %v447 = vld [vmem:[#allocation9] sm:$0xff]
        %v448 = vld [vmem:[#allocation9 + $0x8] sm:$0xff]
        %v449 = vld [vmem:[#allocation9 + $0x10] sm:$0xff]
        %v450 = vld [vmem:[#allocation9 + $0x18] sm:$0xff]
        %v451 = vld [vmem:[#allocation11] sm:$0xff]
        %v452 = vld [vmem:[#allocation11 + $0x8] sm:$0xff]
        %v453 = vld [vmem:[#allocation11 + $0x10] sm:$0xff]
        %v454 = vld [vmem:[#allocation11 + $0x18] sm:$0xff]
        %v455 = vld [vmem:[%s5] sm:$0x1]
        %s456 = sld [smem:[#allocation2]]
        %v457 = vld [vmem:[%s396] sm:$0xff]
        %v458 = vld [vmem:[%s396 + $0x8] sm:$0xff]
        %v459 = vld [vmem:[%s439] sm:$0x1]
        %v460 = vld [vmem:[%s439 + $0x1] sm:$0x1]
        %vm461 = vcmask 261120
        %v463 = vsel %vm461, %v457, 0
        %v466 = vsel %vm461, %v458, 0
        %468 = vmatprep.subr.mxu0 0.0
        %469 = vmatpush1.msra.mxu0 0.0
        %470 = vmatprep.subr.mxu0 0.0
        %471 = vmatpush1.msra.mxu0 0.0
        %472 = vmatprep.subr.mxu0 0.0
        %473 = vmatpush1.msra.mxu0 0.0
        %474 = vmatprep.subr.mxu0 0.0
        %475 = vmatpush1.msra.mxu0 0.0
        %476 = vmatprep.subr.mxu0 0.0
        %477 = vmatpush1.msra.mxu0 0.0
        %478 = vmatprep.subr.mxu0 0.0
        %479 = vmatpush1.msra.mxu0 0.0
        %480 = vmatprep.subr.mxu0 0.0
        %481 = vmatpush1.msra.mxu0 0.0
        %482 = vmatprep.subr.mxu0 0.0
        %483 = vmatpush1.msra.mxu0 0.0
        %484 = vmatprep.subr.mxu0 0.0
        %485 = vmatpush1.msra.mxu0 0.0
        %486 = vmatprep.subr.mxu0 0.0
        %487 = vmatpush1.msra.mxu0 0.0
        %488 = vmatprep.subr.mxu0 0.0
        %489 = vmatpush1.msra.mxu0 0.0
        %490 = vmatprep.subr.mxu0 0.0
        %491 = vmatpush1.msra.mxu0 0.0
        %492 = vmatprep.subr.mxu0 0.0
        %v493 = vand.u32 %v446, 4294901760
        %494 = vmatpush1.msra.mxu0 %v493
        %495 = vmatprep.subr.mxu0 0.0
        %v496 = vand.u32 %v445, 4294901760
        %497 = vmatpush1.msra.mxu0 %v496
        %498 = vmatprep.subr.mxu0 0.0
        %v499 = vand.u32 %v444, 4294901760
        %500 = vmatpush1.msra.mxu0 %v499
        %501 = vmatprep.subr.mxu0 0.0
        %v502 = vand.u32 %v443, 4294901760
        %503 = vmatpush1.msra.mxu0 %v502
        %504 = vmatprep.subr.mxu0 0.0
        %505 = vmatpush2.msra.mxu0 0.0
        %506 = vmatprep.subr.mxu0 0.0
        %507 = vmatpush2.msra.mxu0 0.0
        %508 = vmatprep.subr.mxu0 0.0
        %509 = vmatpush2.msra.mxu0 0.0
        %510 = vmatprep.subr.mxu0 0.0
        %511 = vmatpush2.msra.mxu0 0.0
        %512 = vmatprep.subr.mxu0 0.0
        %513 = vmatpush2.msra.mxu0 0.0
        %514 = vmatprep.subr.mxu0 0.0
        %515 = vmatpush2.msra.mxu0 0.0
        %516 = vmatprep.subr.mxu0 0.0
        %517 = vmatpush2.msra.mxu0 0.0
        %518 = vmatprep.subr.mxu0 0.0
        %519 = vmatpush2.msra.mxu0 0.0
        %520 = vmatprep.subr.mxu0 0.0
        %521 = vmatpush2.msra.mxu0 0.0
        %522 = vmatprep.subr.mxu0 0.0
        %523 = vmatpush2.msra.mxu0 0.0
        %524 = vmatprep.subr.mxu0 0.0
        %525 = vmatpush2.msra.mxu0 0.0
        %526 = vmatprep.subr.mxu0 0.0
        %527 = vmatpush2.msra.mxu0 0.0
        %528 = vmatprep.subr.mxu0 0.0
        %529 = vmatpush2.msra.mxu0 0.0
        %530 = vmatprep.subr.mxu0 0.0
        %531 = vmatpush2.msra.mxu0 0.0
        %532 = vmatprep.subr.mxu0 0.0
        %533 = vmatpush2.msra.mxu0 0.0
        %534 = vmatprep.subr.mxu0 0.0
        %535 = vmatpush2.msra.mxu0 0.0
        %536 = vmatprep.mubr.f32.mxu0 0.0
        %v537 = vand.u32 %v463, 4294901760
        %v538 = vsub.f32 %v463, %v537
        %v539 = vand.u32 %v538, 4294901760
        %v540 = vsub.f32 %v538, %v539
        %v541 = vand.u32 %v540, 4294901760
        %542 = vmatmul.mubr.f32.gmra.mxu0 %v541
        %v543 = vpop.f32.mrf.mxu0
        %v544 = vadd.f32 0.0, %v543
        %v545 = vpop.f32.mrf.mxu0
        %546 = vmatprep.mubr.f32.mxu0 0.0
        %v547 = vand.u32 %v466, 4294901760
        %v548 = vsub.f32 %v466, %v547
        %v549 = vand.u32 %v548, 4294901760
        %v550 = vsub.f32 %v548, %v549
        %v551 = vand.u32 %v550, 4294901760
        %552 = vmatmul.mubr.f32.gmra.mxu0 %v551
        %v553 = vpop.f32.mrf.mxu0
        %v554 = vadd.f32 0.0, %v553
        %v555 = vpop.f32.mrf.mxu0
        %556 = vdwg.mxu0
        %557 = vmatprep.subr.mxu0 0.0
        %558 = vmatpush1.msra.mxu0 0.0
        %559 = vmatprep.subr.mxu0 0.0
        %560 = vmatpush1.msra.mxu0 0.0
        %561 = vmatprep.subr.mxu0 0.0
        %562 = vmatpush1.msra.mxu0 0.0
        %563 = vmatprep.subr.mxu0 0.0
        %564 = vmatpush1.msra.mxu0 0.0
        %565 = vmatprep.subr.mxu0 0.0
        %566 = vmatpush1.msra.mxu0 0.0
        %567 = vmatprep.subr.mxu0 0.0
        %568 = vmatpush1.msra.mxu0 0.0
        %569 = vmatprep.subr.mxu0 0.0
        %570 = vmatpush1.msra.mxu0 0.0
        %571 = vmatprep.subr.mxu0 0.0
        %572 = vmatpush1.msra.mxu0 0.0
        %573 = vmatprep.subr.mxu0 0.0
        %574 = vmatpush1.msra.mxu0 0.0
        %575 = vmatprep.subr.mxu0 0.0
        %576 = vmatpush1.msra.mxu0 0.0
        %577 = vmatprep.subr.mxu0 0.0
        %578 = vmatpush1.msra.mxu0 0.0
        %579 = vmatprep.subr.mxu0 0.0
        %580 = vmatpush1.msra.mxu0 0.0
        %581 = vmatprep.subr.mxu0 0.0
        %v582 = vand.u32 %v446, 4294901760
        %v583 = vsub.f32 %v446, %v582
        %v584 = vand.u32 %v583, 4294901760
        %v585 = vsub.f32 %v583, %v584
        %v586 = vand.u32 %v585, 4294901760
        %587 = vmatpush1.msra.mxu0 %v586
        %588 = vmatprep.subr.mxu0 0.0
        %v589 = vand.u32 %v445, 4294901760
        %v590 = vsub.f32 %v445, %v589
        %v591 = vand.u32 %v590, 4294901760
        %v592 = vsub.f32 %v590, %v591
        %v593 = vand.u32 %v592, 4294901760
        %594 = vmatpush1.msra.mxu0 %v593
        %595 = vmatprep.subr.mxu0 0.0
        %v596 = vand.u32 %v444, 4294901760
        %v597 = vsub.f32 %v444, %v596
        %v598 = vand.u32 %v597, 4294901760
        %v599 = vsub.f32 %v597, %v598
        %v600 = vand.u32 %v599, 4294901760
        %601 = vmatpush1.msra.mxu0 %v600
        %602 = vmatprep.subr.mxu0 0.0
        %v603 = vand.u32 %v443, 4294901760
        %v604 = vsub.f32 %v443, %v603
        %v605 = vand.u32 %v604, 4294901760
        %v606 = vsub.f32 %v604, %v605
        %v607 = vand.u32 %v606, 4294901760
        %608 = vmatpush1.msra.mxu0 %v607
        %609 = vmatprep.subr.mxu0 0.0
        %610 = vmatpush2.msra.mxu0 0.0
        %611 = vmatprep.subr.mxu0 0.0
        %612 = vmatpush2.msra.mxu0 0.0
        %613 = vmatprep.subr.mxu0 0.0
        %614 = vmatpush2.msra.mxu0 0.0
        %615 = vmatprep.subr.mxu0 0.0
        %616 = vmatpush2.msra.mxu0 0.0
        %617 = vmatprep.subr.mxu0 0.0
        %618 = vmatpush2.msra.mxu0 0.0
        %619 = vmatprep.subr.mxu0 0.0
        %620 = vmatpush2.msra.mxu0 0.0
        %621 = vmatprep.subr.mxu0 0.0
        %622 = vmatpush2.msra.mxu0 0.0
        %623 = vmatprep.subr.mxu0 0.0
        %624 = vmatpush2.msra.mxu0 0.0
        %625 = vmatprep.subr.mxu0 0.0
        %626 = vmatpush2.msra.mxu0 0.0
        %627 = vmatprep.subr.mxu0 0.0
        %628 = vmatpush2.msra.mxu0 0.0
        %629 = vmatprep.subr.mxu0 0.0
        %630 = vmatpush2.msra.mxu0 0.0
        %631 = vmatprep.subr.mxu0 0.0
        %632 = vmatpush2.msra.mxu0 0.0
        %633 = vmatprep.subr.mxu0 0.0
        %634 = vmatpush2.msra.mxu0 0.0
        %635 = vmatprep.subr.mxu0 0.0
        %636 = vmatpush2.msra.mxu0 0.0
        %637 = vmatprep.subr.mxu0 0.0
        %638 = vmatpush2.msra.mxu0 0.0
        %639 = vmatprep.subr.mxu0 0.0
        %640 = vmatpush2.msra.mxu0 0.0
        %641 = vmatprep.mubr.f32.mxu0 0.0
        %v642 = vand.u32 %v463, 4294901760
        %643 = vmatmul.mubr.f32.gmra.mxu0 %v642
        %v644 = vpop.f32.mrf.mxu0
        %v645 = vadd.f32 %v544, %v644
        %v646 = vpop.f32.mrf.mxu0
        %647 = vmatprep.mubr.f32.mxu0 0.0
        %v648 = vand.u32 %v466, 4294901760
        %649 = vmatmul.mubr.f32.gmra.mxu0 %v648
        %v650 = vpop.f32.mrf.mxu0
        %v651 = vadd.f32 %v554, %v650
        %v652 = vpop.f32.mrf.mxu0
        %653 = vdwg.mxu0
        %654 = vmatprep.subr.mxu0 0.0
        %655 = vmatpush1.msra.mxu0 0.0
        %656 = vmatprep.subr.mxu0 0.0
        %657 = vmatpush1.msra.mxu0 0.0
        %658 = vmatprep.subr.mxu0 0.0
        %659 = vmatpush1.msra.mxu0 0.0
        %660 = vmatprep.subr.mxu0 0.0
        %661 = vmatpush1.msra.mxu0 0.0
        %662 = vmatprep.subr.mxu0 0.0
        %663 = vmatpush1.msra.mxu0 0.0
        %664 = vmatprep.subr.mxu0 0.0
        %665 = vmatpush1.msra.mxu0 0.0
        %666 = vmatprep.subr.mxu0 0.0
        %667 = vmatpush1.msra.mxu0 0.0
        %668 = vmatprep.subr.mxu0 0.0
        %669 = vmatpush1.msra.mxu0 0.0
        %670 = vmatprep.subr.mxu0 0.0
        %671 = vmatpush1.msra.mxu0 0.0
        %672 = vmatprep.subr.mxu0 0.0
        %673 = vmatpush1.msra.mxu0 0.0
        %674 = vmatprep.subr.mxu0 0.0
        %675 = vmatpush1.msra.mxu0 0.0
        %676 = vmatprep.subr.mxu0 0.0
        %677 = vmatpush1.msra.mxu0 0.0
        %678 = vmatprep.subr.mxu0 0.0
        %v679 = vand.u32 %v446, 4294901760
        %v680 = vsub.f32 %v446, %v679
        %681 = vmatpush1.msra.mxu0 %v680
        %682 = vmatprep.subr.mxu0 0.0
        %v683 = vand.u32 %v445, 4294901760
        %v684 = vsub.f32 %v445, %v683
        %685 = vmatpush1.msra.mxu0 %v684
        %686 = vmatprep.subr.mxu0 0.0
        %v687 = vand.u32 %v444, 4294901760
        %v688 = vsub.f32 %v444, %v687
        %689 = vmatpush1.msra.mxu0 %v688
        %690 = vmatprep.subr.mxu0 0.0
        %v691 = vand.u32 %v443, 4294901760
        %v692 = vsub.f32 %v443, %v691
        %693 = vmatpush1.msra.mxu0 %v692
        %694 = vmatprep.subr.mxu0 0.0
        %695 = vmatpush2.msra.mxu0 0.0
        %696 = vmatprep.subr.mxu0 0.0
        %697 = vmatpush2.msra.mxu0 0.0
        %698 = vmatprep.subr.mxu0 0.0
        %699 = vmatpush2.msra.mxu0 0.0
        %700 = vmatprep.subr.mxu0 0.0
        %701 = vmatpush2.msra.mxu0 0.0
        %702 = vmatprep.subr.mxu0 0.0
        %703 = vmatpush2.msra.mxu0 0.0
        %704 = vmatprep.subr.mxu0 0.0
        %705 = vmatpush2.msra.mxu0 0.0
        %706 = vmatprep.subr.mxu0 0.0
        %707 = vmatpush2.msra.mxu0 0.0
        %708 = vmatprep.subr.mxu0 0.0
        %709 = vmatpush2.msra.mxu0 0.0
        %710 = vmatprep.subr.mxu0 0.0
        %711 = vmatpush2.msra.mxu0 0.0
        %712 = vmatprep.subr.mxu0 0.0
        %713 = vmatpush2.msra.mxu0 0.0
        %714 = vmatprep.subr.mxu0 0.0
        %715 = vmatpush2.msra.mxu0 0.0
        %716 = vmatprep.subr.mxu0 0.0
        %717 = vmatpush2.msra.mxu0 0.0
        %718 = vmatprep.subr.mxu0 0.0
        %719 = vmatpush2.msra.mxu0 0.0
        %720 = vmatprep.subr.mxu0 0.0
        %721 = vmatpush2.msra.mxu0 0.0
        %722 = vmatprep.subr.mxu0 0.0
        %723 = vmatpush2.msra.mxu0 0.0
        %724 = vmatprep.subr.mxu0 0.0
        %725 = vmatpush2.msra.mxu0 0.0
        %726 = vmatprep.mubr.f32.mxu0 0.0
        %v727 = vand.u32 %v463, 4294901760
        %v728 = vsub.f32 %v463, %v727
        %729 = vmatmul.mubr.f32.gmra.mxu0 %v728
        %v730 = vpop.f32.mrf.mxu0
        %v731 = vadd.f32 %v645, %v730
        %v732 = vpop.f32.mrf.mxu0
        %733 = vmatprep.mubr.f32.mxu0 0.0
        %v734 = vand.u32 %v466, 4294901760
        %v735 = vsub.f32 %v466, %v734
        %736 = vmatmul.mubr.f32.gmra.mxu0 %v735
        %v737 = vpop.f32.mrf.mxu0
        %v738 = vadd.f32 %v651, %v737
        %v739 = vpop.f32.mrf.mxu0
        %740 = vdwg.mxu0
        %741 = vmatprep.subr.mxu0 0.0
        %742 = vmatpush1.msra.mxu0 0.0
        %743 = vmatprep.subr.mxu0 0.0
        %744 = vmatpush1.msra.mxu0 0.0
        %745 = vmatprep.subr.mxu0 0.0
        %746 = vmatpush1.msra.mxu0 0.0
        %747 = vmatprep.subr.mxu0 0.0
        %748 = vmatpush1.msra.mxu0 0.0
        %749 = vmatprep.subr.mxu0 0.0
        %750 = vmatpush1.msra.mxu0 0.0
        %751 = vmatprep.subr.mxu0 0.0
        %752 = vmatpush1.msra.mxu0 0.0
        %753 = vmatprep.subr.mxu0 0.0
        %754 = vmatpush1.msra.mxu0 0.0
        %755 = vmatprep.subr.mxu0 0.0
        %756 = vmatpush1.msra.mxu0 0.0
        %757 = vmatprep.subr.mxu0 0.0
        %758 = vmatpush1.msra.mxu0 0.0
        %759 = vmatprep.subr.mxu0 0.0
        %760 = vmatpush1.msra.mxu0 0.0
        %761 = vmatprep.subr.mxu0 0.0
        %762 = vmatpush1.msra.mxu0 0.0
        %763 = vmatprep.subr.mxu0 0.0
        %764 = vmatpush1.msra.mxu0 0.0
        %765 = vmatprep.subr.mxu0 0.0
        %v766 = vand.u32 %v446, 4294901760
        %767 = vmatpush1.msra.mxu0 %v766
        %768 = vmatprep.subr.mxu0 0.0
        %v769 = vand.u32 %v445, 4294901760
        %770 = vmatpush1.msra.mxu0 %v769
        %771 = vmatprep.subr.mxu0 0.0
        %v772 = vand.u32 %v444, 4294901760
        %773 = vmatpush1.msra.mxu0 %v772
        %774 = vmatprep.subr.mxu0 0.0
        %v775 = vand.u32 %v443, 4294901760
        %776 = vmatpush1.msra.mxu0 %v775
        %777 = vmatprep.subr.mxu0 0.0
        %778 = vmatpush2.msra.mxu0 0.0
        %779 = vmatprep.subr.mxu0 0.0
        %780 = vmatpush2.msra.mxu0 0.0
        %781 = vmatprep.subr.mxu0 0.0
        %782 = vmatpush2.msra.mxu0 0.0
        %783 = vmatprep.subr.mxu0 0.0
        %784 = vmatpush2.msra.mxu0 0.0
        %785 = vmatprep.subr.mxu0 0.0
        %786 = vmatpush2.msra.mxu0 0.0
        %787 = vmatprep.subr.mxu0 0.0
        %788 = vmatpush2.msra.mxu0 0.0
        %789 = vmatprep.subr.mxu0 0.0
        %790 = vmatpush2.msra.mxu0 0.0
        %791 = vmatprep.subr.mxu0 0.0
        %792 = vmatpush2.msra.mxu0 0.0
        %793 = vmatprep.subr.mxu0 0.0
        %794 = vmatpush2.msra.mxu0 0.0
        %795 = vmatprep.subr.mxu0 0.0
        %796 = vmatpush2.msra.mxu0 0.0
        %797 = vmatprep.subr.mxu0 0.0
        %798 = vmatpush2.msra.mxu0 0.0
        %799 = vmatprep.subr.mxu0 0.0
        %800 = vmatpush2.msra.mxu0 0.0
        %801 = vmatprep.subr.mxu0 0.0
        %802 = vmatpush2.msra.mxu0 0.0
        %803 = vmatprep.subr.mxu0 0.0
        %804 = vmatpush2.msra.mxu0 0.0
        %805 = vmatprep.subr.mxu0 0.0
        %806 = vmatpush2.msra.mxu0 0.0
        %807 = vmatprep.subr.mxu0 0.0
        %808 = vmatpush2.msra.mxu0 0.0
        %809 = vmatprep.mubr.f32.mxu0 0.0
        %v810 = vand.u32 %v463, 4294901760
        %v811 = vsub.f32 %v463, %v810
        %v812 = vand.u32 %v811, 4294901760
        %813 = vmatmul.mubr.f32.gmra.mxu0 %v812
        %v814 = vpop.f32.mrf.mxu0
        %v815 = vadd.f32 %v731, %v814
        %v816 = vpop.f32.mrf.mxu0
        %817 = vmatprep.mubr.f32.mxu0 0.0
        %v818 = vand.u32 %v466, 4294901760
        %v819 = vsub.f32 %v466, %v818
        %v820 = vand.u32 %v819, 4294901760
        %821 = vmatmul.mubr.f32.gmra.mxu0 %v820
        %v822 = vpop.f32.mrf.mxu0
        %v823 = vadd.f32 %v738, %v822
        %v824 = vpop.f32.mrf.mxu0
        %825 = vdwg.mxu0
        %826 = vmatprep.subr.mxu0 0.0
        %827 = vmatpush1.msra.mxu0 0.0
        %828 = vmatprep.subr.mxu0 0.0
        %829 = vmatpush1.msra.mxu0 0.0
        %830 = vmatprep.subr.mxu0 0.0
        %831 = vmatpush1.msra.mxu0 0.0
        %832 = vmatprep.subr.mxu0 0.0
        %833 = vmatpush1.msra.mxu0 0.0
        %834 = vmatprep.subr.mxu0 0.0
        %835 = vmatpush1.msra.mxu0 0.0
        %836 = vmatprep.subr.mxu0 0.0
        %837 = vmatpush1.msra.mxu0 0.0
        %838 = vmatprep.subr.mxu0 0.0
        %839 = vmatpush1.msra.mxu0 0.0
        %840 = vmatprep.subr.mxu0 0.0
        %841 = vmatpush1.msra.mxu0 0.0
        %842 = vmatprep.subr.mxu0 0.0
        %843 = vmatpush1.msra.mxu0 0.0
        %844 = vmatprep.subr.mxu0 0.0
        %845 = vmatpush1.msra.mxu0 0.0
        %846 = vmatprep.subr.mxu0 0.0
        %847 = vmatpush1.msra.mxu0 0.0
        %848 = vmatprep.subr.mxu0 0.0
        %849 = vmatpush1.msra.mxu0 0.0
        %850 = vmatprep.subr.mxu0 0.0
        %v851 = vand.u32 %v446, 4294901760
        %v852 = vsub.f32 %v446, %v851
        %v853 = vand.u32 %v852, 4294901760
        %854 = vmatpush1.msra.mxu0 %v853
        %855 = vmatprep.subr.mxu0 0.0
        %v856 = vand.u32 %v445, 4294901760
        %v857 = vsub.f32 %v445, %v856
        %v858 = vand.u32 %v857, 4294901760
        %859 = vmatpush1.msra.mxu0 %v858
        %860 = vmatprep.subr.mxu0 0.0
        %v861 = vand.u32 %v444, 4294901760
        %v862 = vsub.f32 %v444, %v861
        %v863 = vand.u32 %v862, 4294901760
        %864 = vmatpush1.msra.mxu0 %v863
        %865 = vmatprep.subr.mxu0 0.0
        %v866 = vand.u32 %v443, 4294901760
        %v867 = vsub.f32 %v443, %v866
        %v868 = vand.u32 %v867, 4294901760
        %869 = vmatpush1.msra.mxu0 %v868
        %870 = vmatprep.subr.mxu0 0.0
        %871 = vmatpush2.msra.mxu0 0.0
        %872 = vmatprep.subr.mxu0 0.0
        %873 = vmatpush2.msra.mxu0 0.0
        %874 = vmatprep.subr.mxu0 0.0
        %875 = vmatpush2.msra.mxu0 0.0
        %876 = vmatprep.subr.mxu0 0.0
        %877 = vmatpush2.msra.mxu0 0.0
        %878 = vmatprep.subr.mxu0 0.0
        %879 = vmatpush2.msra.mxu0 0.0
        %880 = vmatprep.subr.mxu0 0.0
        %881 = vmatpush2.msra.mxu0 0.0
        %882 = vmatprep.subr.mxu0 0.0
        %883 = vmatpush2.msra.mxu0 0.0
        %884 = vmatprep.subr.mxu0 0.0
        %885 = vmatpush2.msra.mxu0 0.0
        %886 = vmatprep.subr.mxu0 0.0
        %887 = vmatpush2.msra.mxu0 0.0
        %888 = vmatprep.subr.mxu0 0.0
        %889 = vmatpush2.msra.mxu0 0.0
        %890 = vmatprep.subr.mxu0 0.0
        %891 = vmatpush2.msra.mxu0 0.0
        %892 = vmatprep.subr.mxu0 0.0
        %893 = vmatpush2.msra.mxu0 0.0
        %894 = vmatprep.subr.mxu0 0.0
        %895 = vmatpush2.msra.mxu0 0.0
        %896 = vmatprep.subr.mxu0 0.0
        %897 = vmatpush2.msra.mxu0 0.0
        %898 = vmatprep.subr.mxu0 0.0
        %899 = vmatpush2.msra.mxu0 0.0
        %900 = vmatprep.subr.mxu0 0.0
        %901 = vmatpush2.msra.mxu0 0.0
        %902 = vmatprep.mubr.f32.mxu0 0.0
        %v903 = vand.u32 %v463, 4294901760
        %904 = vmatmul.mubr.f32.gmra.mxu0 %v903
        %v905 = vpop.f32.mrf.mxu0
        %v906 = vadd.f32 %v815, %v905
        %v907 = vpop.f32.mrf.mxu0
        %908 = vmatprep.mubr.f32.mxu0 0.0
        %v909 = vand.u32 %v466, 4294901760
        %910 = vmatmul.mubr.f32.gmra.mxu0 %v909
        %v911 = vpop.f32.mrf.mxu0
        %v912 = vadd.f32 %v823, %v911
        %v913 = vpop.f32.mrf.mxu0
        %914 = vdwg.mxu0
        %915 = vmatprep.subr.mxu0 0.0
        %916 = vmatpush1.msra.mxu0 0.0
        %917 = vmatprep.subr.mxu0 0.0
        %918 = vmatpush1.msra.mxu0 0.0
        %919 = vmatprep.subr.mxu0 0.0
        %920 = vmatpush1.msra.mxu0 0.0
        %921 = vmatprep.subr.mxu0 0.0
        %922 = vmatpush1.msra.mxu0 0.0
        %923 = vmatprep.subr.mxu0 0.0
        %924 = vmatpush1.msra.mxu0 0.0
        %925 = vmatprep.subr.mxu0 0.0
        %926 = vmatpush1.msra.mxu0 0.0
        %927 = vmatprep.subr.mxu0 0.0
        %928 = vmatpush1.msra.mxu0 0.0
        %929 = vmatprep.subr.mxu0 0.0
        %930 = vmatpush1.msra.mxu0 0.0
        %931 = vmatprep.subr.mxu0 0.0
        %932 = vmatpush1.msra.mxu0 0.0
        %933 = vmatprep.subr.mxu0 0.0
        %934 = vmatpush1.msra.mxu0 0.0
        %935 = vmatprep.subr.mxu0 0.0
        %936 = vmatpush1.msra.mxu0 0.0
        %937 = vmatprep.subr.mxu0 0.0
        %938 = vmatpush1.msra.mxu0 0.0
        %939 = vmatprep.subr.mxu0 0.0
        %v940 = vand.u32 %v446, 4294901760
        %941 = vmatpush1.msra.mxu0 %v940
        %942 = vmatprep.subr.mxu0 0.0
        %v943 = vand.u32 %v445, 4294901760
        %944 = vmatpush1.msra.mxu0 %v943
        %945 = vmatprep.subr.mxu0 0.0
        %v946 = vand.u32 %v444, 4294901760
        %947 = vmatpush1.msra.mxu0 %v946
        %948 = vmatprep.subr.mxu0 0.0
        %v949 = vand.u32 %v443, 4294901760
        %950 = vmatpush1.msra.mxu0 %v949
        %951 = vmatprep.subr.mxu0 0.0
        %952 = vmatpush2.msra.mxu0 0.0
        %953 = vmatprep.subr.mxu0 0.0
        %954 = vmatpush2.msra.mxu0 0.0
        %955 = vmatprep.subr.mxu0 0.0
        %956 = vmatpush2.msra.mxu0 0.0
        %957 = vmatprep.subr.mxu0 0.0
        %958 = vmatpush2.msra.mxu0 0.0
        %959 = vmatprep.subr.mxu0 0.0
        %960 = vmatpush2.msra.mxu0 0.0
        %961 = vmatprep.subr.mxu0 0.0
        %962 = vmatpush2.msra.mxu0 0.0
        %963 = vmatprep.subr.mxu0 0.0
        %964 = vmatpush2.msra.mxu0 0.0
        %965 = vmatprep.subr.mxu0 0.0
        %966 = vmatpush2.msra.mxu0 0.0
        %967 = vmatprep.subr.mxu0 0.0
        %968 = vmatpush2.msra.mxu0 0.0
        %969 = vmatprep.subr.mxu0 0.0
        %970 = vmatpush2.msra.mxu0 0.0
        %971 = vmatprep.subr.mxu0 0.0
        %972 = vmatpush2.msra.mxu0 0.0
        %973 = vmatprep.subr.mxu0 0.0
        %974 = vmatpush2.msra.mxu0 0.0
        %975 = vmatprep.subr.mxu0 0.0
        %976 = vmatpush2.msra.mxu0 0.0
        %977 = vmatprep.subr.mxu0 0.0
        %978 = vmatpush2.msra.mxu0 0.0
        %979 = vmatprep.subr.mxu0 0.0
        %980 = vmatpush2.msra.mxu0 0.0
        %981 = vmatprep.subr.mxu0 0.0
        %982 = vmatpush2.msra.mxu0 0.0
        %983 = vmatprep.mubr.f32.mxu0 0.0
        %v984 = vand.u32 %v463, 4294901760
        %985 = vmatmul.mubr.f32.gmra.mxu0 %v984
        %v986 = vpop.f32.mrf.mxu0
        %v987 = vadd.f32 %v906, %v986
        %v988 = vpop.f32.mrf.mxu0
        %989 = vmatprep.mubr.f32.mxu0 0.0
        %v990 = vand.u32 %v466, 4294901760
        %991 = vmatmul.mubr.f32.gmra.mxu0 %v990
        %v992 = vpop.f32.mrf.mxu0
        %v993 = vadd.f32 %v912, %v992
        %v994 = vpop.f32.mrf.mxu0
        %995 = vdwg.mxu0
        %v997 = vcombine.high %v441, %v441
        %v999 = vunpack.c.l.s4 1966171168
        %v1000 = vunpack.c.0.s8 %v999
        %v1001 = vlaneseq
        %v1002 = vshrl.u32 %v1001, 7
        %v1003 = vsub.s32 %v1000, %v1002
        %v1004 = vrot.slane %v441, %v1003
        %v1006 = vunpack.c.l.s4 1966171168
        %v1007 = vunpack.c.0.s8 %v1006
        %v1008 = vlaneseq
        %v1009 = vshrl.u32 %v1008, 7
        %v1010 = vsub.s32 %v1007, %v1009
        %v1011 = vrot.slane %v997, %v1010
        %v1012 = vcombine.high %v1004, %v1004
        %v1013 = vcombine.high %v1011, %v1011
        %v1015 = vunpack.c.l.s4 1966171168
        %v1016 = vunpack.c.0.s8 %v1015
        %v1017 = vlaneseq
        %v1018 = vshrl.u32 %v1017, 7
        %v1019 = vsub.s32 %v1016, %v1018
        %v1020 = vrot.slane %v1004, %v1019
        %v1022 = vunpack.c.l.s4 1966171168
        %v1023 = vunpack.c.0.s8 %v1022
        %v1024 = vlaneseq
        %v1025 = vshrl.u32 %v1024, 7
        %v1026 = vsub.s32 %v1023, %v1025
        %v1027 = vrot.slane %v1011, %v1026
        %v1029 = vunpack.c.l.s4 1966171168
        %v1030 = vunpack.c.0.s8 %v1029
        %v1031 = vlaneseq
        %v1032 = vshrl.u32 %v1031, 7
        %v1033 = vsub.s32 %v1030, %v1032
        %v1034 = vrot.slane %v1012, %v1033
        %v1036 = vunpack.c.l.s4 1966171168
        %v1037 = vunpack.c.0.s8 %v1036
        %v1038 = vlaneseq
        %v1039 = vshrl.u32 %v1038, 7
        %v1040 = vsub.s32 %v1037, %v1039
        %v1041 = vrot.slane %v1013, %v1040
        %v1042 = vcombine.high %v1020, %v1020
        %v1043 = vcombine.high %v1027, %v1027
        %v1044 = vcombine.high %v1034, %v1034
        %v1045 = vcombine.high %v1041, %v1041
        %v1046 = vlaneseq
        %v1047 = vshrl.u32 %v1046, 7
        %v1048 = vsub.s32 0, %v1047
        %v1049 = vrot.slane %v1020, %v1048
        %v1050 = vlaneseq
        %v1051 = vshrl.u32 %v1050, 7
        %v1052 = vsub.s32 0, %v1051
        %v1053 = vrot.slane %v1034, %v1052
        %v1054 = vlaneseq
        %v1055 = vshrl.u32 %v1054, 7
        %v1056 = vsub.s32 0, %v1055
        %v1057 = vrot.slane %v1042, %v1056
        %v1058 = vlaneseq
        %v1059 = vshrl.u32 %v1058, 7
        %v1060 = vsub.s32 0, %v1059
        %v1061 = vrot.slane %v1044, %v1060
        %v1062 = vlaneseq
        %v1063 = vshrl.u32 %v1062, 7
        %v1064 = vsub.s32 0, %v1063
        %v1065 = vrot.slane %v1027, %v1064
        %v1066 = vlaneseq
        %v1067 = vshrl.u32 %v1066, 7
        %v1068 = vsub.s32 0, %v1067
        %v1069 = vrot.slane %v1041, %v1068
        %v1070 = vlaneseq
        %v1071 = vshrl.u32 %v1070, 7
        %v1072 = vsub.s32 0, %v1071
        %v1073 = vrot.slane %v1043, %v1072
        %v1074 = vlaneseq
        %v1075 = vshrl.u32 %v1074, 7
        %v1076 = vsub.s32 0, %v1075
        %v1077 = vrot.slane %v1045, %v1076
        %v1086 = vsub.f32 %v1049, %v457
        %v1087 = vsub.f32 %v1053, %v457
        %v1088 = vsub.f32 %v1057, %v457
        %v1089 = vsub.f32 %v1061, %v457
        %v1090 = vsub.f32 %v1065, %v457
        %v1091 = vsub.f32 %v1069, %v457
        %v1092 = vsub.f32 %v1073, %v457
        %v1093 = vsub.f32 %v1077, %v457
        %v1094 = vsub.f32 %v1049, %v458
        %v1095 = vsub.f32 %v1053, %v458
        %v1096 = vsub.f32 %v1057, %v458
        %v1097 = vsub.f32 %v1061, %v458
        %v1098 = vsub.f32 %v1065, %v458
        %v1099 = vsub.f32 %v1069, %v458
        %v1100 = vsub.f32 %v1073, %v458
        %v1101 = vsub.f32 %v1077, %v458
        %v1102 = vand.u32 2147483647, %v1086
        %v1103 = vand.u32 2147483647, %v1087
        %v1104 = vand.u32 2147483647, %v1088
        %v1105 = vand.u32 2147483647, %v1089
        %v1106 = vand.u32 2147483647, %v1090
        %v1107 = vand.u32 2147483647, %v1091
        %v1108 = vand.u32 2147483647, %v1092
        %v1109 = vand.u32 2147483647, %v1093
        %v1110 = vand.u32 2147483647, %v1094
        %v1111 = vand.u32 2147483647, %v1095
        %v1112 = vand.u32 2147483647, %v1096
        %v1113 = vand.u32 2147483647, %v1097
        %v1114 = vand.u32 2147483647, %v1098
        %v1115 = vand.u32 2147483647, %v1099
        %v1116 = vand.u32 2147483647, %v1100
        %v1117 = vand.u32 2147483647, %v1101
        %v1118 = vmul.f32 %v1049, %v457
        %v1119 = vmul.f32 %v1053, %v457
        %v1120 = vmul.f32 %v1057, %v457
        %v1121 = vmul.f32 %v1061, %v457
        %v1122 = vmul.f32 %v1065, %v457
        %v1123 = vmul.f32 %v1069, %v457
        %v1124 = vmul.f32 %v1073, %v457
        %v1125 = vmul.f32 %v1077, %v457
        %v1126 = vmul.f32 %v1049, %v458
        %v1127 = vmul.f32 %v1053, %v458
        %v1128 = vmul.f32 %v1057, %v458
        %v1129 = vmul.f32 %v1061, %v458
        %v1130 = vmul.f32 %v1065, %v458
        %v1131 = vmul.f32 %v1069, %v458
        %v1132 = vmul.f32 %v1073, %v458
        %v1133 = vmul.f32 %v1077, %v458
        %v1135 = vsel %vm461, %v1118, 0
        %v1138 = vsel %vm461, %v1119, 0
        %v1141 = vsel %vm461, %v1120, 0
        %v1144 = vsel %vm461, %v1121, 0
        %v1147 = vsel %vm461, %v1122, 0
        %v1150 = vsel %vm461, %v1123, 0
        %v1153 = vsel %vm461, %v1124, 0
        %v1156 = vsel %vm461, %v1125, 0
        %v1159 = vsel %vm461, %v1126, 0
        %v1162 = vsel %vm461, %v1127, 0
        %v1165 = vsel %vm461, %v1128, 0
        %v1168 = vsel %vm461, %v1129, 0
        %v1171 = vsel %vm461, %v1130, 0
        %v1174 = vsel %vm461, %v1131, 0
        %v1177 = vsel %vm461, %v1132, 0
        %v1180 = vsel %vm461, %v1133, 0
        %1182 = vmatprep.subr.mxu0 0.0
        %1183 = vmatpush1.msra.mxu0 0.0
        %1184 = vmatprep.subr.mxu0 0.0
        %1185 = vmatpush1.msra.mxu0 0.0
        %1186 = vmatprep.subr.mxu0 0.0
        %1187 = vmatpush1.msra.mxu0 0.0
        %1188 = vmatprep.subr.mxu0 0.0
        %1189 = vmatpush1.msra.mxu0 0.0
        %1190 = vmatprep.subr.mxu0 0.0
        %1191 = vmatpush1.msra.mxu0 0.0
        %1192 = vmatprep.subr.mxu0 0.0
        %1193 = vmatpush1.msra.mxu0 0.0
        %1194 = vmatprep.subr.mxu0 0.0
        %1195 = vmatpush1.msra.mxu0 0.0
        %1196 = vmatprep.subr.mxu0 0.0
        %1197 = vmatpush1.msra.mxu0 0.0
        %1198 = vmatprep.subr.mxu0 0.0
        %1199 = vmatpush1.msra.mxu0 0.0
        %1200 = vmatprep.subr.mxu0 0.0
        %1201 = vmatpush1.msra.mxu0 0.0
        %1202 = vmatprep.subr.mxu0 0.0
        %1203 = vmatpush1.msra.mxu0 0.0
        %1204 = vmatprep.subr.mxu0 0.0
        %1205 = vmatpush1.msra.mxu0 0.0
        %1206 = vmatprep.subr.mxu0 0.0
        %v1207 = vand.u32 %v454, 4294901760
        %1208 = vmatpush1.msra.mxu0 %v1207
        %1209 = vmatprep.subr.mxu0 0.0
        %v1210 = vand.u32 %v453, 4294901760
        %1211 = vmatpush1.msra.mxu0 %v1210
        %1212 = vmatprep.subr.mxu0 0.0
        %v1213 = vand.u32 %v452, 4294901760
        %1214 = vmatpush1.msra.mxu0 %v1213
        %1215 = vmatprep.subr.mxu0 0.0
        %v1216 = vand.u32 %v451, 4294901760
        %1217 = vmatpush1.msra.mxu0 %v1216
        %1218 = vmatprep.subr.mxu0 0.0
        %1219 = vmatpush2.msra.mxu0 0.0
        %1220 = vmatprep.subr.mxu0 0.0
        %1221 = vmatpush2.msra.mxu0 0.0
        %1222 = vmatprep.subr.mxu0 0.0
        %1223 = vmatpush2.msra.mxu0 0.0
        %1224 = vmatprep.subr.mxu0 0.0
        %1225 = vmatpush2.msra.mxu0 0.0
        %1226 = vmatprep.subr.mxu0 0.0
        %1227 = vmatpush2.msra.mxu0 0.0
        %1228 = vmatprep.subr.mxu0 0.0
        %1229 = vmatpush2.msra.mxu0 0.0
        %1230 = vmatprep.subr.mxu0 0.0
        %1231 = vmatpush2.msra.mxu0 0.0
        %1232 = vmatprep.subr.mxu0 0.0
        %1233 = vmatpush2.msra.mxu0 0.0
        %1234 = vmatprep.subr.mxu0 0.0
        %1235 = vmatpush2.msra.mxu0 0.0
        %1236 = vmatprep.subr.mxu0 0.0
        %1237 = vmatpush2.msra.mxu0 0.0
        %1238 = vmatprep.subr.mxu0 0.0
        %1239 = vmatpush2.msra.mxu0 0.0
        %1240 = vmatprep.subr.mxu0 0.0
        %1241 = vmatpush2.msra.mxu0 0.0
        %1242 = vmatprep.subr.mxu0 0.0
        %1243 = vmatpush2.msra.mxu0 0.0
        %1244 = vmatprep.subr.mxu0 0.0
        %1245 = vmatpush2.msra.mxu0 0.0
        %1246 = vmatprep.subr.mxu0 0.0
        %1247 = vmatpush2.msra.mxu0 0.0
        %1248 = vmatprep.subr.mxu0 0.0
        %1249 = vmatpush2.msra.mxu0 0.0
        %1250 = vmatprep.mubr.f32.mxu0 0.0
        %v1251 = vand.u32 %v1135, 4294901760
        %v1252 = vsub.f32 %v1135, %v1251
        %v1253 = vand.u32 %v1252, 4294901760
        %v1254 = vsub.f32 %v1252, %v1253
        %v1255 = vand.u32 %v1254, 4294901760
        %1256 = vmatmul.mubr.f32.gmra.mxu0 %v1255
        %v1257 = vpop.f32.mrf.mxu0
        %v1258 = vadd.f32 0.0, %v1257
        %v1259 = vpop.f32.mrf.mxu0
        %1260 = vmatprep.mubr.f32.mxu0 0.0
        %v1261 = vand.u32 %v1138, 4294901760
        %v1262 = vsub.f32 %v1138, %v1261
        %v1263 = vand.u32 %v1262, 4294901760
        %v1264 = vsub.f32 %v1262, %v1263
        %v1265 = vand.u32 %v1264, 4294901760
        %1266 = vmatmul.mubr.f32.gmra.mxu0 %v1265
        %v1267 = vpop.f32.mrf.mxu0
        %v1268 = vadd.f32 0.0, %v1267
        %v1269 = vpop.f32.mrf.mxu0
        %1270 = vmatprep.mubr.f32.mxu0 0.0
        %v1271 = vand.u32 %v1141, 4294901760
        %v1272 = vsub.f32 %v1141, %v1271
        %v1273 = vand.u32 %v1272, 4294901760
        %v1274 = vsub.f32 %v1272, %v1273
        %v1275 = vand.u32 %v1274, 4294901760
        %1276 = vmatmul.mubr.f32.gmra.mxu0 %v1275
        %v1277 = vpop.f32.mrf.mxu0
        %v1278 = vadd.f32 0.0, %v1277
        %v1279 = vpop.f32.mrf.mxu0
        %1280 = vmatprep.mubr.f32.mxu0 0.0
        %v1281 = vand.u32 %v1144, 4294901760
        %v1282 = vsub.f32 %v1144, %v1281
        %v1283 = vand.u32 %v1282, 4294901760
        %v1284 = vsub.f32 %v1282, %v1283
        %v1285 = vand.u32 %v1284, 4294901760
        %1286 = vmatmul.mubr.f32.gmra.mxu0 %v1285
        %v1287 = vpop.f32.mrf.mxu0
        %v1288 = vadd.f32 0.0, %v1287
        %v1289 = vpop.f32.mrf.mxu0
        %1290 = vmatprep.mubr.f32.mxu0 0.0
        %v1291 = vand.u32 %v1147, 4294901760
        %v1292 = vsub.f32 %v1147, %v1291
        %v1293 = vand.u32 %v1292, 4294901760
        %v1294 = vsub.f32 %v1292, %v1293
        %v1295 = vand.u32 %v1294, 4294901760
        %1296 = vmatmul.mubr.f32.gmra.mxu0 %v1295
        %v1297 = vpop.f32.mrf.mxu0
        %v1298 = vadd.f32 0.0, %v1297
        %v1299 = vpop.f32.mrf.mxu0
        %1300 = vmatprep.mubr.f32.mxu0 0.0
        %v1301 = vand.u32 %v1150, 4294901760
        %v1302 = vsub.f32 %v1150, %v1301
        %v1303 = vand.u32 %v1302, 4294901760
        %v1304 = vsub.f32 %v1302, %v1303
        %v1305 = vand.u32 %v1304, 4294901760
        %1306 = vmatmul.mubr.f32.gmra.mxu0 %v1305
        %v1307 = vpop.f32.mrf.mxu0
        %v1308 = vadd.f32 0.0, %v1307
        %v1309 = vpop.f32.mrf.mxu0
        %1310 = vmatprep.mubr.f32.mxu0 0.0
        %v1311 = vand.u32 %v1153, 4294901760
        %v1312 = vsub.f32 %v1153, %v1311
        %v1313 = vand.u32 %v1312, 4294901760
        %v1314 = vsub.f32 %v1312, %v1313
        %v1315 = vand.u32 %v1314, 4294901760
        %1316 = vmatmul.mubr.f32.gmra.mxu0 %v1315
        %v1317 = vpop.f32.mrf.mxu0
        %v1318 = vadd.f32 0.0, %v1317
        %v1319 = vpop.f32.mrf.mxu0
        %1320 = vmatprep.mubr.f32.mxu0 0.0
        %v1321 = vand.u32 %v1156, 4294901760
        %v1322 = vsub.f32 %v1156, %v1321
        %v1323 = vand.u32 %v1322, 4294901760
        %v1324 = vsub.f32 %v1322, %v1323
        %v1325 = vand.u32 %v1324, 4294901760
        %1326 = vmatmul.mubr.f32.gmra.mxu0 %v1325
        %v1327 = vpop.f32.mrf.mxu0
        %v1328 = vadd.f32 0.0, %v1327
        %v1329 = vpop.f32.mrf.mxu0
        %1330 = vmatprep.mubr.f32.mxu0 0.0
        %v1331 = vand.u32 %v1159, 4294901760
        %v1332 = vsub.f32 %v1159, %v1331
        %v1333 = vand.u32 %v1332, 4294901760
        %v1334 = vsub.f32 %v1332, %v1333
        %v1335 = vand.u32 %v1334, 4294901760
        %1336 = vmatmul.mubr.f32.gmra.mxu0 %v1335
        %v1337 = vpop.f32.mrf.mxu0
        %v1338 = vadd.f32 0.0, %v1337
        %v1339 = vpop.f32.mrf.mxu0
        %1340 = vmatprep.mubr.f32.mxu0 0.0
        %v1341 = vand.u32 %v1162, 4294901760
        %v1342 = vsub.f32 %v1162, %v1341
        %v1343 = vand.u32 %v1342, 4294901760
        %v1344 = vsub.f32 %v1342, %v1343
        %v1345 = vand.u32 %v1344, 4294901760
        %1346 = vmatmul.mubr.f32.gmra.mxu0 %v1345
        %v1347 = vpop.f32.mrf.mxu0
        %v1348 = vadd.f32 0.0, %v1347
        %v1349 = vpop.f32.mrf.mxu0
        %1350 = vmatprep.mubr.f32.mxu0 0.0
        %v1351 = vand.u32 %v1165, 4294901760
        %v1352 = vsub.f32 %v1165, %v1351
        %v1353 = vand.u32 %v1352, 4294901760
        %v1354 = vsub.f32 %v1352, %v1353
        %v1355 = vand.u32 %v1354, 4294901760
        %1356 = vmatmul.mubr.f32.gmra.mxu0 %v1355
        %v1357 = vpop.f32.mrf.mxu0
        %v1358 = vadd.f32 0.0, %v1357
        %v1359 = vpop.f32.mrf.mxu0
        %1360 = vmatprep.mubr.f32.mxu0 0.0
        %v1361 = vand.u32 %v1168, 4294901760
        %v1362 = vsub.f32 %v1168, %v1361
        %v1363 = vand.u32 %v1362, 4294901760
        %v1364 = vsub.f32 %v1362, %v1363
        %v1365 = vand.u32 %v1364, 4294901760
        %1366 = vmatmul.mubr.f32.gmra.mxu0 %v1365
        %v1367 = vpop.f32.mrf.mxu0
        %v1368 = vadd.f32 0.0, %v1367
        %v1369 = vpop.f32.mrf.mxu0
        %1370 = vmatprep.mubr.f32.mxu0 0.0
        %v1371 = vand.u32 %v1171, 4294901760
        %v1372 = vsub.f32 %v1171, %v1371
        %v1373 = vand.u32 %v1372, 4294901760
        %v1374 = vsub.f32 %v1372, %v1373
        %v1375 = vand.u32 %v1374, 4294901760
        %1376 = vmatmul.mubr.f32.gmra.mxu0 %v1375
        %v1377 = vpop.f32.mrf.mxu0
        %v1378 = vadd.f32 0.0, %v1377
        %v1379 = vpop.f32.mrf.mxu0
        %1380 = vmatprep.mubr.f32.mxu0 0.0
        %v1381 = vand.u32 %v1174, 4294901760
        %v1382 = vsub.f32 %v1174, %v1381
        %v1383 = vand.u32 %v1382, 4294901760
        %v1384 = vsub.f32 %v1382, %v1383
        %v1385 = vand.u32 %v1384, 4294901760
        %1386 = vmatmul.mubr.f32.gmra.mxu0 %v1385
        %v1387 = vpop.f32.mrf.mxu0
        %v1388 = vadd.f32 0.0, %v1387
        %v1389 = vpop.f32.mrf.mxu0
        %1390 = vmatprep.mubr.f32.mxu0 0.0
        %v1391 = vand.u32 %v1177, 4294901760
        %v1392 = vsub.f32 %v1177, %v1391
        %v1393 = vand.u32 %v1392, 4294901760
        %v1394 = vsub.f32 %v1392, %v1393
        %v1395 = vand.u32 %v1394, 4294901760
        %1396 = vmatmul.mubr.f32.gmra.mxu0 %v1395
        %v1397 = vpop.f32.mrf.mxu0
        %v1398 = vadd.f32 0.0, %v1397
        %v1399 = vpop.f32.mrf.mxu0
        %1400 = vmatprep.mubr.f32.mxu0 0.0
        %v1401 = vand.u32 %v1180, 4294901760
        %v1402 = vsub.f32 %v1180, %v1401
        %v1403 = vand.u32 %v1402, 4294901760
        %v1404 = vsub.f32 %v1402, %v1403
        %v1405 = vand.u32 %v1404, 4294901760
        %1406 = vmatmul.mubr.f32.gmra.mxu0 %v1405
        %v1407 = vpop.f32.mrf.mxu0
        %v1408 = vadd.f32 0.0, %v1407
        %v1409 = vpop.f32.mrf.mxu0
        %1410 = vdwg.mxu0
        %1411 = vmatprep.subr.mxu0 0.0
        %1412 = vmatpush1.msra.mxu0 0.0
        %1413 = vmatprep.subr.mxu0 0.0
        %1414 = vmatpush1.msra.mxu0 0.0
        %1415 = vmatprep.subr.mxu0 0.0
        %1416 = vmatpush1.msra.mxu0 0.0
        %1417 = vmatprep.subr.mxu0 0.0
        %1418 = vmatpush1.msra.mxu0 0.0
        %1419 = vmatprep.subr.mxu0 0.0
        %1420 = vmatpush1.msra.mxu0 0.0
        %1421 = vmatprep.subr.mxu0 0.0
        %1422 = vmatpush1.msra.mxu0 0.0
        %1423 = vmatprep.subr.mxu0 0.0
        %1424 = vmatpush1.msra.mxu0 0.0
        %1425 = vmatprep.subr.mxu0 0.0
        %1426 = vmatpush1.msra.mxu0 0.0
        %1427 = vmatprep.subr.mxu0 0.0
        %1428 = vmatpush1.msra.mxu0 0.0
        %1429 = vmatprep.subr.mxu0 0.0
        %1430 = vmatpush1.msra.mxu0 0.0
        %1431 = vmatprep.subr.mxu0 0.0
        %1432 = vmatpush1.msra.mxu0 0.0
        %1433 = vmatprep.subr.mxu0 0.0
        %1434 = vmatpush1.msra.mxu0 0.0
        %1435 = vmatprep.subr.mxu0 0.0
        %v1436 = vand.u32 %v454, 4294901760
        %v1437 = vsub.f32 %v454, %v1436
        %v1438 = vand.u32 %v1437, 4294901760
        %v1439 = vsub.f32 %v1437, %v1438
        %v1440 = vand.u32 %v1439, 4294901760
        %1441 = vmatpush1.msra.mxu0 %v1440
        %1442 = vmatprep.subr.mxu0 0.0
        %v1443 = vand.u32 %v453, 4294901760
        %v1444 = vsub.f32 %v453, %v1443
        %v1445 = vand.u32 %v1444, 4294901760
        %v1446 = vsub.f32 %v1444, %v1445
        %v1447 = vand.u32 %v1446, 4294901760
        %1448 = vmatpush1.msra.mxu0 %v1447
        %1449 = vmatprep.subr.mxu0 0.0
        %v1450 = vand.u32 %v452, 4294901760
        %v1451 = vsub.f32 %v452, %v1450
        %v1452 = vand.u32 %v1451, 4294901760
        %v1453 = vsub.f32 %v1451, %v1452
        %v1454 = vand.u32 %v1453, 4294901760
        %1455 = vmatpush1.msra.mxu0 %v1454
        %1456 = vmatprep.subr.mxu0 0.0
        %v1457 = vand.u32 %v451, 4294901760
        %v1458 = vsub.f32 %v451, %v1457
        %v1459 = vand.u32 %v1458, 4294901760
        %v1460 = vsub.f32 %v1458, %v1459
        %v1461 = vand.u32 %v1460, 4294901760
        %1462 = vmatpush1.msra.mxu0 %v1461
        %1463 = vmatprep.subr.mxu0 0.0
        %1464 = vmatpush2.msra.mxu0 0.0
        %1465 = vmatprep.subr.mxu0 0.0
        %1466 = vmatpush2.msra.mxu0 0.0
        %1467 = vmatprep.subr.mxu0 0.0
        %1468 = vmatpush2.msra.mxu0 0.0
        %1469 = vmatprep.subr.mxu0 0.0
        %1470 = vmatpush2.msra.mxu0 0.0
        %1471 = vmatprep.subr.mxu0 0.0
        %1472 = vmatpush2.msra.mxu0 0.0
        %1473 = vmatprep.subr.mxu0 0.0
        %1474 = vmatpush2.msra.mxu0 0.0
        %1475 = vmatprep.subr.mxu0 0.0
        %1476 = vmatpush2.msra.mxu0 0.0
        %1477 = vmatprep.subr.mxu0 0.0
        %1478 = vmatpush2.msra.mxu0 0.0
        %1479 = vmatprep.subr.mxu0 0.0
        %1480 = vmatpush2.msra.mxu0 0.0
        %1481 = vmatprep.subr.mxu0 0.0
        %1482 = vmatpush2.msra.mxu0 0.0
        %1483 = vmatprep.subr.mxu0 0.0
        %1484 = vmatpush2.msra.mxu0 0.0
        %1485 = vmatprep.subr.mxu0 0.0
        %1486 = vmatpush2.msra.mxu0 0.0
        %1487 = vmatprep.subr.mxu0 0.0
        %1488 = vmatpush2.msra.mxu0 0.0
        %1489 = vmatprep.subr.mxu0 0.0
        %1490 = vmatpush2.msra.mxu0 0.0
        %1491 = vmatprep.subr.mxu0 0.0
        %1492 = vmatpush2.msra.mxu0 0.0
        %1493 = vmatprep.subr.mxu0 0.0
        %1494 = vmatpush2.msra.mxu0 0.0
        %1495 = vmatprep.mubr.f32.mxu0 0.0
        %v1496 = vand.u32 %v1135, 4294901760
        %1497 = vmatmul.mubr.f32.gmra.mxu0 %v1496
        %v1498 = vpop.f32.mrf.mxu0
        %v1499 = vadd.f32 %v1258, %v1498
        %v1500 = vpop.f32.mrf.mxu0
        %1501 = vmatprep.mubr.f32.mxu0 0.0
        %v1502 = vand.u32 %v1138, 4294901760
        %1503 = vmatmul.mubr.f32.gmra.mxu0 %v1502
        %v1504 = vpop.f32.mrf.mxu0
        %v1505 = vadd.f32 %v1268, %v1504
        %v1506 = vpop.f32.mrf.mxu0
        %1507 = vmatprep.mubr.f32.mxu0 0.0
        %v1508 = vand.u32 %v1141, 4294901760
        %1509 = vmatmul.mubr.f32.gmra.mxu0 %v1508
        %v1510 = vpop.f32.mrf.mxu0
        %v1511 = vadd.f32 %v1278, %v1510
        %v1512 = vpop.f32.mrf.mxu0
        %1513 = vmatprep.mubr.f32.mxu0 0.0
        %v1514 = vand.u32 %v1144, 4294901760
        %1515 = vmatmul.mubr.f32.gmra.mxu0 %v1514
        %v1516 = vpop.f32.mrf.mxu0
        %v1517 = vadd.f32 %v1288, %v1516
        %v1518 = vpop.f32.mrf.mxu0
        %1519 = vmatprep.mubr.f32.mxu0 0.0
        %v1520 = vand.u32 %v1147, 4294901760
        %1521 = vmatmul.mubr.f32.gmra.mxu0 %v1520
        %v1522 = vpop.f32.mrf.mxu0
        %v1523 = vadd.f32 %v1298, %v1522
        %v1524 = vpop.f32.mrf.mxu0
        %1525 = vmatprep.mubr.f32.mxu0 0.0
        %v1526 = vand.u32 %v1150, 4294901760
        %1527 = vmatmul.mubr.f32.gmra.mxu0 %v1526
        %v1528 = vpop.f32.mrf.mxu0
        %v1529 = vadd.f32 %v1308, %v1528
        %v1530 = vpop.f32.mrf.mxu0
        %1531 = vmatprep.mubr.f32.mxu0 0.0
        %v1532 = vand.u32 %v1153, 4294901760
        %1533 = vmatmul.mubr.f32.gmra.mxu0 %v1532
        %v1534 = vpop.f32.mrf.mxu0
        %v1535 = vadd.f32 %v1318, %v1534
        %v1536 = vpop.f32.mrf.mxu0
        %1537 = vmatprep.mubr.f32.mxu0 0.0
        %v1538 = vand.u32 %v1156, 4294901760
        %1539 = vmatmul.mubr.f32.gmra.mxu0 %v1538
        %v1540 = vpop.f32.mrf.mxu0
        %v1541 = vadd.f32 %v1328, %v1540
        %v1542 = vpop.f32.mrf.mxu0
        %1543 = vmatprep.mubr.f32.mxu0 0.0
        %v1544 = vand.u32 %v1159, 4294901760
        %1545 = vmatmul.mubr.f32.gmra.mxu0 %v1544
        %v1546 = vpop.f32.mrf.mxu0
        %v1547 = vadd.f32 %v1338, %v1546
        %v1548 = vpop.f32.mrf.mxu0
        %1549 = vmatprep.mubr.f32.mxu0 0.0
        %v1550 = vand.u32 %v1162, 4294901760
        %1551 = vmatmul.mubr.f32.gmra.mxu0 %v1550
        %v1552 = vpop.f32.mrf.mxu0
        %v1553 = vadd.f32 %v1348, %v1552
        %v1554 = vpop.f32.mrf.mxu0
        %1555 = vmatprep.mubr.f32.mxu0 0.0
        %v1556 = vand.u32 %v1165, 4294901760
        %1557 = vmatmul.mubr.f32.gmra.mxu0 %v1556
        %v1558 = vpop.f32.mrf.mxu0
        %v1559 = vadd.f32 %v1358, %v1558
        %v1560 = vpop.f32.mrf.mxu0
        %1561 = vmatprep.mubr.f32.mxu0 0.0
        %v1562 = vand.u32 %v1168, 4294901760
        %1563 = vmatmul.mubr.f32.gmra.mxu0 %v1562
        %v1564 = vpop.f32.mrf.mxu0
        %v1565 = vadd.f32 %v1368, %v1564
        %v1566 = vpop.f32.mrf.mxu0
        %1567 = vmatprep.mubr.f32.mxu0 0.0
        %v1568 = vand.u32 %v1171, 4294901760
        %1569 = vmatmul.mubr.f32.gmra.mxu0 %v1568
        %v1570 = vpop.f32.mrf.mxu0
        %v1571 = vadd.f32 %v1378, %v1570
        %v1572 = vpop.f32.mrf.mxu0
        %1573 = vmatprep.mubr.f32.mxu0 0.0
        %v1574 = vand.u32 %v1174, 4294901760
        %1575 = vmatmul.mubr.f32.gmra.mxu0 %v1574
        %v1576 = vpop.f32.mrf.mxu0
        %v1577 = vadd.f32 %v1388, %v1576
        %v1578 = vpop.f32.mrf.mxu0
        %1579 = vmatprep.mubr.f32.mxu0 0.0
        %v1580 = vand.u32 %v1177, 4294901760
        %1581 = vmatmul.mubr.f32.gmra.mxu0 %v1580
        %v1582 = vpop.f32.mrf.mxu0
        %v1583 = vadd.f32 %v1398, %v1582
        %v1584 = vpop.f32.mrf.mxu0
        %1585 = vmatprep.mubr.f32.mxu0 0.0
        %v1586 = vand.u32 %v1180, 4294901760
        %1587 = vmatmul.mubr.f32.gmra.mxu0 %v1586
        %v1588 = vpop.f32.mrf.mxu0
        %v1589 = vadd.f32 %v1408, %v1588
        %v1590 = vpop.f32.mrf.mxu0
        %1591 = vdwg.mxu0
        %1592 = vmatprep.subr.mxu0 0.0
        %1593 = vmatpush1.msra.mxu0 0.0
        %1594 = vmatprep.subr.mxu0 0.0
        %1595 = vmatpush1.msra.mxu0 0.0
        %1596 = vmatprep.subr.mxu0 0.0
        %1597 = vmatpush1.msra.mxu0 0.0
        %1598 = vmatprep.subr.mxu0 0.0
        %1599 = vmatpush1.msra.mxu0 0.0
        %1600 = vmatprep.subr.mxu0 0.0
        %1601 = vmatpush1.msra.mxu0 0.0
        %1602 = vmatprep.subr.mxu0 0.0
        %1603 = vmatpush1.msra.mxu0 0.0
        %1604 = vmatprep.subr.mxu0 0.0
        %1605 = vmatpush1.msra.mxu0 0.0
        %1606 = vmatprep.subr.mxu0 0.0
        %1607 = vmatpush1.msra.mxu0 0.0
        %1608 = vmatprep.subr.mxu0 0.0
        %1609 = vmatpush1.msra.mxu0 0.0
        %1610 = vmatprep.subr.mxu0 0.0
        %1611 = vmatpush1.msra.mxu0 0.0
        %1612 = vmatprep.subr.mxu0 0.0
        %1613 = vmatpush1.msra.mxu0 0.0
        %1614 = vmatprep.subr.mxu0 0.0
        %1615 = vmatpush1.msra.mxu0 0.0
        %1616 = vmatprep.subr.mxu0 0.0
        %v1617 = vand.u32 %v454, 4294901760
        %v1618 = vsub.f32 %v454, %v1617
        %1619 = vmatpush1.msra.mxu0 %v1618
        %1620 = vmatprep.subr.mxu0 0.0
        %v1621 = vand.u32 %v453, 4294901760
        %v1622 = vsub.f32 %v453, %v1621
        %1623 = vmatpush1.msra.mxu0 %v1622
        %1624 = vmatprep.subr.mxu0 0.0
        %v1625 = vand.u32 %v452, 4294901760
        %v1626 = vsub.f32 %v452, %v1625
        %1627 = vmatpush1.msra.mxu0 %v1626
        %1628 = vmatprep.subr.mxu0 0.0
        %v1629 = vand.u32 %v451, 4294901760
        %v1630 = vsub.f32 %v451, %v1629
        %1631 = vmatpush1.msra.mxu0 %v1630
        %1632 = vmatprep.subr.mxu0 0.0
        %1633 = vmatpush2.msra.mxu0 0.0
        %1634 = vmatprep.subr.mxu0 0.0
        %1635 = vmatpush2.msra.mxu0 0.0
        %1636 = vmatprep.subr.mxu0 0.0
        %1637 = vmatpush2.msra.mxu0 0.0
        %1638 = vmatprep.subr.mxu0 0.0
        %1639 = vmatpush2.msra.mxu0 0.0
        %1640 = vmatprep.subr.mxu0 0.0
        %1641 = vmatpush2.msra.mxu0 0.0
        %1642 = vmatprep.subr.mxu0 0.0
        %1643 = vmatpush2.msra.mxu0 0.0
        %1644 = vmatprep.subr.mxu0 0.0
        %1645 = vmatpush2.msra.mxu0 0.0
        %1646 = vmatprep.subr.mxu0 0.0
        %1647 = vmatpush2.msra.mxu0 0.0
        %1648 = vmatprep.subr.mxu0 0.0
        %1649 = vmatpush2.msra.mxu0 0.0
        %1650 = vmatprep.subr.mxu0 0.0
        %1651 = vmatpush2.msra.mxu0 0.0
        %1652 = vmatprep.subr.mxu0 0.0
        %1653 = vmatpush2.msra.mxu0 0.0
        %1654 = vmatprep.subr.mxu0 0.0
        %1655 = vmatpush2.msra.mxu0 0.0
        %1656 = vmatprep.subr.mxu0 0.0
        %1657 = vmatpush2.msra.mxu0 0.0
        %1658 = vmatprep.subr.mxu0 0.0
        %1659 = vmatpush2.msra.mxu0 0.0
        %1660 = vmatprep.subr.mxu0 0.0
        %1661 = vmatpush2.msra.mxu0 0.0
        %1662 = vmatprep.subr.mxu0 0.0
        %1663 = vmatpush2.msra.mxu0 0.0
        %1664 = vmatprep.mubr.f32.mxu0 0.0
        %v1665 = vand.u32 %v1135, 4294901760
        %v1666 = vsub.f32 %v1135, %v1665
        %1667 = vmatmul.mubr.f32.gmra.mxu0 %v1666
        %v1668 = vpop.f32.mrf.mxu0
        %v1669 = vadd.f32 %v1499, %v1668
        %v1670 = vpop.f32.mrf.mxu0
        %1671 = vmatprep.mubr.f32.mxu0 0.0
        %v1672 = vand.u32 %v1138, 4294901760
        %v1673 = vsub.f32 %v1138, %v1672
        %1674 = vmatmul.mubr.f32.gmra.mxu0 %v1673
        %v1675 = vpop.f32.mrf.mxu0
        %v1676 = vadd.f32 %v1505, %v1675
        %v1677 = vpop.f32.mrf.mxu0
        %1678 = vmatprep.mubr.f32.mxu0 0.0
        %v1679 = vand.u32 %v1141, 4294901760
        %v1680 = vsub.f32 %v1141, %v1679
        %1681 = vmatmul.mubr.f32.gmra.mxu0 %v1680
        %v1682 = vpop.f32.mrf.mxu0
        %v1683 = vadd.f32 %v1511, %v1682
        %v1684 = vpop.f32.mrf.mxu0
        %1685 = vmatprep.mubr.f32.mxu0 0.0
        %v1686 = vand.u32 %v1144, 4294901760
        %v1687 = vsub.f32 %v1144, %v1686
        %1688 = vmatmul.mubr.f32.gmra.mxu0 %v1687
        %v1689 = vpop.f32.mrf.mxu0
        %v1690 = vadd.f32 %v1517, %v1689
        %v1691 = vpop.f32.mrf.mxu0
        %1692 = vmatprep.mubr.f32.mxu0 0.0
        %v1693 = vand.u32 %v1147, 4294901760
        %v1694 = vsub.f32 %v1147, %v1693
        %1695 = vmatmul.mubr.f32.gmra.mxu0 %v1694
        %v1696 = vpop.f32.mrf.mxu0
        %v1697 = vadd.f32 %v1523, %v1696
        %v1698 = vpop.f32.mrf.mxu0
        %1699 = vmatprep.mubr.f32.mxu0 0.0
        %v1700 = vand.u32 %v1150, 4294901760
        %v1701 = vsub.f32 %v1150, %v1700
        %1702 = vmatmul.mubr.f32.gmra.mxu0 %v1701
        %v1703 = vpop.f32.mrf.mxu0
        %v1704 = vadd.f32 %v1529, %v1703
        %v1705 = vpop.f32.mrf.mxu0
        %1706 = vmatprep.mubr.f32.mxu0 0.0
        %v1707 = vand.u32 %v1153, 4294901760
        %v1708 = vsub.f32 %v1153, %v1707
        %1709 = vmatmul.mubr.f32.gmra.mxu0 %v1708
        %v1710 = vpop.f32.mrf.mxu0
        %v1711 = vadd.f32 %v1535, %v1710
        %v1712 = vpop.f32.mrf.mxu0
        %1713 = vmatprep.mubr.f32.mxu0 0.0
        %v1714 = vand.u32 %v1156, 4294901760
        %v1715 = vsub.f32 %v1156, %v1714
        %1716 = vmatmul.mubr.f32.gmra.mxu0 %v1715
        %v1717 = vpop.f32.mrf.mxu0
        %v1718 = vadd.f32 %v1541, %v1717
        %v1719 = vpop.f32.mrf.mxu0
        %1720 = vmatprep.mubr.f32.mxu0 0.0
        %v1721 = vand.u32 %v1159, 4294901760
        %v1722 = vsub.f32 %v1159, %v1721
        %1723 = vmatmul.mubr.f32.gmra.mxu0 %v1722
        %v1724 = vpop.f32.mrf.mxu0
        %v1725 = vadd.f32 %v1547, %v1724
        %v1726 = vpop.f32.mrf.mxu0
        %1727 = vmatprep.mubr.f32.mxu0 0.0
        %v1728 = vand.u32 %v1162, 4294901760
        %v1729 = vsub.f32 %v1162, %v1728
        %1730 = vmatmul.mubr.f32.gmra.mxu0 %v1729
        %v1731 = vpop.f32.mrf.mxu0
        %v1732 = vadd.f32 %v1553, %v1731
        %v1733 = vpop.f32.mrf.mxu0
        %1734 = vmatprep.mubr.f32.mxu0 0.0
        %v1735 = vand.u32 %v1165, 4294901760
        %v1736 = vsub.f32 %v1165, %v1735
        %1737 = vmatmul.mubr.f32.gmra.mxu0 %v1736
        %v1738 = vpop.f32.mrf.mxu0
        %v1739 = vadd.f32 %v1559, %v1738
        %v1740 = vpop.f32.mrf.mxu0
        %1741 = vmatprep.mubr.f32.mxu0 0.0
        %v1742 = vand.u32 %v1168, 4294901760
        %v1743 = vsub.f32 %v1168, %v1742
        %1744 = vmatmul.mubr.f32.gmra.mxu0 %v1743
        %v1745 = vpop.f32.mrf.mxu0
        %v1746 = vadd.f32 %v1565, %v1745
        %v1747 = vpop.f32.mrf.mxu0
        %1748 = vmatprep.mubr.f32.mxu0 0.0
        %v1749 = vand.u32 %v1171, 4294901760
        %v1750 = vsub.f32 %v1171, %v1749
        %1751 = vmatmul.mubr.f32.gmra.mxu0 %v1750
        %v1752 = vpop.f32.mrf.mxu0
        %v1753 = vadd.f32 %v1571, %v1752
        %v1754 = vpop.f32.mrf.mxu0
        %1755 = vmatprep.mubr.f32.mxu0 0.0
        %v1756 = vand.u32 %v1174, 4294901760
        %v1757 = vsub.f32 %v1174, %v1756
        %1758 = vmatmul.mubr.f32.gmra.mxu0 %v1757
        %v1759 = vpop.f32.mrf.mxu0
        %v1760 = vadd.f32 %v1577, %v1759
        %v1761 = vpop.f32.mrf.mxu0
        %1762 = vmatprep.mubr.f32.mxu0 0.0
        %v1763 = vand.u32 %v1177, 4294901760
        %v1764 = vsub.f32 %v1177, %v1763
        %1765 = vmatmul.mubr.f32.gmra.mxu0 %v1764
        %v1766 = vpop.f32.mrf.mxu0
        %v1767 = vadd.f32 %v1583, %v1766
        %v1768 = vpop.f32.mrf.mxu0
        %1769 = vmatprep.mubr.f32.mxu0 0.0
        %v1770 = vand.u32 %v1180, 4294901760
        %v1771 = vsub.f32 %v1180, %v1770
        %1772 = vmatmul.mubr.f32.gmra.mxu0 %v1771
        %v1773 = vpop.f32.mrf.mxu0
        %v1774 = vadd.f32 %v1589, %v1773
        %v1775 = vpop.f32.mrf.mxu0
        %1776 = vdwg.mxu0
        %1777 = vmatprep.subr.mxu0 0.0
        %1778 = vmatpush1.msra.mxu0 0.0
        %1779 = vmatprep.subr.mxu0 0.0
        %1780 = vmatpush1.msra.mxu0 0.0
        %1781 = vmatprep.subr.mxu0 0.0
        %1782 = vmatpush1.msra.mxu0 0.0
        %1783 = vmatprep.subr.mxu0 0.0
        %1784 = vmatpush1.msra.mxu0 0.0
        %1785 = vmatprep.subr.mxu0 0.0
        %1786 = vmatpush1.msra.mxu0 0.0
        %1787 = vmatprep.subr.mxu0 0.0
        %1788 = vmatpush1.msra.mxu0 0.0
        %1789 = vmatprep.subr.mxu0 0.0
        %1790 = vmatpush1.msra.mxu0 0.0
        %1791 = vmatprep.subr.mxu0 0.0
        %1792 = vmatpush1.msra.mxu0 0.0
        %1793 = vmatprep.subr.mxu0 0.0
        %1794 = vmatpush1.msra.mxu0 0.0
        %1795 = vmatprep.subr.mxu0 0.0
        %1796 = vmatpush1.msra.mxu0 0.0
        %1797 = vmatprep.subr.mxu0 0.0
        %1798 = vmatpush1.msra.mxu0 0.0
        %1799 = vmatprep.subr.mxu0 0.0
        %1800 = vmatpush1.msra.mxu0 0.0
        %1801 = vmatprep.subr.mxu0 0.0
        %v1802 = vand.u32 %v454, 4294901760
        %1803 = vmatpush1.msra.mxu0 %v1802
        %1804 = vmatprep.subr.mxu0 0.0
        %v1805 = vand.u32 %v453, 4294901760
        %1806 = vmatpush1.msra.mxu0 %v1805
        %1807 = vmatprep.subr.mxu0 0.0
        %v1808 = vand.u32 %v452, 4294901760
        %1809 = vmatpush1.msra.mxu0 %v1808
        %1810 = vmatprep.subr.mxu0 0.0
        %v1811 = vand.u32 %v451, 4294901760
        %1812 = vmatpush1.msra.mxu0 %v1811
        %1813 = vmatprep.subr.mxu0 0.0
        %1814 = vmatpush2.msra.mxu0 0.0
        %1815 = vmatprep.subr.mxu0 0.0
        %1816 = vmatpush2.msra.mxu0 0.0
        %1817 = vmatprep.subr.mxu0 0.0
        %1818 = vmatpush2.msra.mxu0 0.0
        %1819 = vmatprep.subr.mxu0 0.0
        %1820 = vmatpush2.msra.mxu0 0.0
        %1821 = vmatprep.subr.mxu0 0.0
        %1822 = vmatpush2.msra.mxu0 0.0
        %1823 = vmatprep.subr.mxu0 0.0
        %1824 = vmatpush2.msra.mxu0 0.0
        %1825 = vmatprep.subr.mxu0 0.0
        %1826 = vmatpush2.msra.mxu0 0.0
        %1827 = vmatprep.subr.mxu0 0.0
        %1828 = vmatpush2.msra.mxu0 0.0
        %1829 = vmatprep.subr.mxu0 0.0
        %1830 = vmatpush2.msra.mxu0 0.0
        %1831 = vmatprep.subr.mxu0 0.0
        %1832 = vmatpush2.msra.mxu0 0.0
        %1833 = vmatprep.subr.mxu0 0.0
        %1834 = vmatpush2.msra.mxu0 0.0
        %1835 = vmatprep.subr.mxu0 0.0
        %1836 = vmatpush2.msra.mxu0 0.0
        %1837 = vmatprep.subr.mxu0 0.0
        %1838 = vmatpush2.msra.mxu0 0.0
        %1839 = vmatprep.subr.mxu0 0.0
        %1840 = vmatpush2.msra.mxu0 0.0
        %1841 = vmatprep.subr.mxu0 0.0
        %1842 = vmatpush2.msra.mxu0 0.0
        %1843 = vmatprep.subr.mxu0 0.0
        %1844 = vmatpush2.msra.mxu0 0.0
        %1845 = vmatprep.mubr.f32.mxu0 0.0
        %v1846 = vand.u32 %v1135, 4294901760
        %v1847 = vsub.f32 %v1135, %v1846
        %v1848 = vand.u32 %v1847, 4294901760
        %1849 = vmatmul.mubr.f32.gmra.mxu0 %v1848
        %v1850 = vpop.f32.mrf.mxu0
        %v1851 = vadd.f32 %v1669, %v1850
        %v1852 = vpop.f32.mrf.mxu0
        %1853 = vmatprep.mubr.f32.mxu0 0.0
        %v1854 = vand.u32 %v1138, 4294901760
        %v1855 = vsub.f32 %v1138, %v1854
        %v1856 = vand.u32 %v1855, 4294901760
        %1857 = vmatmul.mubr.f32.gmra.mxu0 %v1856
        %v1858 = vpop.f32.mrf.mxu0
        %v1859 = vadd.f32 %v1676, %v1858
        %v1860 = vpop.f32.mrf.mxu0
        %1861 = vmatprep.mubr.f32.mxu0 0.0
        %v1862 = vand.u32 %v1141, 4294901760
        %v1863 = vsub.f32 %v1141, %v1862
        %v1864 = vand.u32 %v1863, 4294901760
        %1865 = vmatmul.mubr.f32.gmra.mxu0 %v1864
        %v1866 = vpop.f32.mrf.mxu0
        %v1867 = vadd.f32 %v1683, %v1866
        %v1868 = vpop.f32.mrf.mxu0
        %1869 = vmatprep.mubr.f32.mxu0 0.0
        %v1870 = vand.u32 %v1144, 4294901760
        %v1871 = vsub.f32 %v1144, %v1870
        %v1872 = vand.u32 %v1871, 4294901760
        %1873 = vmatmul.mubr.f32.gmra.mxu0 %v1872
        %v1874 = vpop.f32.mrf.mxu0
        %v1875 = vadd.f32 %v1690, %v1874
        %v1876 = vpop.f32.mrf.mxu0
        %1877 = vmatprep.mubr.f32.mxu0 0.0
        %v1878 = vand.u32 %v1147, 4294901760
        %v1879 = vsub.f32 %v1147, %v1878
        %v1880 = vand.u32 %v1879, 4294901760
        %1881 = vmatmul.mubr.f32.gmra.mxu0 %v1880
        %v1882 = vpop.f32.mrf.mxu0
        %v1883 = vadd.f32 %v1697, %v1882
        %v1884 = vpop.f32.mrf.mxu0
        %1885 = vmatprep.mubr.f32.mxu0 0.0
        %v1886 = vand.u32 %v1150, 4294901760
        %v1887 = vsub.f32 %v1150, %v1886
        %v1888 = vand.u32 %v1887, 4294901760
        %1889 = vmatmul.mubr.f32.gmra.mxu0 %v1888
        %v1890 = vpop.f32.mrf.mxu0
        %v1891 = vadd.f32 %v1704, %v1890
        %v1892 = vpop.f32.mrf.mxu0
        %1893 = vmatprep.mubr.f32.mxu0 0.0
        %v1894 = vand.u32 %v1153, 4294901760
        %v1895 = vsub.f32 %v1153, %v1894
        %v1896 = vand.u32 %v1895, 4294901760
        %1897 = vmatmul.mubr.f32.gmra.mxu0 %v1896
        %v1898 = vpop.f32.mrf.mxu0
        %v1899 = vadd.f32 %v1711, %v1898
        %v1900 = vpop.f32.mrf.mxu0
        %1901 = vmatprep.mubr.f32.mxu0 0.0
        %v1902 = vand.u32 %v1156, 4294901760
        %v1903 = vsub.f32 %v1156, %v1902
        %v1904 = vand.u32 %v1903, 4294901760
        %1905 = vmatmul.mubr.f32.gmra.mxu0 %v1904
        %v1906 = vpop.f32.mrf.mxu0
        %v1907 = vadd.f32 %v1718, %v1906
        %v1908 = vpop.f32.mrf.mxu0
        %1909 = vmatprep.mubr.f32.mxu0 0.0
        %v1910 = vand.u32 %v1159, 4294901760
        %v1911 = vsub.f32 %v1159, %v1910
        %v1912 = vand.u32 %v1911, 4294901760
        %1913 = vmatmul.mubr.f32.gmra.mxu0 %v1912
        %v1914 = vpop.f32.mrf.mxu0
        %v1915 = vadd.f32 %v1725, %v1914
        %v1916 = vpop.f32.mrf.mxu0
        %1917 = vmatprep.mubr.f32.mxu0 0.0
        %v1918 = vand.u32 %v1162, 4294901760
        %v1919 = vsub.f32 %v1162, %v1918
        %v1920 = vand.u32 %v1919, 4294901760
        %1921 = vmatmul.mubr.f32.gmra.mxu0 %v1920
        %v1922 = vpop.f32.mrf.mxu0
        %v1923 = vadd.f32 %v1732, %v1922
        %v1924 = vpop.f32.mrf.mxu0
        %1925 = vmatprep.mubr.f32.mxu0 0.0
        %v1926 = vand.u32 %v1165, 4294901760
        %v1927 = vsub.f32 %v1165, %v1926
        %v1928 = vand.u32 %v1927, 4294901760
        %1929 = vmatmul.mubr.f32.gmra.mxu0 %v1928
        %v1930 = vpop.f32.mrf.mxu0
        %v1931 = vadd.f32 %v1739, %v1930
        %v1932 = vpop.f32.mrf.mxu0
        %1933 = vmatprep.mubr.f32.mxu0 0.0
        %v1934 = vand.u32 %v1168, 4294901760
        %v1935 = vsub.f32 %v1168, %v1934
        %v1936 = vand.u32 %v1935, 4294901760
        %1937 = vmatmul.mubr.f32.gmra.mxu0 %v1936
        %v1938 = vpop.f32.mrf.mxu0
        %v1939 = vadd.f32 %v1746, %v1938
        %v1940 = vpop.f32.mrf.mxu0
        %1941 = vmatprep.mubr.f32.mxu0 0.0
        %v1942 = vand.u32 %v1171, 4294901760
        %v1943 = vsub.f32 %v1171, %v1942
        %v1944 = vand.u32 %v1943, 4294901760
        %1945 = vmatmul.mubr.f32.gmra.mxu0 %v1944
        %v1946 = vpop.f32.mrf.mxu0
        %v1947 = vadd.f32 %v1753, %v1946
        %v1948 = vpop.f32.mrf.mxu0
        %1949 = vmatprep.mubr.f32.mxu0 0.0
        %v1950 = vand.u32 %v1174, 4294901760
        %v1951 = vsub.f32 %v1174, %v1950
        %v1952 = vand.u32 %v1951, 4294901760
        %1953 = vmatmul.mubr.f32.gmra.mxu0 %v1952
        %v1954 = vpop.f32.mrf.mxu0
        %v1955 = vadd.f32 %v1760, %v1954
        %v1956 = vpop.f32.mrf.mxu0
        %1957 = vmatprep.mubr.f32.mxu0 0.0
        %v1958 = vand.u32 %v1177, 4294901760
        %v1959 = vsub.f32 %v1177, %v1958
        %v1960 = vand.u32 %v1959, 4294901760
        %1961 = vmatmul.mubr.f32.gmra.mxu0 %v1960
        %v1962 = vpop.f32.mrf.mxu0
        %v1963 = vadd.f32 %v1767, %v1962
        %v1964 = vpop.f32.mrf.mxu0
        %1965 = vmatprep.mubr.f32.mxu0 0.0
        %v1966 = vand.u32 %v1180, 4294901760
        %v1967 = vsub.f32 %v1180, %v1966
        %v1968 = vand.u32 %v1967, 4294901760
        %1969 = vmatmul.mubr.f32.gmra.mxu0 %v1968
        %v1970 = vpop.f32.mrf.mxu0
        %v1971 = vadd.f32 %v1774, %v1970
        %v1972 = vpop.f32.mrf.mxu0
        %1973 = vdwg.mxu0
        %1974 = vmatprep.subr.mxu0 0.0
        %1975 = vmatpush1.msra.mxu0 0.0
        %1976 = vmatprep.subr.mxu0 0.0
        %1977 = vmatpush1.msra.mxu0 0.0
        %1978 = vmatprep.subr.mxu0 0.0
        %1979 = vmatpush1.msra.mxu0 0.0
        %1980 = vmatprep.subr.mxu0 0.0
        %1981 = vmatpush1.msra.mxu0 0.0
        %1982 = vmatprep.subr.mxu0 0.0
        %1983 = vmatpush1.msra.mxu0 0.0
        %1984 = vmatprep.subr.mxu0 0.0
        %1985 = vmatpush1.msra.mxu0 0.0
        %1986 = vmatprep.subr.mxu0 0.0
        %1987 = vmatpush1.msra.mxu0 0.0
        %1988 = vmatprep.subr.mxu0 0.0
        %1989 = vmatpush1.msra.mxu0 0.0
        %1990 = vmatprep.subr.mxu0 0.0
        %1991 = vmatpush1.msra.mxu0 0.0
        %1992 = vmatprep.subr.mxu0 0.0
        %1993 = vmatpush1.msra.mxu0 0.0
        %1994 = vmatprep.subr.mxu0 0.0
        %1995 = vmatpush1.msra.mxu0 0.0
        %1996 = vmatprep.subr.mxu0 0.0
        %1997 = vmatpush1.msra.mxu0 0.0
        %1998 = vmatprep.subr.mxu0 0.0
        %v1999 = vand.u32 %v454, 4294901760
        %v2000 = vsub.f32 %v454, %v1999
        %v2001 = vand.u32 %v2000, 4294901760
        %2002 = vmatpush1.msra.mxu0 %v2001
        %2003 = vmatprep.subr.mxu0 0.0
        %v2004 = vand.u32 %v453, 4294901760
        %v2005 = vsub.f32 %v453, %v2004
        %v2006 = vand.u32 %v2005, 4294901760
        %2007 = vmatpush1.msra.mxu0 %v2006
        %2008 = vmatprep.subr.mxu0 0.0
        %v2009 = vand.u32 %v452, 4294901760
        %v2010 = vsub.f32 %v452, %v2009
        %v2011 = vand.u32 %v2010, 4294901760
        %2012 = vmatpush1.msra.mxu0 %v2011
        %2013 = vmatprep.subr.mxu0 0.0
        %v2014 = vand.u32 %v451, 4294901760
        %v2015 = vsub.f32 %v451, %v2014
        %v2016 = vand.u32 %v2015, 4294901760
        %2017 = vmatpush1.msra.mxu0 %v2016
        %2018 = vmatprep.subr.mxu0 0.0
        %2019 = vmatpush2.msra.mxu0 0.0
        %2020 = vmatprep.subr.mxu0 0.0
        %2021 = vmatpush2.msra.mxu0 0.0
        %2022 = vmatprep.subr.mxu0 0.0
        %2023 = vmatpush2.msra.mxu0 0.0
        %2024 = vmatprep.subr.mxu0 0.0
        %2025 = vmatpush2.msra.mxu0 0.0
        %2026 = vmatprep.subr.mxu0 0.0
        %2027 = vmatpush2.msra.mxu0 0.0
        %2028 = vmatprep.subr.mxu0 0.0
        %2029 = vmatpush2.msra.mxu0 0.0
        %2030 = vmatprep.subr.mxu0 0.0
        %2031 = vmatpush2.msra.mxu0 0.0
        %2032 = vmatprep.subr.mxu0 0.0
        %2033 = vmatpush2.msra.mxu0 0.0
        %2034 = vmatprep.subr.mxu0 0.0
        %2035 = vmatpush2.msra.mxu0 0.0
        %2036 = vmatprep.subr.mxu0 0.0
        %2037 = vmatpush2.msra.mxu0 0.0
        %2038 = vmatprep.subr.mxu0 0.0
        %2039 = vmatpush2.msra.mxu0 0.0
        %2040 = vmatprep.subr.mxu0 0.0
        %2041 = vmatpush2.msra.mxu0 0.0
        %2042 = vmatprep.subr.mxu0 0.0
        %2043 = vmatpush2.msra.mxu0 0.0
        %2044 = vmatprep.subr.mxu0 0.0
        %2045 = vmatpush2.msra.mxu0 0.0
        %2046 = vmatprep.subr.mxu0 0.0
        %2047 = vmatpush2.msra.mxu0 0.0
        %2048 = vmatprep.subr.mxu0 0.0
        %2049 = vmatpush2.msra.mxu0 0.0
        %2050 = vmatprep.mubr.f32.mxu0 0.0
        %v2051 = vand.u32 %v1135, 4294901760
        %2052 = vmatmul.mubr.f32.gmra.mxu0 %v2051
        %v2053 = vpop.f32.mrf.mxu0
        %v2054 = vadd.f32 %v1851, %v2053
        %v2055 = vpop.f32.mrf.mxu0
        %2056 = vmatprep.mubr.f32.mxu0 0.0
        %v2057 = vand.u32 %v1138, 4294901760
        %2058 = vmatmul.mubr.f32.gmra.mxu0 %v2057
        %v2059 = vpop.f32.mrf.mxu0
        %v2060 = vadd.f32 %v1859, %v2059
        %v2061 = vpop.f32.mrf.mxu0
        %2062 = vmatprep.mubr.f32.mxu0 0.0
        %v2063 = vand.u32 %v1141, 4294901760
        %2064 = vmatmul.mubr.f32.gmra.mxu0 %v2063
        %v2065 = vpop.f32.mrf.mxu0
        %v2066 = vadd.f32 %v1867, %v2065
        %v2067 = vpop.f32.mrf.mxu0
        %2068 = vmatprep.mubr.f32.mxu0 0.0
        %v2069 = vand.u32 %v1144, 4294901760
        %2070 = vmatmul.mubr.f32.gmra.mxu0 %v2069
        %v2071 = vpop.f32.mrf.mxu0
        %v2072 = vadd.f32 %v1875, %v2071
        %v2073 = vpop.f32.mrf.mxu0
        %2074 = vmatprep.mubr.f32.mxu0 0.0
        %v2075 = vand.u32 %v1147, 4294901760
        %2076 = vmatmul.mubr.f32.gmra.mxu0 %v2075
        %v2077 = vpop.f32.mrf.mxu0
        %v2078 = vadd.f32 %v1883, %v2077
        %v2079 = vpop.f32.mrf.mxu0
        %2080 = vmatprep.mubr.f32.mxu0 0.0
        %v2081 = vand.u32 %v1150, 4294901760
        %2082 = vmatmul.mubr.f32.gmra.mxu0 %v2081
        %v2083 = vpop.f32.mrf.mxu0
        %v2084 = vadd.f32 %v1891, %v2083
        %v2085 = vpop.f32.mrf.mxu0
        %2086 = vmatprep.mubr.f32.mxu0 0.0
        %v2087 = vand.u32 %v1153, 4294901760
        %2088 = vmatmul.mubr.f32.gmra.mxu0 %v2087
        %v2089 = vpop.f32.mrf.mxu0
        %v2090 = vadd.f32 %v1899, %v2089
        %v2091 = vpop.f32.mrf.mxu0
        %2092 = vmatprep.mubr.f32.mxu0 0.0
        %v2093 = vand.u32 %v1156, 4294901760
        %2094 = vmatmul.mubr.f32.gmra.mxu0 %v2093
        %v2095 = vpop.f32.mrf.mxu0
        %v2096 = vadd.f32 %v1907, %v2095
        %v2097 = vpop.f32.mrf.mxu0
        %2098 = vmatprep.mubr.f32.mxu0 0.0
        %v2099 = vand.u32 %v1159, 4294901760
        %2100 = vmatmul.mubr.f32.gmra.mxu0 %v2099
        %v2101 = vpop.f32.mrf.mxu0
        %v2102 = vadd.f32 %v1915, %v2101
        %v2103 = vpop.f32.mrf.mxu0
        %2104 = vmatprep.mubr.f32.mxu0 0.0
        %v2105 = vand.u32 %v1162, 4294901760
        %2106 = vmatmul.mubr.f32.gmra.mxu0 %v2105
        %v2107 = vpop.f32.mrf.mxu0
        %v2108 = vadd.f32 %v1923, %v2107
        %v2109 = vpop.f32.mrf.mxu0
        %2110 = vmatprep.mubr.f32.mxu0 0.0
        %v2111 = vand.u32 %v1165, 4294901760
        %2112 = vmatmul.mubr.f32.gmra.mxu0 %v2111
        %v2113 = vpop.f32.mrf.mxu0
        %v2114 = vadd.f32 %v1931, %v2113
        %v2115 = vpop.f32.mrf.mxu0
        %2116 = vmatprep.mubr.f32.mxu0 0.0
        %v2117 = vand.u32 %v1168, 4294901760
        %2118 = vmatmul.mubr.f32.gmra.mxu0 %v2117
        %v2119 = vpop.f32.mrf.mxu0
        %v2120 = vadd.f32 %v1939, %v2119
        %v2121 = vpop.f32.mrf.mxu0
        %2122 = vmatprep.mubr.f32.mxu0 0.0
        %v2123 = vand.u32 %v1171, 4294901760
        %2124 = vmatmul.mubr.f32.gmra.mxu0 %v2123
        %v2125 = vpop.f32.mrf.mxu0
        %v2126 = vadd.f32 %v1947, %v2125
        %v2127 = vpop.f32.mrf.mxu0
        %2128 = vmatprep.mubr.f32.mxu0 0.0
        %v2129 = vand.u32 %v1174, 4294901760
        %2130 = vmatmul.mubr.f32.gmra.mxu0 %v2129
        %v2131 = vpop.f32.mrf.mxu0
        %v2132 = vadd.f32 %v1955, %v2131
        %v2133 = vpop.f32.mrf.mxu0
        %2134 = vmatprep.mubr.f32.mxu0 0.0
        %v2135 = vand.u32 %v1177, 4294901760
        %2136 = vmatmul.mubr.f32.gmra.mxu0 %v2135
        %v2137 = vpop.f32.mrf.mxu0
        %v2138 = vadd.f32 %v1963, %v2137
        %v2139 = vpop.f32.mrf.mxu0
        %2140 = vmatprep.mubr.f32.mxu0 0.0
        %v2141 = vand.u32 %v1180, 4294901760
        %2142 = vmatmul.mubr.f32.gmra.mxu0 %v2141
        %v2143 = vpop.f32.mrf.mxu0
        %v2144 = vadd.f32 %v1971, %v2143
        %v2145 = vpop.f32.mrf.mxu0
        %2146 = vdwg.mxu0
        %2147 = vmatprep.subr.mxu0 0.0
        %2148 = vmatpush1.msra.mxu0 0.0
        %2149 = vmatprep.subr.mxu0 0.0
        %2150 = vmatpush1.msra.mxu0 0.0
        %2151 = vmatprep.subr.mxu0 0.0
        %2152 = vmatpush1.msra.mxu0 0.0
        %2153 = vmatprep.subr.mxu0 0.0
        %2154 = vmatpush1.msra.mxu0 0.0
        %2155 = vmatprep.subr.mxu0 0.0
        %2156 = vmatpush1.msra.mxu0 0.0
        %2157 = vmatprep.subr.mxu0 0.0
        %2158 = vmatpush1.msra.mxu0 0.0
        %2159 = vmatprep.subr.mxu0 0.0
        %2160 = vmatpush1.msra.mxu0 0.0
        %2161 = vmatprep.subr.mxu0 0.0
        %2162 = vmatpush1.msra.mxu0 0.0
        %2163 = vmatprep.subr.mxu0 0.0
        %2164 = vmatpush1.msra.mxu0 0.0
        %2165 = vmatprep.subr.mxu0 0.0
        %2166 = vmatpush1.msra.mxu0 0.0
        %2167 = vmatprep.subr.mxu0 0.0
        %2168 = vmatpush1.msra.mxu0 0.0
        %2169 = vmatprep.subr.mxu0 0.0
        %2170 = vmatpush1.msra.mxu0 0.0
        %2171 = vmatprep.subr.mxu0 0.0
        %v2172 = vand.u32 %v454, 4294901760
        %2173 = vmatpush1.msra.mxu0 %v2172
        %2174 = vmatprep.subr.mxu0 0.0
        %v2175 = vand.u32 %v453, 4294901760
        %2176 = vmatpush1.msra.mxu0 %v2175
        %2177 = vmatprep.subr.mxu0 0.0
        %v2178 = vand.u32 %v452, 4294901760
        %2179 = vmatpush1.msra.mxu0 %v2178
        %2180 = vmatprep.subr.mxu0 0.0
        %v2181 = vand.u32 %v451, 4294901760
        %2182 = vmatpush1.msra.mxu0 %v2181
        %2183 = vmatprep.subr.mxu0 0.0
        %2184 = vmatpush2.msra.mxu0 0.0
        %2185 = vmatprep.subr.mxu0 0.0
        %2186 = vmatpush2.msra.mxu0 0.0
        %2187 = vmatprep.subr.mxu0 0.0
        %2188 = vmatpush2.msra.mxu0 0.0
        %2189 = vmatprep.subr.mxu0 0.0
        %2190 = vmatpush2.msra.mxu0 0.0
        %2191 = vmatprep.subr.mxu0 0.0
        %2192 = vmatpush2.msra.mxu0 0.0
        %2193 = vmatprep.subr.mxu0 0.0
        %2194 = vmatpush2.msra.mxu0 0.0
        %2195 = vmatprep.subr.mxu0 0.0
        %2196 = vmatpush2.msra.mxu0 0.0
        %2197 = vmatprep.subr.mxu0 0.0
        %2198 = vmatpush2.msra.mxu0 0.0
        %2199 = vmatprep.subr.mxu0 0.0
        %2200 = vmatpush2.msra.mxu0 0.0
        %2201 = vmatprep.subr.mxu0 0.0
        %2202 = vmatpush2.msra.mxu0 0.0
        %2203 = vmatprep.subr.mxu0 0.0
        %2204 = vmatpush2.msra.mxu0 0.0
        %2205 = vmatprep.subr.mxu0 0.0
        %2206 = vmatpush2.msra.mxu0 0.0
        %2207 = vmatprep.subr.mxu0 0.0
        %2208 = vmatpush2.msra.mxu0 0.0
        %2209 = vmatprep.subr.mxu0 0.0
        %2210 = vmatpush2.msra.mxu0 0.0
        %2211 = vmatprep.subr.mxu0 0.0
        %2212 = vmatpush2.msra.mxu0 0.0
        %2213 = vmatprep.subr.mxu0 0.0
        %2214 = vmatpush2.msra.mxu0 0.0
        %2215 = vmatprep.mubr.f32.mxu0 0.0
        %v2216 = vand.u32 %v1135, 4294901760
        %2217 = vmatmul.mubr.f32.gmra.mxu0 %v2216
        %v2218 = vpop.f32.mrf.mxu0
        %v2219 = vadd.f32 %v2054, %v2218
        %v2220 = vpop.f32.mrf.mxu0
        %2221 = vmatprep.mubr.f32.mxu0 0.0
        %v2222 = vand.u32 %v1138, 4294901760
        %2223 = vmatmul.mubr.f32.gmra.mxu0 %v2222
        %v2224 = vpop.f32.mrf.mxu0
        %v2225 = vadd.f32 %v2060, %v2224
        %v2226 = vpop.f32.mrf.mxu0
        %2227 = vmatprep.mubr.f32.mxu0 0.0
        %v2228 = vand.u32 %v1141, 4294901760
        %2229 = vmatmul.mubr.f32.gmra.mxu0 %v2228
        %v2230 = vpop.f32.mrf.mxu0
        %v2231 = vadd.f32 %v2066, %v2230
        %v2232 = vpop.f32.mrf.mxu0
        %2233 = vmatprep.mubr.f32.mxu0 0.0
        %v2234 = vand.u32 %v1144, 4294901760
        %2235 = vmatmul.mubr.f32.gmra.mxu0 %v2234
        %v2236 = vpop.f32.mrf.mxu0
        %v2237 = vadd.f32 %v2072, %v2236
        %v2238 = vpop.f32.mrf.mxu0
        %2239 = vmatprep.mubr.f32.mxu0 0.0
        %v2240 = vand.u32 %v1147, 4294901760
        %2241 = vmatmul.mubr.f32.gmra.mxu0 %v2240
        %v2242 = vpop.f32.mrf.mxu0
        %v2243 = vadd.f32 %v2078, %v2242
        %v2244 = vpop.f32.mrf.mxu0
        %2245 = vmatprep.mubr.f32.mxu0 0.0
        %v2246 = vand.u32 %v1150, 4294901760
        %2247 = vmatmul.mubr.f32.gmra.mxu0 %v2246
        %v2248 = vpop.f32.mrf.mxu0
        %v2249 = vadd.f32 %v2084, %v2248
        %v2250 = vpop.f32.mrf.mxu0
        %2251 = vmatprep.mubr.f32.mxu0 0.0
        %v2252 = vand.u32 %v1153, 4294901760
        %2253 = vmatmul.mubr.f32.gmra.mxu0 %v2252
        %v2254 = vpop.f32.mrf.mxu0
        %v2255 = vadd.f32 %v2090, %v2254
        %v2256 = vpop.f32.mrf.mxu0
        %2257 = vmatprep.mubr.f32.mxu0 0.0
        %v2258 = vand.u32 %v1156, 4294901760
        %2259 = vmatmul.mubr.f32.gmra.mxu0 %v2258
        %v2260 = vpop.f32.mrf.mxu0
        %v2261 = vadd.f32 %v2096, %v2260
        %v2262 = vpop.f32.mrf.mxu0
        %2263 = vmatprep.mubr.f32.mxu0 0.0
        %v2264 = vand.u32 %v1159, 4294901760
        %2265 = vmatmul.mubr.f32.gmra.mxu0 %v2264
        %v2266 = vpop.f32.mrf.mxu0
        %v2267 = vadd.f32 %v2102, %v2266
        %v2268 = vpop.f32.mrf.mxu0
        %2269 = vmatprep.mubr.f32.mxu0 0.0
        %v2270 = vand.u32 %v1162, 4294901760
        %2271 = vmatmul.mubr.f32.gmra.mxu0 %v2270
        %v2272 = vpop.f32.mrf.mxu0
        %v2273 = vadd.f32 %v2108, %v2272
        %v2274 = vpop.f32.mrf.mxu0
        %2275 = vmatprep.mubr.f32.mxu0 0.0
        %v2276 = vand.u32 %v1165, 4294901760
        %2277 = vmatmul.mubr.f32.gmra.mxu0 %v2276
        %v2278 = vpop.f32.mrf.mxu0
        %v2279 = vadd.f32 %v2114, %v2278
        %v2280 = vpop.f32.mrf.mxu0
        %2281 = vmatprep.mubr.f32.mxu0 0.0
        %v2282 = vand.u32 %v1168, 4294901760
        %2283 = vmatmul.mubr.f32.gmra.mxu0 %v2282
        %v2284 = vpop.f32.mrf.mxu0
        %v2285 = vadd.f32 %v2120, %v2284
        %v2286 = vpop.f32.mrf.mxu0
        %2287 = vmatprep.mubr.f32.mxu0 0.0
        %v2288 = vand.u32 %v1171, 4294901760
        %2289 = vmatmul.mubr.f32.gmra.mxu0 %v2288
        %v2290 = vpop.f32.mrf.mxu0
        %v2291 = vadd.f32 %v2126, %v2290
        %v2292 = vpop.f32.mrf.mxu0
        %2293 = vmatprep.mubr.f32.mxu0 0.0
        %v2294 = vand.u32 %v1174, 4294901760
        %2295 = vmatmul.mubr.f32.gmra.mxu0 %v2294
        %v2296 = vpop.f32.mrf.mxu0
        %v2297 = vadd.f32 %v2132, %v2296
        %v2298 = vpop.f32.mrf.mxu0
        %2299 = vmatprep.mubr.f32.mxu0 0.0
        %v2300 = vand.u32 %v1177, 4294901760
        %2301 = vmatmul.mubr.f32.gmra.mxu0 %v2300
        %v2302 = vpop.f32.mrf.mxu0
        %v2303 = vadd.f32 %v2138, %v2302
        %v2304 = vpop.f32.mrf.mxu0
        %2305 = vmatprep.mubr.f32.mxu0 0.0
        %v2306 = vand.u32 %v1180, 4294901760
        %2307 = vmatmul.mubr.f32.gmra.mxu0 %v2306
        %v2308 = vpop.f32.mrf.mxu0
        %v2309 = vadd.f32 %v2144, %v2308
        %v2310 = vpop.f32.mrf.mxu0
        %2311 = vdwg.mxu0
        %v2313 = vsel %vm461, %v1102, 0
        %v2316 = vsel %vm461, %v1103, 0
        %v2319 = vsel %vm461, %v1104, 0
        %v2322 = vsel %vm461, %v1105, 0
        %v2325 = vsel %vm461, %v1106, 0
        %v2328 = vsel %vm461, %v1107, 0
        %v2331 = vsel %vm461, %v1108, 0
        %v2334 = vsel %vm461, %v1109, 0
        %v2337 = vsel %vm461, %v1110, 0
        %v2340 = vsel %vm461, %v1111, 0
        %v2343 = vsel %vm461, %v1112, 0
        %v2346 = vsel %vm461, %v1113, 0
        %v2349 = vsel %vm461, %v1114, 0
        %v2352 = vsel %vm461, %v1115, 0
        %v2355 = vsel %vm461, %v1116, 0
        %v2358 = vsel %vm461, %v1117, 0
        %2360 = vmatprep.subr.mxu0 0.0
        %2361 = vmatpush1.msra.mxu0 0.0
        %2362 = vmatprep.subr.mxu0 0.0
        %2363 = vmatpush1.msra.mxu0 0.0
        %2364 = vmatprep.subr.mxu0 0.0
        %2365 = vmatpush1.msra.mxu0 0.0
        %2366 = vmatprep.subr.mxu0 0.0
        %2367 = vmatpush1.msra.mxu0 0.0
        %2368 = vmatprep.subr.mxu0 0.0
        %2369 = vmatpush1.msra.mxu0 0.0
        %2370 = vmatprep.subr.mxu0 0.0
        %2371 = vmatpush1.msra.mxu0 0.0
        %2372 = vmatprep.subr.mxu0 0.0
        %2373 = vmatpush1.msra.mxu0 0.0
        %2374 = vmatprep.subr.mxu0 0.0
        %2375 = vmatpush1.msra.mxu0 0.0
        %2376 = vmatprep.subr.mxu0 0.0
        %2377 = vmatpush1.msra.mxu0 0.0
        %2378 = vmatprep.subr.mxu0 0.0
        %2379 = vmatpush1.msra.mxu0 0.0
        %2380 = vmatprep.subr.mxu0 0.0
        %2381 = vmatpush1.msra.mxu0 0.0
        %2382 = vmatprep.subr.mxu0 0.0
        %2383 = vmatpush1.msra.mxu0 0.0
        %2384 = vmatprep.subr.mxu0 0.0
        %v2385 = vand.u32 %v450, 4294901760
        %2386 = vmatpush1.msra.mxu0 %v2385
        %2387 = vmatprep.subr.mxu0 0.0
        %v2388 = vand.u32 %v449, 4294901760
        %2389 = vmatpush1.msra.mxu0 %v2388
        %2390 = vmatprep.subr.mxu0 0.0
        %v2391 = vand.u32 %v448, 4294901760
        %2392 = vmatpush1.msra.mxu0 %v2391
        %2393 = vmatprep.subr.mxu0 0.0
        %v2394 = vand.u32 %v447, 4294901760
        %2395 = vmatpush1.msra.mxu0 %v2394
        %2396 = vmatprep.subr.mxu0 0.0
        %2397 = vmatpush2.msra.mxu0 0.0
        %2398 = vmatprep.subr.mxu0 0.0
        %2399 = vmatpush2.msra.mxu0 0.0
        %2400 = vmatprep.subr.mxu0 0.0
        %2401 = vmatpush2.msra.mxu0 0.0
        %2402 = vmatprep.subr.mxu0 0.0
        %2403 = vmatpush2.msra.mxu0 0.0
        %2404 = vmatprep.subr.mxu0 0.0
        %2405 = vmatpush2.msra.mxu0 0.0
        %2406 = vmatprep.subr.mxu0 0.0
        %2407 = vmatpush2.msra.mxu0 0.0
        %2408 = vmatprep.subr.mxu0 0.0
        %2409 = vmatpush2.msra.mxu0 0.0
        %2410 = vmatprep.subr.mxu0 0.0
        %2411 = vmatpush2.msra.mxu0 0.0
        %2412 = vmatprep.subr.mxu0 0.0
        %2413 = vmatpush2.msra.mxu0 0.0
        %2414 = vmatprep.subr.mxu0 0.0
        %2415 = vmatpush2.msra.mxu0 0.0
        %2416 = vmatprep.subr.mxu0 0.0
        %2417 = vmatpush2.msra.mxu0 0.0
        %2418 = vmatprep.subr.mxu0 0.0
        %2419 = vmatpush2.msra.mxu0 0.0
        %2420 = vmatprep.subr.mxu0 0.0
        %2421 = vmatpush2.msra.mxu0 0.0
        %2422 = vmatprep.subr.mxu0 0.0
        %2423 = vmatpush2.msra.mxu0 0.0
        %2424 = vmatprep.subr.mxu0 0.0
        %2425 = vmatpush2.msra.mxu0 0.0
        %2426 = vmatprep.subr.mxu0 0.0
        %2427 = vmatpush2.msra.mxu0 0.0
        %2428 = vmatprep.mubr.f32.mxu0 0.0
        %v2429 = vand.u32 %v2313, 4294901760
        %v2430 = vsub.f32 %v2313, %v2429
        %v2431 = vand.u32 %v2430, 4294901760
        %v2432 = vsub.f32 %v2430, %v2431
        %v2433 = vand.u32 %v2432, 4294901760
        %2434 = vmatmul.mubr.f32.gmra.mxu0 %v2433
        %v2435 = vpop.f32.mrf.mxu0
        %v2436 = vadd.f32 %v2219, %v2435
        %v2437 = vpop.f32.mrf.mxu0
        %2438 = vmatprep.mubr.f32.mxu0 0.0
        %v2439 = vand.u32 %v2316, 4294901760
        %v2440 = vsub.f32 %v2316, %v2439
        %v2441 = vand.u32 %v2440, 4294901760
        %v2442 = vsub.f32 %v2440, %v2441
        %v2443 = vand.u32 %v2442, 4294901760
        %2444 = vmatmul.mubr.f32.gmra.mxu0 %v2443
        %v2445 = vpop.f32.mrf.mxu0
        %v2446 = vadd.f32 %v2225, %v2445
        %v2447 = vpop.f32.mrf.mxu0
        %2448 = vmatprep.mubr.f32.mxu0 0.0
        %v2449 = vand.u32 %v2319, 4294901760
        %v2450 = vsub.f32 %v2319, %v2449
        %v2451 = vand.u32 %v2450, 4294901760
        %v2452 = vsub.f32 %v2450, %v2451
        %v2453 = vand.u32 %v2452, 4294901760
        %2454 = vmatmul.mubr.f32.gmra.mxu0 %v2453
        %v2455 = vpop.f32.mrf.mxu0
        %v2456 = vadd.f32 %v2231, %v2455
        %v2457 = vpop.f32.mrf.mxu0
        %2458 = vmatprep.mubr.f32.mxu0 0.0
        %v2459 = vand.u32 %v2322, 4294901760
        %v2460 = vsub.f32 %v2322, %v2459
        %v2461 = vand.u32 %v2460, 4294901760
        %v2462 = vsub.f32 %v2460, %v2461
        %v2463 = vand.u32 %v2462, 4294901760
        %2464 = vmatmul.mubr.f32.gmra.mxu0 %v2463
        %v2465 = vpop.f32.mrf.mxu0
        %v2466 = vadd.f32 %v2237, %v2465
        %v2467 = vpop.f32.mrf.mxu0
        %2468 = vmatprep.mubr.f32.mxu0 0.0
        %v2469 = vand.u32 %v2325, 4294901760
        %v2470 = vsub.f32 %v2325, %v2469
        %v2471 = vand.u32 %v2470, 4294901760
        %v2472 = vsub.f32 %v2470, %v2471
        %v2473 = vand.u32 %v2472, 4294901760
        %2474 = vmatmul.mubr.f32.gmra.mxu0 %v2473
        %v2475 = vpop.f32.mrf.mxu0
        %v2476 = vadd.f32 %v2243, %v2475
        %v2477 = vpop.f32.mrf.mxu0
        %2478 = vmatprep.mubr.f32.mxu0 0.0
        %v2479 = vand.u32 %v2328, 4294901760
        %v2480 = vsub.f32 %v2328, %v2479
        %v2481 = vand.u32 %v2480, 4294901760
        %v2482 = vsub.f32 %v2480, %v2481
        %v2483 = vand.u32 %v2482, 4294901760
        %2484 = vmatmul.mubr.f32.gmra.mxu0 %v2483
        %v2485 = vpop.f32.mrf.mxu0
        %v2486 = vadd.f32 %v2249, %v2485
        %v2487 = vpop.f32.mrf.mxu0
        %2488 = vmatprep.mubr.f32.mxu0 0.0
        %v2489 = vand.u32 %v2331, 4294901760
        %v2490 = vsub.f32 %v2331, %v2489
        %v2491 = vand.u32 %v2490, 4294901760
        %v2492 = vsub.f32 %v2490, %v2491
        %v2493 = vand.u32 %v2492, 4294901760
        %2494 = vmatmul.mubr.f32.gmra.mxu0 %v2493
        %v2495 = vpop.f32.mrf.mxu0
        %v2496 = vadd.f32 %v2255, %v2495
        %v2497 = vpop.f32.mrf.mxu0
        %2498 = vmatprep.mubr.f32.mxu0 0.0
        %v2499 = vand.u32 %v2334, 4294901760
        %v2500 = vsub.f32 %v2334, %v2499
        %v2501 = vand.u32 %v2500, 4294901760
        %v2502 = vsub.f32 %v2500, %v2501
        %v2503 = vand.u32 %v2502, 4294901760
        %2504 = vmatmul.mubr.f32.gmra.mxu0 %v2503
        %v2505 = vpop.f32.mrf.mxu0
        %v2506 = vadd.f32 %v2261, %v2505
        %v2507 = vpop.f32.mrf.mxu0
        %2508 = vmatprep.mubr.f32.mxu0 0.0
        %v2509 = vand.u32 %v2337, 4294901760
        %v2510 = vsub.f32 %v2337, %v2509
        %v2511 = vand.u32 %v2510, 4294901760
        %v2512 = vsub.f32 %v2510, %v2511
        %v2513 = vand.u32 %v2512, 4294901760
        %2514 = vmatmul.mubr.f32.gmra.mxu0 %v2513
        %v2515 = vpop.f32.mrf.mxu0
        %v2516 = vadd.f32 %v2267, %v2515
        %v2517 = vpop.f32.mrf.mxu0
        %2518 = vmatprep.mubr.f32.mxu0 0.0
        %v2519 = vand.u32 %v2340, 4294901760
        %v2520 = vsub.f32 %v2340, %v2519
        %v2521 = vand.u32 %v2520, 4294901760
        %v2522 = vsub.f32 %v2520, %v2521
        %v2523 = vand.u32 %v2522, 4294901760
        %2524 = vmatmul.mubr.f32.gmra.mxu0 %v2523
        %v2525 = vpop.f32.mrf.mxu0
        %v2526 = vadd.f32 %v2273, %v2525
        %v2527 = vpop.f32.mrf.mxu0
        %2528 = vmatprep.mubr.f32.mxu0 0.0
        %v2529 = vand.u32 %v2343, 4294901760
        %v2530 = vsub.f32 %v2343, %v2529
        %v2531 = vand.u32 %v2530, 4294901760
        %v2532 = vsub.f32 %v2530, %v2531
        %v2533 = vand.u32 %v2532, 4294901760
        %2534 = vmatmul.mubr.f32.gmra.mxu0 %v2533
        %v2535 = vpop.f32.mrf.mxu0
        %v2536 = vadd.f32 %v2279, %v2535
        %v2537 = vpop.f32.mrf.mxu0
        %2538 = vmatprep.mubr.f32.mxu0 0.0
        %v2539 = vand.u32 %v2346, 4294901760
        %v2540 = vsub.f32 %v2346, %v2539
        %v2541 = vand.u32 %v2540, 4294901760
        %v2542 = vsub.f32 %v2540, %v2541
        %v2543 = vand.u32 %v2542, 4294901760
        %2544 = vmatmul.mubr.f32.gmra.mxu0 %v2543
        %v2545 = vpop.f32.mrf.mxu0
        %v2546 = vadd.f32 %v2285, %v2545
        %v2547 = vpop.f32.mrf.mxu0
        %2548 = vmatprep.mubr.f32.mxu0 0.0
        %v2549 = vand.u32 %v2349, 4294901760
        %v2550 = vsub.f32 %v2349, %v2549
        %v2551 = vand.u32 %v2550, 4294901760
        %v2552 = vsub.f32 %v2550, %v2551
        %v2553 = vand.u32 %v2552, 4294901760
        %2554 = vmatmul.mubr.f32.gmra.mxu0 %v2553
        %v2555 = vpop.f32.mrf.mxu0
        %v2556 = vadd.f32 %v2291, %v2555
        %v2557 = vpop.f32.mrf.mxu0
        %2558 = vmatprep.mubr.f32.mxu0 0.0
        %v2559 = vand.u32 %v2352, 4294901760
        %v2560 = vsub.f32 %v2352, %v2559
        %v2561 = vand.u32 %v2560, 4294901760
        %v2562 = vsub.f32 %v2560, %v2561
        %v2563 = vand.u32 %v2562, 4294901760
        %2564 = vmatmul.mubr.f32.gmra.mxu0 %v2563
        %v2565 = vpop.f32.mrf.mxu0
        %v2566 = vadd.f32 %v2297, %v2565
        %v2567 = vpop.f32.mrf.mxu0
        %2568 = vmatprep.mubr.f32.mxu0 0.0
        %v2569 = vand.u32 %v2355, 4294901760
        %v2570 = vsub.f32 %v2355, %v2569
        %v2571 = vand.u32 %v2570, 4294901760
        %v2572 = vsub.f32 %v2570, %v2571
        %v2573 = vand.u32 %v2572, 4294901760
        %2574 = vmatmul.mubr.f32.gmra.mxu0 %v2573
        %v2575 = vpop.f32.mrf.mxu0
        %v2576 = vadd.f32 %v2303, %v2575
        %v2577 = vpop.f32.mrf.mxu0
        %2578 = vmatprep.mubr.f32.mxu0 0.0
        %v2579 = vand.u32 %v2358, 4294901760
        %v2580 = vsub.f32 %v2358, %v2579
        %v2581 = vand.u32 %v2580, 4294901760
        %v2582 = vsub.f32 %v2580, %v2581
        %v2583 = vand.u32 %v2582, 4294901760
        %2584 = vmatmul.mubr.f32.gmra.mxu0 %v2583
        %v2585 = vpop.f32.mrf.mxu0
        %v2586 = vadd.f32 %v2309, %v2585
        %v2587 = vpop.f32.mrf.mxu0
        %2588 = vdwg.mxu0
        %2589 = vmatprep.subr.mxu0 0.0
        %2590 = vmatpush1.msra.mxu0 0.0
        %2591 = vmatprep.subr.mxu0 0.0
        %2592 = vmatpush1.msra.mxu0 0.0
        %2593 = vmatprep.subr.mxu0 0.0
        %2594 = vmatpush1.msra.mxu0 0.0
        %2595 = vmatprep.subr.mxu0 0.0
        %2596 = vmatpush1.msra.mxu0 0.0
        %2597 = vmatprep.subr.mxu0 0.0
        %2598 = vmatpush1.msra.mxu0 0.0
        %2599 = vmatprep.subr.mxu0 0.0
        %2600 = vmatpush1.msra.mxu0 0.0
        %2601 = vmatprep.subr.mxu0 0.0
        %2602 = vmatpush1.msra.mxu0 0.0
        %2603 = vmatprep.subr.mxu0 0.0
        %2604 = vmatpush1.msra.mxu0 0.0
        %2605 = vmatprep.subr.mxu0 0.0
        %2606 = vmatpush1.msra.mxu0 0.0
        %2607 = vmatprep.subr.mxu0 0.0
        %2608 = vmatpush1.msra.mxu0 0.0
        %2609 = vmatprep.subr.mxu0 0.0
        %2610 = vmatpush1.msra.mxu0 0.0
        %2611 = vmatprep.subr.mxu0 0.0
        %2612 = vmatpush1.msra.mxu0 0.0
        %2613 = vmatprep.subr.mxu0 0.0
        %v2614 = vand.u32 %v450, 4294901760
        %v2615 = vsub.f32 %v450, %v2614
        %v2616 = vand.u32 %v2615, 4294901760
        %v2617 = vsub.f32 %v2615, %v2616
        %v2618 = vand.u32 %v2617, 4294901760
        %2619 = vmatpush1.msra.mxu0 %v2618
        %2620 = vmatprep.subr.mxu0 0.0
        %v2621 = vand.u32 %v449, 4294901760
        %v2622 = vsub.f32 %v449, %v2621
        %v2623 = vand.u32 %v2622, 4294901760
        %v2624 = vsub.f32 %v2622, %v2623
        %v2625 = vand.u32 %v2624, 4294901760
        %2626 = vmatpush1.msra.mxu0 %v2625
        %2627 = vmatprep.subr.mxu0 0.0
        %v2628 = vand.u32 %v448, 4294901760
        %v2629 = vsub.f32 %v448, %v2628
        %v2630 = vand.u32 %v2629, 4294901760
        %v2631 = vsub.f32 %v2629, %v2630
        %v2632 = vand.u32 %v2631, 4294901760
        %2633 = vmatpush1.msra.mxu0 %v2632
        %2634 = vmatprep.subr.mxu0 0.0
        %v2635 = vand.u32 %v447, 4294901760
        %v2636 = vsub.f32 %v447, %v2635
        %v2637 = vand.u32 %v2636, 4294901760
        %v2638 = vsub.f32 %v2636, %v2637
        %v2639 = vand.u32 %v2638, 4294901760
        %2640 = vmatpush1.msra.mxu0 %v2639
        %2641 = vmatprep.subr.mxu0 0.0
        %2642 = vmatpush2.msra.mxu0 0.0
        %2643 = vmatprep.subr.mxu0 0.0
        %2644 = vmatpush2.msra.mxu0 0.0
        %2645 = vmatprep.subr.mxu0 0.0
        %2646 = vmatpush2.msra.mxu0 0.0
        %2647 = vmatprep.subr.mxu0 0.0
        %2648 = vmatpush2.msra.mxu0 0.0
        %2649 = vmatprep.subr.mxu0 0.0
        %2650 = vmatpush2.msra.mxu0 0.0
        %2651 = vmatprep.subr.mxu0 0.0
        %2652 = vmatpush2.msra.mxu0 0.0
        %2653 = vmatprep.subr.mxu0 0.0
        %2654 = vmatpush2.msra.mxu0 0.0
        %2655 = vmatprep.subr.mxu0 0.0
        %2656 = vmatpush2.msra.mxu0 0.0
        %2657 = vmatprep.subr.mxu0 0.0
        %2658 = vmatpush2.msra.mxu0 0.0
        %2659 = vmatprep.subr.mxu0 0.0
        %2660 = vmatpush2.msra.mxu0 0.0
        %2661 = vmatprep.subr.mxu0 0.0
        %2662 = vmatpush2.msra.mxu0 0.0
        %2663 = vmatprep.subr.mxu0 0.0
        %2664 = vmatpush2.msra.mxu0 0.0
        %2665 = vmatprep.subr.mxu0 0.0
        %2666 = vmatpush2.msra.mxu0 0.0
        %2667 = vmatprep.subr.mxu0 0.0
        %2668 = vmatpush2.msra.mxu0 0.0
        %2669 = vmatprep.subr.mxu0 0.0
        %2670 = vmatpush2.msra.mxu0 0.0
        %2671 = vmatprep.subr.mxu0 0.0
        %2672 = vmatpush2.msra.mxu0 0.0
        %2673 = vmatprep.mubr.f32.mxu0 0.0
        %v2674 = vand.u32 %v2313, 4294901760
        %2675 = vmatmul.mubr.f32.gmra.mxu0 %v2674
        %v2676 = vpop.f32.mrf.mxu0
        %v2677 = vadd.f32 %v2436, %v2676
        %v2678 = vpop.f32.mrf.mxu0
        %2679 = vmatprep.mubr.f32.mxu0 0.0
        %v2680 = vand.u32 %v2316, 4294901760
        %2681 = vmatmul.mubr.f32.gmra.mxu0 %v2680
        %v2682 = vpop.f32.mrf.mxu0
        %v2683 = vadd.f32 %v2446, %v2682
        %v2684 = vpop.f32.mrf.mxu0
        %2685 = vmatprep.mubr.f32.mxu0 0.0
        %v2686 = vand.u32 %v2319, 4294901760
        %2687 = vmatmul.mubr.f32.gmra.mxu0 %v2686
        %v2688 = vpop.f32.mrf.mxu0
        %v2689 = vadd.f32 %v2456, %v2688
        %v2690 = vpop.f32.mrf.mxu0
        %2691 = vmatprep.mubr.f32.mxu0 0.0
        %v2692 = vand.u32 %v2322, 4294901760
        %2693 = vmatmul.mubr.f32.gmra.mxu0 %v2692
        %v2694 = vpop.f32.mrf.mxu0
        %v2695 = vadd.f32 %v2466, %v2694
        %v2696 = vpop.f32.mrf.mxu0
        %2697 = vmatprep.mubr.f32.mxu0 0.0
        %v2698 = vand.u32 %v2325, 4294901760
        %2699 = vmatmul.mubr.f32.gmra.mxu0 %v2698
        %v2700 = vpop.f32.mrf.mxu0
        %v2701 = vadd.f32 %v2476, %v2700
        %v2702 = vpop.f32.mrf.mxu0
        %2703 = vmatprep.mubr.f32.mxu0 0.0
        %v2704 = vand.u32 %v2328, 4294901760
        %2705 = vmatmul.mubr.f32.gmra.mxu0 %v2704
        %v2706 = vpop.f32.mrf.mxu0
        %v2707 = vadd.f32 %v2486, %v2706
        %v2708 = vpop.f32.mrf.mxu0
        %2709 = vmatprep.mubr.f32.mxu0 0.0
        %v2710 = vand.u32 %v2331, 4294901760
        %2711 = vmatmul.mubr.f32.gmra.mxu0 %v2710
        %v2712 = vpop.f32.mrf.mxu0
        %v2713 = vadd.f32 %v2496, %v2712
        %v2714 = vpop.f32.mrf.mxu0
        %2715 = vmatprep.mubr.f32.mxu0 0.0
        %v2716 = vand.u32 %v2334, 4294901760
        %2717 = vmatmul.mubr.f32.gmra.mxu0 %v2716
        %v2718 = vpop.f32.mrf.mxu0
        %v2719 = vadd.f32 %v2506, %v2718
        %v2720 = vpop.f32.mrf.mxu0
        %2721 = vmatprep.mubr.f32.mxu0 0.0
        %v2722 = vand.u32 %v2337, 4294901760
        %2723 = vmatmul.mubr.f32.gmra.mxu0 %v2722
        %v2724 = vpop.f32.mrf.mxu0
        %v2725 = vadd.f32 %v2516, %v2724
        %v2726 = vpop.f32.mrf.mxu0
        %2727 = vmatprep.mubr.f32.mxu0 0.0
        %v2728 = vand.u32 %v2340, 4294901760
        %2729 = vmatmul.mubr.f32.gmra.mxu0 %v2728
        %v2730 = vpop.f32.mrf.mxu0
        %v2731 = vadd.f32 %v2526, %v2730
        %v2732 = vpop.f32.mrf.mxu0
        %2733 = vmatprep.mubr.f32.mxu0 0.0
        %v2734 = vand.u32 %v2343, 4294901760
        %2735 = vmatmul.mubr.f32.gmra.mxu0 %v2734
        %v2736 = vpop.f32.mrf.mxu0
        %v2737 = vadd.f32 %v2536, %v2736
        %v2738 = vpop.f32.mrf.mxu0
        %2739 = vmatprep.mubr.f32.mxu0 0.0
        %v2740 = vand.u32 %v2346, 4294901760
        %2741 = vmatmul.mubr.f32.gmra.mxu0 %v2740
        %v2742 = vpop.f32.mrf.mxu0
        %v2743 = vadd.f32 %v2546, %v2742
        %v2744 = vpop.f32.mrf.mxu0
        %2745 = vmatprep.mubr.f32.mxu0 0.0
        %v2746 = vand.u32 %v2349, 4294901760
        %2747 = vmatmul.mubr.f32.gmra.mxu0 %v2746
        %v2748 = vpop.f32.mrf.mxu0
        %v2749 = vadd.f32 %v2556, %v2748
        %v2750 = vpop.f32.mrf.mxu0
        %2751 = vmatprep.mubr.f32.mxu0 0.0
        %v2752 = vand.u32 %v2352, 4294901760
        %2753 = vmatmul.mubr.f32.gmra.mxu0 %v2752
        %v2754 = vpop.f32.mrf.mxu0
        %v2755 = vadd.f32 %v2566, %v2754
        %v2756 = vpop.f32.mrf.mxu0
        %2757 = vmatprep.mubr.f32.mxu0 0.0
        %v2758 = vand.u32 %v2355, 4294901760
        %2759 = vmatmul.mubr.f32.gmra.mxu0 %v2758
        %v2760 = vpop.f32.mrf.mxu0
        %v2761 = vadd.f32 %v2576, %v2760
        %v2762 = vpop.f32.mrf.mxu0
        %2763 = vmatprep.mubr.f32.mxu0 0.0
        %v2764 = vand.u32 %v2358, 4294901760
        %2765 = vmatmul.mubr.f32.gmra.mxu0 %v2764
        %v2766 = vpop.f32.mrf.mxu0
        %v2767 = vadd.f32 %v2586, %v2766
        %v2768 = vpop.f32.mrf.mxu0
        %2769 = vdwg.mxu0
        %2770 = vmatprep.subr.mxu0 0.0
        %2771 = vmatpush1.msra.mxu0 0.0
        %2772 = vmatprep.subr.mxu0 0.0
        %2773 = vmatpush1.msra.mxu0 0.0
        %2774 = vmatprep.subr.mxu0 0.0
        %2775 = vmatpush1.msra.mxu0 0.0
        %2776 = vmatprep.subr.mxu0 0.0
        %2777 = vmatpush1.msra.mxu0 0.0
        %2778 = vmatprep.subr.mxu0 0.0
        %2779 = vmatpush1.msra.mxu0 0.0
        %2780 = vmatprep.subr.mxu0 0.0
        %2781 = vmatpush1.msra.mxu0 0.0
        %2782 = vmatprep.subr.mxu0 0.0
        %2783 = vmatpush1.msra.mxu0 0.0
        %2784 = vmatprep.subr.mxu0 0.0
        %2785 = vmatpush1.msra.mxu0 0.0
        %2786 = vmatprep.subr.mxu0 0.0
        %2787 = vmatpush1.msra.mxu0 0.0
        %2788 = vmatprep.subr.mxu0 0.0
        %2789 = vmatpush1.msra.mxu0 0.0
        %2790 = vmatprep.subr.mxu0 0.0
        %2791 = vmatpush1.msra.mxu0 0.0
        %2792 = vmatprep.subr.mxu0 0.0
        %2793 = vmatpush1.msra.mxu0 0.0
        %2794 = vmatprep.subr.mxu0 0.0
        %v2795 = vand.u32 %v450, 4294901760
        %v2796 = vsub.f32 %v450, %v2795
        %2797 = vmatpush1.msra.mxu0 %v2796
        %2798 = vmatprep.subr.mxu0 0.0
        %v2799 = vand.u32 %v449, 4294901760
        %v2800 = vsub.f32 %v449, %v2799
        %2801 = vmatpush1.msra.mxu0 %v2800
        %2802 = vmatprep.subr.mxu0 0.0
        %v2803 = vand.u32 %v448, 4294901760
        %v2804 = vsub.f32 %v448, %v2803
        %2805 = vmatpush1.msra.mxu0 %v2804
        %2806 = vmatprep.subr.mxu0 0.0
        %v2807 = vand.u32 %v447, 4294901760
        %v2808 = vsub.f32 %v447, %v2807
        %2809 = vmatpush1.msra.mxu0 %v2808
        %2810 = vmatprep.subr.mxu0 0.0
        %2811 = vmatpush2.msra.mxu0 0.0
        %2812 = vmatprep.subr.mxu0 0.0
        %2813 = vmatpush2.msra.mxu0 0.0
        %2814 = vmatprep.subr.mxu0 0.0
        %2815 = vmatpush2.msra.mxu0 0.0
        %2816 = vmatprep.subr.mxu0 0.0
        %2817 = vmatpush2.msra.mxu0 0.0
        %2818 = vmatprep.subr.mxu0 0.0
        %2819 = vmatpush2.msra.mxu0 0.0
        %2820 = vmatprep.subr.mxu0 0.0
        %2821 = vmatpush2.msra.mxu0 0.0
        %2822 = vmatprep.subr.mxu0 0.0
        %2823 = vmatpush2.msra.mxu0 0.0
        %2824 = vmatprep.subr.mxu0 0.0
        %2825 = vmatpush2.msra.mxu0 0.0
        %2826 = vmatprep.subr.mxu0 0.0
        %2827 = vmatpush2.msra.mxu0 0.0
        %2828 = vmatprep.subr.mxu0 0.0
        %2829 = vmatpush2.msra.mxu0 0.0
        %2830 = vmatprep.subr.mxu0 0.0
        %2831 = vmatpush2.msra.mxu0 0.0
        %2832 = vmatprep.subr.mxu0 0.0
        %2833 = vmatpush2.msra.mxu0 0.0
        %2834 = vmatprep.subr.mxu0 0.0
        %2835 = vmatpush2.msra.mxu0 0.0
        %2836 = vmatprep.subr.mxu0 0.0
        %2837 = vmatpush2.msra.mxu0 0.0
        %2838 = vmatprep.subr.mxu0 0.0
        %2839 = vmatpush2.msra.mxu0 0.0
        %2840 = vmatprep.subr.mxu0 0.0
        %2841 = vmatpush2.msra.mxu0 0.0
        %2842 = vmatprep.mubr.f32.mxu0 0.0
        %v2843 = vand.u32 %v2313, 4294901760
        %v2844 = vsub.f32 %v2313, %v2843
        %2845 = vmatmul.mubr.f32.gmra.mxu0 %v2844
        %v2846 = vpop.f32.mrf.mxu0
        %v2847 = vadd.f32 %v2677, %v2846
        %v2848 = vpop.f32.mrf.mxu0
        %2849 = vmatprep.mubr.f32.mxu0 0.0
        %v2850 = vand.u32 %v2316, 4294901760
        %v2851 = vsub.f32 %v2316, %v2850
        %2852 = vmatmul.mubr.f32.gmra.mxu0 %v2851
        %v2853 = vpop.f32.mrf.mxu0
        %v2854 = vadd.f32 %v2683, %v2853
        %v2855 = vpop.f32.mrf.mxu0
        %2856 = vmatprep.mubr.f32.mxu0 0.0
        %v2857 = vand.u32 %v2319, 4294901760
        %v2858 = vsub.f32 %v2319, %v2857
        %2859 = vmatmul.mubr.f32.gmra.mxu0 %v2858
        %v2860 = vpop.f32.mrf.mxu0
        %v2861 = vadd.f32 %v2689, %v2860
        %v2862 = vpop.f32.mrf.mxu0
        %2863 = vmatprep.mubr.f32.mxu0 0.0
        %v2864 = vand.u32 %v2322, 4294901760
        %v2865 = vsub.f32 %v2322, %v2864
        %2866 = vmatmul.mubr.f32.gmra.mxu0 %v2865
        %v2867 = vpop.f32.mrf.mxu0
        %v2868 = vadd.f32 %v2695, %v2867
        %v2869 = vpop.f32.mrf.mxu0
        %2870 = vmatprep.mubr.f32.mxu0 0.0
        %v2871 = vand.u32 %v2325, 4294901760
        %v2872 = vsub.f32 %v2325, %v2871
        %2873 = vmatmul.mubr.f32.gmra.mxu0 %v2872
        %v2874 = vpop.f32.mrf.mxu0
        %v2875 = vadd.f32 %v2701, %v2874
        %v2876 = vpop.f32.mrf.mxu0
        %2877 = vmatprep.mubr.f32.mxu0 0.0
        %v2878 = vand.u32 %v2328, 4294901760
        %v2879 = vsub.f32 %v2328, %v2878
        %2880 = vmatmul.mubr.f32.gmra.mxu0 %v2879
        %v2881 = vpop.f32.mrf.mxu0
        %v2882 = vadd.f32 %v2707, %v2881
        %v2883 = vpop.f32.mrf.mxu0
        %2884 = vmatprep.mubr.f32.mxu0 0.0
        %v2885 = vand.u32 %v2331, 4294901760
        %v2886 = vsub.f32 %v2331, %v2885
        %2887 = vmatmul.mubr.f32.gmra.mxu0 %v2886
        %v2888 = vpop.f32.mrf.mxu0
        %v2889 = vadd.f32 %v2713, %v2888
        %v2890 = vpop.f32.mrf.mxu0
        %2891 = vmatprep.mubr.f32.mxu0 0.0
        %v2892 = vand.u32 %v2334, 4294901760
        %v2893 = vsub.f32 %v2334, %v2892
        %2894 = vmatmul.mubr.f32.gmra.mxu0 %v2893
        %v2895 = vpop.f32.mrf.mxu0
        %v2896 = vadd.f32 %v2719, %v2895
        %v2897 = vpop.f32.mrf.mxu0
        %2898 = vmatprep.mubr.f32.mxu0 0.0
        %v2899 = vand.u32 %v2337, 4294901760
        %v2900 = vsub.f32 %v2337, %v2899
        %2901 = vmatmul.mubr.f32.gmra.mxu0 %v2900
        %v2902 = vpop.f32.mrf.mxu0
        %v2903 = vadd.f32 %v2725, %v2902
        %v2904 = vpop.f32.mrf.mxu0
        %2905 = vmatprep.mubr.f32.mxu0 0.0
        %v2906 = vand.u32 %v2340, 4294901760
        %v2907 = vsub.f32 %v2340, %v2906
        %2908 = vmatmul.mubr.f32.gmra.mxu0 %v2907
        %v2909 = vpop.f32.mrf.mxu0
        %v2910 = vadd.f32 %v2731, %v2909
        %v2911 = vpop.f32.mrf.mxu0
        %2912 = vmatprep.mubr.f32.mxu0 0.0
        %v2913 = vand.u32 %v2343, 4294901760
        %v2914 = vsub.f32 %v2343, %v2913
        %2915 = vmatmul.mubr.f32.gmra.mxu0 %v2914
        %v2916 = vpop.f32.mrf.mxu0
        %v2917 = vadd.f32 %v2737, %v2916
        %v2918 = vpop.f32.mrf.mxu0
        %2919 = vmatprep.mubr.f32.mxu0 0.0
        %v2920 = vand.u32 %v2346, 4294901760
        %v2921 = vsub.f32 %v2346, %v2920
        %2922 = vmatmul.mubr.f32.gmra.mxu0 %v2921
        %v2923 = vpop.f32.mrf.mxu0
        %v2924 = vadd.f32 %v2743, %v2923
        %v2925 = vpop.f32.mrf.mxu0
        %2926 = vmatprep.mubr.f32.mxu0 0.0
        %v2927 = vand.u32 %v2349, 4294901760
        %v2928 = vsub.f32 %v2349, %v2927
        %2929 = vmatmul.mubr.f32.gmra.mxu0 %v2928
        %v2930 = vpop.f32.mrf.mxu0
        %v2931 = vadd.f32 %v2749, %v2930
        %v2932 = vpop.f32.mrf.mxu0
        %2933 = vmatprep.mubr.f32.mxu0 0.0
        %v2934 = vand.u32 %v2352, 4294901760
        %v2935 = vsub.f32 %v2352, %v2934
        %2936 = vmatmul.mubr.f32.gmra.mxu0 %v2935
        %v2937 = vpop.f32.mrf.mxu0
        %v2938 = vadd.f32 %v2755, %v2937
        %v2939 = vpop.f32.mrf.mxu0
        %2940 = vmatprep.mubr.f32.mxu0 0.0
        %v2941 = vand.u32 %v2355, 4294901760
        %v2942 = vsub.f32 %v2355, %v2941
        %2943 = vmatmul.mubr.f32.gmra.mxu0 %v2942
        %v2944 = vpop.f32.mrf.mxu0
        %v2945 = vadd.f32 %v2761, %v2944
        %v2946 = vpop.f32.mrf.mxu0
        %2947 = vmatprep.mubr.f32.mxu0 0.0
        %v2948 = vand.u32 %v2358, 4294901760
        %v2949 = vsub.f32 %v2358, %v2948
        %2950 = vmatmul.mubr.f32.gmra.mxu0 %v2949
        %v2951 = vpop.f32.mrf.mxu0
        %v2952 = vadd.f32 %v2767, %v2951
        %v2953 = vpop.f32.mrf.mxu0
        %2954 = vdwg.mxu0
        %2955 = vmatprep.subr.mxu0 0.0
        %2956 = vmatpush1.msra.mxu0 0.0
        %2957 = vmatprep.subr.mxu0 0.0
        %2958 = vmatpush1.msra.mxu0 0.0
        %2959 = vmatprep.subr.mxu0 0.0
        %2960 = vmatpush1.msra.mxu0 0.0
        %2961 = vmatprep.subr.mxu0 0.0
        %2962 = vmatpush1.msra.mxu0 0.0
        %2963 = vmatprep.subr.mxu0 0.0
        %2964 = vmatpush1.msra.mxu0 0.0
        %2965 = vmatprep.subr.mxu0 0.0
        %2966 = vmatpush1.msra.mxu0 0.0
        %2967 = vmatprep.subr.mxu0 0.0
        %2968 = vmatpush1.msra.mxu0 0.0
        %2969 = vmatprep.subr.mxu0 0.0
        %2970 = vmatpush1.msra.mxu0 0.0
        %2971 = vmatprep.subr.mxu0 0.0
        %2972 = vmatpush1.msra.mxu0 0.0
        %2973 = vmatprep.subr.mxu0 0.0
        %2974 = vmatpush1.msra.mxu0 0.0
        %2975 = vmatprep.subr.mxu0 0.0
        %2976 = vmatpush1.msra.mxu0 0.0
        %2977 = vmatprep.subr.mxu0 0.0
        %2978 = vmatpush1.msra.mxu0 0.0
        %2979 = vmatprep.subr.mxu0 0.0
        %v2980 = vand.u32 %v450, 4294901760
        %2981 = vmatpush1.msra.mxu0 %v2980
        %2982 = vmatprep.subr.mxu0 0.0
        %v2983 = vand.u32 %v449, 4294901760
        %2984 = vmatpush1.msra.mxu0 %v2983
        %2985 = vmatprep.subr.mxu0 0.0
        %v2986 = vand.u32 %v448, 4294901760
        %2987 = vmatpush1.msra.mxu0 %v2986
        %2988 = vmatprep.subr.mxu0 0.0
        %v2989 = vand.u32 %v447, 4294901760
        %2990 = vmatpush1.msra.mxu0 %v2989
        %2991 = vmatprep.subr.mxu0 0.0
        %2992 = vmatpush2.msra.mxu0 0.0
        %2993 = vmatprep.subr.mxu0 0.0
        %2994 = vmatpush2.msra.mxu0 0.0
        %2995 = vmatprep.subr.mxu0 0.0
        %2996 = vmatpush2.msra.mxu0 0.0
        %2997 = vmatprep.subr.mxu0 0.0
        %2998 = vmatpush2.msra.mxu0 0.0
        %2999 = vmatprep.subr.mxu0 0.0
        %3000 = vmatpush2.msra.mxu0 0.0
        %3001 = vmatprep.subr.mxu0 0.0
        %3002 = vmatpush2.msra.mxu0 0.0
        %3003 = vmatprep.subr.mxu0 0.0
        %3004 = vmatpush2.msra.mxu0 0.0
        %3005 = vmatprep.subr.mxu0 0.0
        %3006 = vmatpush2.msra.mxu0 0.0
        %3007 = vmatprep.subr.mxu0 0.0
        %3008 = vmatpush2.msra.mxu0 0.0
        %3009 = vmatprep.subr.mxu0 0.0
        %3010 = vmatpush2.msra.mxu0 0.0
        %3011 = vmatprep.subr.mxu0 0.0
        %3012 = vmatpush2.msra.mxu0 0.0
        %3013 = vmatprep.subr.mxu0 0.0
        %3014 = vmatpush2.msra.mxu0 0.0
        %3015 = vmatprep.subr.mxu0 0.0
        %3016 = vmatpush2.msra.mxu0 0.0
        %3017 = vmatprep.subr.mxu0 0.0
        %3018 = vmatpush2.msra.mxu0 0.0
        %3019 = vmatprep.subr.mxu0 0.0
        %3020 = vmatpush2.msra.mxu0 0.0
        %3021 = vmatprep.subr.mxu0 0.0
        %3022 = vmatpush2.msra.mxu0 0.0
        %3023 = vmatprep.mubr.f32.mxu0 0.0
        %v3024 = vand.u32 %v2313, 4294901760
        %v3025 = vsub.f32 %v2313, %v3024
        %v3026 = vand.u32 %v3025, 4294901760
        %3027 = vmatmul.mubr.f32.gmra.mxu0 %v3026
        %v3028 = vpop.f32.mrf.mxu0
        %v3029 = vadd.f32 %v2847, %v3028
        %v3030 = vpop.f32.mrf.mxu0
        %3031 = vmatprep.mubr.f32.mxu0 0.0
        %v3032 = vand.u32 %v2316, 4294901760
        %v3033 = vsub.f32 %v2316, %v3032
        %v3034 = vand.u32 %v3033, 4294901760
        %3035 = vmatmul.mubr.f32.gmra.mxu0 %v3034
        %v3036 = vpop.f32.mrf.mxu0
        %v3037 = vadd.f32 %v2854, %v3036
        %v3038 = vpop.f32.mrf.mxu0
        %3039 = vmatprep.mubr.f32.mxu0 0.0
        %v3040 = vand.u32 %v2319, 4294901760
        %v3041 = vsub.f32 %v2319, %v3040
        %v3042 = vand.u32 %v3041, 4294901760
        %3043 = vmatmul.mubr.f32.gmra.mxu0 %v3042
        %v3044 = vpop.f32.mrf.mxu0
        %v3045 = vadd.f32 %v2861, %v3044
        %v3046 = vpop.f32.mrf.mxu0
        %3047 = vmatprep.mubr.f32.mxu0 0.0
        %v3048 = vand.u32 %v2322, 4294901760
        %v3049 = vsub.f32 %v2322, %v3048
        %v3050 = vand.u32 %v3049, 4294901760
        %3051 = vmatmul.mubr.f32.gmra.mxu0 %v3050
        %v3052 = vpop.f32.mrf.mxu0
        %v3053 = vadd.f32 %v2868, %v3052
        %v3054 = vpop.f32.mrf.mxu0
        %3055 = vmatprep.mubr.f32.mxu0 0.0
        %v3056 = vand.u32 %v2325, 4294901760
        %v3057 = vsub.f32 %v2325, %v3056
        %v3058 = vand.u32 %v3057, 4294901760
        %3059 = vmatmul.mubr.f32.gmra.mxu0 %v3058
        %v3060 = vpop.f32.mrf.mxu0
        %v3061 = vadd.f32 %v2875, %v3060
        %v3062 = vpop.f32.mrf.mxu0
        %3063 = vmatprep.mubr.f32.mxu0 0.0
        %v3064 = vand.u32 %v2328, 4294901760
        %v3065 = vsub.f32 %v2328, %v3064
        %v3066 = vand.u32 %v3065, 4294901760
        %3067 = vmatmul.mubr.f32.gmra.mxu0 %v3066
        %v3068 = vpop.f32.mrf.mxu0
        %v3069 = vadd.f32 %v2882, %v3068
        %v3070 = vpop.f32.mrf.mxu0
        %3071 = vmatprep.mubr.f32.mxu0 0.0
        %v3072 = vand.u32 %v2331, 4294901760
        %v3073 = vsub.f32 %v2331, %v3072
        %v3074 = vand.u32 %v3073, 4294901760
        %3075 = vmatmul.mubr.f32.gmra.mxu0 %v3074
        %v3076 = vpop.f32.mrf.mxu0
        %v3077 = vadd.f32 %v2889, %v3076
        %v3078 = vpop.f32.mrf.mxu0
        %3079 = vmatprep.mubr.f32.mxu0 0.0
        %v3080 = vand.u32 %v2334, 4294901760
        %v3081 = vsub.f32 %v2334, %v3080
        %v3082 = vand.u32 %v3081, 4294901760
        %3083 = vmatmul.mubr.f32.gmra.mxu0 %v3082
        %v3084 = vpop.f32.mrf.mxu0
        %v3085 = vadd.f32 %v2896, %v3084
        %v3086 = vpop.f32.mrf.mxu0
        %3087 = vmatprep.mubr.f32.mxu0 0.0
        %v3088 = vand.u32 %v2337, 4294901760
        %v3089 = vsub.f32 %v2337, %v3088
        %v3090 = vand.u32 %v3089, 4294901760
        %3091 = vmatmul.mubr.f32.gmra.mxu0 %v3090
        %v3092 = vpop.f32.mrf.mxu0
        %v3093 = vadd.f32 %v2903, %v3092
        %v3094 = vpop.f32.mrf.mxu0
        %3095 = vmatprep.mubr.f32.mxu0 0.0
        %v3096 = vand.u32 %v2340, 4294901760
        %v3097 = vsub.f32 %v2340, %v3096
        %v3098 = vand.u32 %v3097, 4294901760
        %3099 = vmatmul.mubr.f32.gmra.mxu0 %v3098
        %v3100 = vpop.f32.mrf.mxu0
        %v3101 = vadd.f32 %v2910, %v3100
        %v3102 = vpop.f32.mrf.mxu0
        %3103 = vmatprep.mubr.f32.mxu0 0.0
        %v3104 = vand.u32 %v2343, 4294901760
        %v3105 = vsub.f32 %v2343, %v3104
        %v3106 = vand.u32 %v3105, 4294901760
        %3107 = vmatmul.mubr.f32.gmra.mxu0 %v3106
        %v3108 = vpop.f32.mrf.mxu0
        %v3109 = vadd.f32 %v2917, %v3108
        %v3110 = vpop.f32.mrf.mxu0
        %3111 = vmatprep.mubr.f32.mxu0 0.0
        %v3112 = vand.u32 %v2346, 4294901760
        %v3113 = vsub.f32 %v2346, %v3112
        %v3114 = vand.u32 %v3113, 4294901760
        %3115 = vmatmul.mubr.f32.gmra.mxu0 %v3114
        %v3116 = vpop.f32.mrf.mxu0
        %v3117 = vadd.f32 %v2924, %v3116
        %v3118 = vpop.f32.mrf.mxu0
        %3119 = vmatprep.mubr.f32.mxu0 0.0
        %v3120 = vand.u32 %v2349, 4294901760
        %v3121 = vsub.f32 %v2349, %v3120
        %v3122 = vand.u32 %v3121, 4294901760
        %3123 = vmatmul.mubr.f32.gmra.mxu0 %v3122
        %v3124 = vpop.f32.mrf.mxu0
        %v3125 = vadd.f32 %v2931, %v3124
        %v3126 = vpop.f32.mrf.mxu0
        %3127 = vmatprep.mubr.f32.mxu0 0.0
        %v3128 = vand.u32 %v2352, 4294901760
        %v3129 = vsub.f32 %v2352, %v3128
        %v3130 = vand.u32 %v3129, 4294901760
        %3131 = vmatmul.mubr.f32.gmra.mxu0 %v3130
        %v3132 = vpop.f32.mrf.mxu0
        %v3133 = vadd.f32 %v2938, %v3132
        %v3134 = vpop.f32.mrf.mxu0
        %3135 = vmatprep.mubr.f32.mxu0 0.0
        %v3136 = vand.u32 %v2355, 4294901760
        %v3137 = vsub.f32 %v2355, %v3136
        %v3138 = vand.u32 %v3137, 4294901760
        %3139 = vmatmul.mubr.f32.gmra.mxu0 %v3138
        %v3140 = vpop.f32.mrf.mxu0
        %v3141 = vadd.f32 %v2945, %v3140
        %v3142 = vpop.f32.mrf.mxu0
        %3143 = vmatprep.mubr.f32.mxu0 0.0
        %v3144 = vand.u32 %v2358, 4294901760
        %v3145 = vsub.f32 %v2358, %v3144
        %v3146 = vand.u32 %v3145, 4294901760
        %3147 = vmatmul.mubr.f32.gmra.mxu0 %v3146
        %v3148 = vpop.f32.mrf.mxu0
        %v3149 = vadd.f32 %v2952, %v3148
        %v3150 = vpop.f32.mrf.mxu0
        %3151 = vdwg.mxu0
        %3152 = vmatprep.subr.mxu0 0.0
        %3153 = vmatpush1.msra.mxu0 0.0
        %3154 = vmatprep.subr.mxu0 0.0
        %3155 = vmatpush1.msra.mxu0 0.0
        %3156 = vmatprep.subr.mxu0 0.0
        %3157 = vmatpush1.msra.mxu0 0.0
        %3158 = vmatprep.subr.mxu0 0.0
        %3159 = vmatpush1.msra.mxu0 0.0
        %3160 = vmatprep.subr.mxu0 0.0
        %3161 = vmatpush1.msra.mxu0 0.0
        %3162 = vmatprep.subr.mxu0 0.0
        %3163 = vmatpush1.msra.mxu0 0.0
        %3164 = vmatprep.subr.mxu0 0.0
        %3165 = vmatpush1.msra.mxu0 0.0
        %3166 = vmatprep.subr.mxu0 0.0
        %3167 = vmatpush1.msra.mxu0 0.0
        %3168 = vmatprep.subr.mxu0 0.0
        %3169 = vmatpush1.msra.mxu0 0.0
        %3170 = vmatprep.subr.mxu0 0.0
        %3171 = vmatpush1.msra.mxu0 0.0
        %3172 = vmatprep.subr.mxu0 0.0
        %3173 = vmatpush1.msra.mxu0 0.0
        %3174 = vmatprep.subr.mxu0 0.0
        %3175 = vmatpush1.msra.mxu0 0.0
        %3176 = vmatprep.subr.mxu0 0.0
        %v3177 = vand.u32 %v450, 4294901760
        %v3178 = vsub.f32 %v450, %v3177
        %v3179 = vand.u32 %v3178, 4294901760
        %3180 = vmatpush1.msra.mxu0 %v3179
        %3181 = vmatprep.subr.mxu0 0.0
        %v3182 = vand.u32 %v449, 4294901760
        %v3183 = vsub.f32 %v449, %v3182
        %v3184 = vand.u32 %v3183, 4294901760
        %3185 = vmatpush1.msra.mxu0 %v3184
        %3186 = vmatprep.subr.mxu0 0.0
        %v3187 = vand.u32 %v448, 4294901760
        %v3188 = vsub.f32 %v448, %v3187
        %v3189 = vand.u32 %v3188, 4294901760
        %3190 = vmatpush1.msra.mxu0 %v3189
        %3191 = vmatprep.subr.mxu0 0.0
        %v3192 = vand.u32 %v447, 4294901760
        %v3193 = vsub.f32 %v447, %v3192
        %v3194 = vand.u32 %v3193, 4294901760
        %3195 = vmatpush1.msra.mxu0 %v3194
        %3196 = vmatprep.subr.mxu0 0.0
        %3197 = vmatpush2.msra.mxu0 0.0
        %3198 = vmatprep.subr.mxu0 0.0
        %3199 = vmatpush2.msra.mxu0 0.0
        %3200 = vmatprep.subr.mxu0 0.0
        %3201 = vmatpush2.msra.mxu0 0.0
        %3202 = vmatprep.subr.mxu0 0.0
        %3203 = vmatpush2.msra.mxu0 0.0
        %3204 = vmatprep.subr.mxu0 0.0
        %3205 = vmatpush2.msra.mxu0 0.0
        %3206 = vmatprep.subr.mxu0 0.0
        %3207 = vmatpush2.msra.mxu0 0.0
        %3208 = vmatprep.subr.mxu0 0.0
        %3209 = vmatpush2.msra.mxu0 0.0
        %3210 = vmatprep.subr.mxu0 0.0
        %3211 = vmatpush2.msra.mxu0 0.0
        %3212 = vmatprep.subr.mxu0 0.0
        %3213 = vmatpush2.msra.mxu0 0.0
        %3214 = vmatprep.subr.mxu0 0.0
        %3215 = vmatpush2.msra.mxu0 0.0
        %3216 = vmatprep.subr.mxu0 0.0
        %3217 = vmatpush2.msra.mxu0 0.0
        %3218 = vmatprep.subr.mxu0 0.0
        %3219 = vmatpush2.msra.mxu0 0.0
        %3220 = vmatprep.subr.mxu0 0.0
        %3221 = vmatpush2.msra.mxu0 0.0
        %3222 = vmatprep.subr.mxu0 0.0
        %3223 = vmatpush2.msra.mxu0 0.0
        %3224 = vmatprep.subr.mxu0 0.0
        %3225 = vmatpush2.msra.mxu0 0.0
        %3226 = vmatprep.subr.mxu0 0.0
        %3227 = vmatpush2.msra.mxu0 0.0
        %3228 = vmatprep.mubr.f32.mxu0 0.0
        %v3229 = vand.u32 %v2313, 4294901760
        %3230 = vmatmul.mubr.f32.gmra.mxu0 %v3229
        %v3231 = vpop.f32.mrf.mxu0
        %v3232 = vadd.f32 %v3029, %v3231
        %v3233 = vpop.f32.mrf.mxu0
        %3234 = vmatprep.mubr.f32.mxu0 0.0
        %v3235 = vand.u32 %v2316, 4294901760
        %3236 = vmatmul.mubr.f32.gmra.mxu0 %v3235
        %v3237 = vpop.f32.mrf.mxu0
        %v3238 = vadd.f32 %v3037, %v3237
        %v3239 = vpop.f32.mrf.mxu0
        %3240 = vmatprep.mubr.f32.mxu0 0.0
        %v3241 = vand.u32 %v2319, 4294901760
        %3242 = vmatmul.mubr.f32.gmra.mxu0 %v3241
        %v3243 = vpop.f32.mrf.mxu0
        %v3244 = vadd.f32 %v3045, %v3243
        %v3245 = vpop.f32.mrf.mxu0
        %3246 = vmatprep.mubr.f32.mxu0 0.0
        %v3247 = vand.u32 %v2322, 4294901760
        %3248 = vmatmul.mubr.f32.gmra.mxu0 %v3247
        %v3249 = vpop.f32.mrf.mxu0
        %v3250 = vadd.f32 %v3053, %v3249
        %v3251 = vpop.f32.mrf.mxu0
        %3252 = vmatprep.mubr.f32.mxu0 0.0
        %v3253 = vand.u32 %v2325, 4294901760
        %3254 = vmatmul.mubr.f32.gmra.mxu0 %v3253
        %v3255 = vpop.f32.mrf.mxu0
        %v3256 = vadd.f32 %v3061, %v3255
        %v3257 = vpop.f32.mrf.mxu0
        %3258 = vmatprep.mubr.f32.mxu0 0.0
        %v3259 = vand.u32 %v2328, 4294901760
        %3260 = vmatmul.mubr.f32.gmra.mxu0 %v3259
        %v3261 = vpop.f32.mrf.mxu0
        %v3262 = vadd.f32 %v3069, %v3261
        %v3263 = vpop.f32.mrf.mxu0
        %3264 = vmatprep.mubr.f32.mxu0 0.0
        %v3265 = vand.u32 %v2331, 4294901760
        %3266 = vmatmul.mubr.f32.gmra.mxu0 %v3265
        %v3267 = vpop.f32.mrf.mxu0
        %v3268 = vadd.f32 %v3077, %v3267
        %v3269 = vpop.f32.mrf.mxu0
        %3270 = vmatprep.mubr.f32.mxu0 0.0
        %v3271 = vand.u32 %v2334, 4294901760
        %3272 = vmatmul.mubr.f32.gmra.mxu0 %v3271
        %v3273 = vpop.f32.mrf.mxu0
        %v3274 = vadd.f32 %v3085, %v3273
        %v3275 = vpop.f32.mrf.mxu0
        %3276 = vmatprep.mubr.f32.mxu0 0.0
        %v3277 = vand.u32 %v2337, 4294901760
        %3278 = vmatmul.mubr.f32.gmra.mxu0 %v3277
        %v3279 = vpop.f32.mrf.mxu0
        %v3280 = vadd.f32 %v3093, %v3279
        %v3281 = vpop.f32.mrf.mxu0
        %3282 = vmatprep.mubr.f32.mxu0 0.0
        %v3283 = vand.u32 %v2340, 4294901760
        %3284 = vmatmul.mubr.f32.gmra.mxu0 %v3283
        %v3285 = vpop.f32.mrf.mxu0
        %v3286 = vadd.f32 %v3101, %v3285
        %v3287 = vpop.f32.mrf.mxu0
        %3288 = vmatprep.mubr.f32.mxu0 0.0
        %v3289 = vand.u32 %v2343, 4294901760
        %3290 = vmatmul.mubr.f32.gmra.mxu0 %v3289
        %v3291 = vpop.f32.mrf.mxu0
        %v3292 = vadd.f32 %v3109, %v3291
        %v3293 = vpop.f32.mrf.mxu0
        %3294 = vmatprep.mubr.f32.mxu0 0.0
        %v3295 = vand.u32 %v2346, 4294901760
        %3296 = vmatmul.mubr.f32.gmra.mxu0 %v3295
        %v3297 = vpop.f32.mrf.mxu0
        %v3298 = vadd.f32 %v3117, %v3297
        %v3299 = vpop.f32.mrf.mxu0
        %3300 = vmatprep.mubr.f32.mxu0 0.0
        %v3301 = vand.u32 %v2349, 4294901760
        %3302 = vmatmul.mubr.f32.gmra.mxu0 %v3301
        %v3303 = vpop.f32.mrf.mxu0
        %v3304 = vadd.f32 %v3125, %v3303
        %v3305 = vpop.f32.mrf.mxu0
        %3306 = vmatprep.mubr.f32.mxu0 0.0
        %v3307 = vand.u32 %v2352, 4294901760
        %3308 = vmatmul.mubr.f32.gmra.mxu0 %v3307
        %v3309 = vpop.f32.mrf.mxu0
        %v3310 = vadd.f32 %v3133, %v3309
        %v3311 = vpop.f32.mrf.mxu0
        %3312 = vmatprep.mubr.f32.mxu0 0.0
        %v3313 = vand.u32 %v2355, 4294901760
        %3314 = vmatmul.mubr.f32.gmra.mxu0 %v3313
        %v3315 = vpop.f32.mrf.mxu0
        %v3316 = vadd.f32 %v3141, %v3315
        %v3317 = vpop.f32.mrf.mxu0
        %3318 = vmatprep.mubr.f32.mxu0 0.0
        %v3319 = vand.u32 %v2358, 4294901760
        %3320 = vmatmul.mubr.f32.gmra.mxu0 %v3319
        %v3321 = vpop.f32.mrf.mxu0
        %v3322 = vadd.f32 %v3149, %v3321
        %v3323 = vpop.f32.mrf.mxu0
        %3324 = vdwg.mxu0
        %3325 = vmatprep.subr.mxu0 0.0
        %3326 = vmatpush1.msra.mxu0 0.0
        %3327 = vmatprep.subr.mxu0 0.0
        %3328 = vmatpush1.msra.mxu0 0.0
        %3329 = vmatprep.subr.mxu0 0.0
        %3330 = vmatpush1.msra.mxu0 0.0
        %3331 = vmatprep.subr.mxu0 0.0
        %3332 = vmatpush1.msra.mxu0 0.0
        %3333 = vmatprep.subr.mxu0 0.0
        %3334 = vmatpush1.msra.mxu0 0.0
        %3335 = vmatprep.subr.mxu0 0.0
        %3336 = vmatpush1.msra.mxu0 0.0
        %3337 = vmatprep.subr.mxu0 0.0
        %3338 = vmatpush1.msra.mxu0 0.0
        %3339 = vmatprep.subr.mxu0 0.0
        %3340 = vmatpush1.msra.mxu0 0.0
        %3341 = vmatprep.subr.mxu0 0.0
        %3342 = vmatpush1.msra.mxu0 0.0
        %3343 = vmatprep.subr.mxu0 0.0
        %3344 = vmatpush1.msra.mxu0 0.0
        %3345 = vmatprep.subr.mxu0 0.0
        %3346 = vmatpush1.msra.mxu0 0.0
        %3347 = vmatprep.subr.mxu0 0.0
        %3348 = vmatpush1.msra.mxu0 0.0
        %3349 = vmatprep.subr.mxu0 0.0
        %v3350 = vand.u32 %v450, 4294901760
        %3351 = vmatpush1.msra.mxu0 %v3350
        %3352 = vmatprep.subr.mxu0 0.0
        %v3353 = vand.u32 %v449, 4294901760
        %3354 = vmatpush1.msra.mxu0 %v3353
        %3355 = vmatprep.subr.mxu0 0.0
        %v3356 = vand.u32 %v448, 4294901760
        %3357 = vmatpush1.msra.mxu0 %v3356
        %3358 = vmatprep.subr.mxu0 0.0
        %v3359 = vand.u32 %v447, 4294901760
        %3360 = vmatpush1.msra.mxu0 %v3359
        %3361 = vmatprep.subr.mxu0 0.0
        %3362 = vmatpush2.msra.mxu0 0.0
        %3363 = vmatprep.subr.mxu0 0.0
        %3364 = vmatpush2.msra.mxu0 0.0
        %3365 = vmatprep.subr.mxu0 0.0
        %3366 = vmatpush2.msra.mxu0 0.0
        %3367 = vmatprep.subr.mxu0 0.0
        %3368 = vmatpush2.msra.mxu0 0.0
        %3369 = vmatprep.subr.mxu0 0.0
        %3370 = vmatpush2.msra.mxu0 0.0
        %3371 = vmatprep.subr.mxu0 0.0
        %3372 = vmatpush2.msra.mxu0 0.0
        %3373 = vmatprep.subr.mxu0 0.0
        %3374 = vmatpush2.msra.mxu0 0.0
        %3375 = vmatprep.subr.mxu0 0.0
        %3376 = vmatpush2.msra.mxu0 0.0
        %3377 = vmatprep.subr.mxu0 0.0
        %3378 = vmatpush2.msra.mxu0 0.0
        %3379 = vmatprep.subr.mxu0 0.0
        %3380 = vmatpush2.msra.mxu0 0.0
        %3381 = vmatprep.subr.mxu0 0.0
        %3382 = vmatpush2.msra.mxu0 0.0
        %3383 = vmatprep.subr.mxu0 0.0
        %3384 = vmatpush2.msra.mxu0 0.0
        %3385 = vmatprep.subr.mxu0 0.0
        %3386 = vmatpush2.msra.mxu0 0.0
        %3387 = vmatprep.subr.mxu0 0.0
        %3388 = vmatpush2.msra.mxu0 0.0
        %3389 = vmatprep.subr.mxu0 0.0
        %3390 = vmatpush2.msra.mxu0 0.0
        %3391 = vmatprep.subr.mxu0 0.0
        %3392 = vmatpush2.msra.mxu0 0.0
        %3393 = vmatprep.mubr.f32.mxu0 0.0
        %v3394 = vand.u32 %v2313, 4294901760
        %3395 = vmatmul.mubr.f32.gmra.mxu0 %v3394
        %v3396 = vpop.f32.mrf.mxu0
        %v3397 = vadd.f32 %v3232, %v3396
        %v3398 = vpop.f32.mrf.mxu0
        %3399 = vmatprep.mubr.f32.mxu0 0.0
        %v3400 = vand.u32 %v2316, 4294901760
        %3401 = vmatmul.mubr.f32.gmra.mxu0 %v3400
        %v3402 = vpop.f32.mrf.mxu0
        %v3403 = vadd.f32 %v3238, %v3402
        %v3404 = vpop.f32.mrf.mxu0
        %3405 = vmatprep.mubr.f32.mxu0 0.0
        %v3406 = vand.u32 %v2319, 4294901760
        %3407 = vmatmul.mubr.f32.gmra.mxu0 %v3406
        %v3408 = vpop.f32.mrf.mxu0
        %v3409 = vadd.f32 %v3244, %v3408
        %v3410 = vpop.f32.mrf.mxu0
        %3411 = vmatprep.mubr.f32.mxu0 0.0
        %v3412 = vand.u32 %v2322, 4294901760
        %3413 = vmatmul.mubr.f32.gmra.mxu0 %v3412
        %v3414 = vpop.f32.mrf.mxu0
        %v3415 = vadd.f32 %v3250, %v3414
        %v3416 = vpop.f32.mrf.mxu0
        %3417 = vmatprep.mubr.f32.mxu0 0.0
        %v3418 = vand.u32 %v2325, 4294901760
        %3419 = vmatmul.mubr.f32.gmra.mxu0 %v3418
        %v3420 = vpop.f32.mrf.mxu0
        %v3421 = vadd.f32 %v3256, %v3420
        %v3422 = vpop.f32.mrf.mxu0
        %3423 = vmatprep.mubr.f32.mxu0 0.0
        %v3424 = vand.u32 %v2328, 4294901760
        %3425 = vmatmul.mubr.f32.gmra.mxu0 %v3424
        %v3426 = vpop.f32.mrf.mxu0
        %v3427 = vadd.f32 %v3262, %v3426
        %v3428 = vpop.f32.mrf.mxu0
        %3429 = vmatprep.mubr.f32.mxu0 0.0
        %v3430 = vand.u32 %v2331, 4294901760
        %3431 = vmatmul.mubr.f32.gmra.mxu0 %v3430
        %v3432 = vpop.f32.mrf.mxu0
        %v3433 = vadd.f32 %v3268, %v3432
        %v3434 = vpop.f32.mrf.mxu0
        %3435 = vmatprep.mubr.f32.mxu0 0.0
        %v3436 = vand.u32 %v2334, 4294901760
        %3437 = vmatmul.mubr.f32.gmra.mxu0 %v3436
        %v3438 = vpop.f32.mrf.mxu0
        %v3439 = vadd.f32 %v3274, %v3438
        %v3440 = vpop.f32.mrf.mxu0
        %3441 = vmatprep.mubr.f32.mxu0 0.0
        %v3442 = vand.u32 %v2337, 4294901760
        %3443 = vmatmul.mubr.f32.gmra.mxu0 %v3442
        %v3444 = vpop.f32.mrf.mxu0
        %v3445 = vadd.f32 %v3280, %v3444
        %v3446 = vpop.f32.mrf.mxu0
        %3447 = vmatprep.mubr.f32.mxu0 0.0
        %v3448 = vand.u32 %v2340, 4294901760
        %3449 = vmatmul.mubr.f32.gmra.mxu0 %v3448
        %v3450 = vpop.f32.mrf.mxu0
        %v3451 = vadd.f32 %v3286, %v3450
        %v3452 = vpop.f32.mrf.mxu0
        %3453 = vmatprep.mubr.f32.mxu0 0.0
        %v3454 = vand.u32 %v2343, 4294901760
        %3455 = vmatmul.mubr.f32.gmra.mxu0 %v3454
        %v3456 = vpop.f32.mrf.mxu0
        %v3457 = vadd.f32 %v3292, %v3456
        %v3458 = vpop.f32.mrf.mxu0
        %3459 = vmatprep.mubr.f32.mxu0 0.0
        %v3460 = vand.u32 %v2346, 4294901760
        %3461 = vmatmul.mubr.f32.gmra.mxu0 %v3460
        %v3462 = vpop.f32.mrf.mxu0
        %v3463 = vadd.f32 %v3298, %v3462
        %v3464 = vpop.f32.mrf.mxu0
        %3465 = vmatprep.mubr.f32.mxu0 0.0
        %v3466 = vand.u32 %v2349, 4294901760
        %3467 = vmatmul.mubr.f32.gmra.mxu0 %v3466
        %v3468 = vpop.f32.mrf.mxu0
        %v3469 = vadd.f32 %v3304, %v3468
        %v3470 = vpop.f32.mrf.mxu0
        %3471 = vmatprep.mubr.f32.mxu0 0.0
        %v3472 = vand.u32 %v2352, 4294901760
        %3473 = vmatmul.mubr.f32.gmra.mxu0 %v3472
        %v3474 = vpop.f32.mrf.mxu0
        %v3475 = vadd.f32 %v3310, %v3474
        %v3476 = vpop.f32.mrf.mxu0
        %3477 = vmatprep.mubr.f32.mxu0 0.0
        %v3478 = vand.u32 %v2355, 4294901760
        %3479 = vmatmul.mubr.f32.gmra.mxu0 %v3478
        %v3480 = vpop.f32.mrf.mxu0
        %v3481 = vadd.f32 %v3316, %v3480
        %v3482 = vpop.f32.mrf.mxu0
        %3483 = vmatprep.mubr.f32.mxu0 0.0
        %v3484 = vand.u32 %v2358, 4294901760
        %3485 = vmatmul.mubr.f32.gmra.mxu0 %v3484
        %v3486 = vpop.f32.mrf.mxu0
        %v3487 = vadd.f32 %v3322, %v3486
        %v3488 = vpop.f32.mrf.mxu0
        %3489 = vdwg.mxu0
        %v3490 = vadd.f32 %v3397, %v987
        %v3491 = vadd.f32 %v3403, %v987
        %v3492 = vadd.f32 %v3409, %v987
        %v3493 = vadd.f32 %v3415, %v987
        %v3494 = vadd.f32 %v3421, %v987
        %v3495 = vadd.f32 %v3427, %v987
        %v3496 = vadd.f32 %v3433, %v987
        %v3497 = vadd.f32 %v3439, %v987
        %v3498 = vadd.f32 %v3445, %v993
        %v3499 = vadd.f32 %v3451, %v993
        %v3500 = vadd.f32 %v3457, %v993
        %v3501 = vadd.f32 %v3463, %v993
        %v3502 = vadd.f32 %v3469, %v993
        %v3503 = vadd.f32 %v3475, %v993
        %v3504 = vadd.f32 %v3481, %v993
        %v3505 = vadd.f32 %v3487, %v993
        %v3507 = vcombine.high %v442, %v442
        %v3509 = vunpack.c.l.s4 1966171168
        %v3510 = vunpack.c.0.s8 %v3509
        %v3511 = vlaneseq
        %v3512 = vshrl.u32 %v3511, 7
        %v3513 = vsub.s32 %v3510, %v3512
        %v3514 = vrot.slane %v442, %v3513
        %v3516 = vunpack.c.l.s4 1966171168
        %v3517 = vunpack.c.0.s8 %v3516
        %v3518 = vlaneseq
        %v3519 = vshrl.u32 %v3518, 7
        %v3520 = vsub.s32 %v3517, %v3519
        %v3521 = vrot.slane %v3507, %v3520
        %v3522 = vcombine.high %v3514, %v3514
        %v3523 = vcombine.high %v3521, %v3521
        %v3525 = vunpack.c.l.s4 1966171168
        %v3526 = vunpack.c.0.s8 %v3525
        %v3527 = vlaneseq
        %v3528 = vshrl.u32 %v3527, 7
        %v3529 = vsub.s32 %v3526, %v3528
        %v3530 = vrot.slane %v3514, %v3529
        %v3532 = vunpack.c.l.s4 1966171168
        %v3533 = vunpack.c.0.s8 %v3532
        %v3534 = vlaneseq
        %v3535 = vshrl.u32 %v3534, 7
        %v3536 = vsub.s32 %v3533, %v3535
        %v3537 = vrot.slane %v3521, %v3536
        %v3539 = vunpack.c.l.s4 1966171168
        %v3540 = vunpack.c.0.s8 %v3539
        %v3541 = vlaneseq
        %v3542 = vshrl.u32 %v3541, 7
        %v3543 = vsub.s32 %v3540, %v3542
        %v3544 = vrot.slane %v3522, %v3543
        %v3546 = vunpack.c.l.s4 1966171168
        %v3547 = vunpack.c.0.s8 %v3546
        %v3548 = vlaneseq
        %v3549 = vshrl.u32 %v3548, 7
        %v3550 = vsub.s32 %v3547, %v3549
        %v3551 = vrot.slane %v3523, %v3550
        %v3552 = vcombine.high %v3530, %v3530
        %v3553 = vcombine.high %v3537, %v3537
        %v3554 = vcombine.high %v3544, %v3544
        %v3555 = vcombine.high %v3551, %v3551
        %v3556 = vlaneseq
        %v3557 = vshrl.u32 %v3556, 7
        %v3558 = vsub.s32 0, %v3557
        %v3559 = vrot.slane %v3530, %v3558
        %v3560 = vlaneseq
        %v3561 = vshrl.u32 %v3560, 7
        %v3562 = vsub.s32 0, %v3561
        %v3563 = vrot.slane %v3544, %v3562
        %v3564 = vlaneseq
        %v3565 = vshrl.u32 %v3564, 7
        %v3566 = vsub.s32 0, %v3565
        %v3567 = vrot.slane %v3552, %v3566
        %v3568 = vlaneseq
        %v3569 = vshrl.u32 %v3568, 7
        %v3570 = vsub.s32 0, %v3569
        %v3571 = vrot.slane %v3554, %v3570
        %v3572 = vlaneseq
        %v3573 = vshrl.u32 %v3572, 7
        %v3574 = vsub.s32 0, %v3573
        %v3575 = vrot.slane %v3537, %v3574
        %v3576 = vlaneseq
        %v3577 = vshrl.u32 %v3576, 7
        %v3578 = vsub.s32 0, %v3577
        %v3579 = vrot.slane %v3551, %v3578
        %v3580 = vlaneseq
        %v3581 = vshrl.u32 %v3580, 7
        %v3582 = vsub.s32 0, %v3581
        %v3583 = vrot.slane %v3553, %v3582
        %v3584 = vlaneseq
        %v3585 = vshrl.u32 %v3584, 7
        %v3586 = vsub.s32 0, %v3585
        %v3587 = vrot.slane %v3555, %v3586
        %v3596 = vadd.f32 %v3490, %v3559
        %v3597 = vadd.f32 %v3491, %v3563
        %v3598 = vadd.f32 %v3492, %v3567
        %v3599 = vadd.f32 %v3493, %v3571
        %v3600 = vadd.f32 %v3494, %v3575
        %v3601 = vadd.f32 %v3495, %v3579
        %v3602 = vadd.f32 %v3496, %v3583
        %v3603 = vadd.f32 %v3497, %v3587
        %v3604 = vadd.f32 %v3498, %v3559
        %v3605 = vadd.f32 %v3499, %v3563
        %v3606 = vadd.f32 %v3500, %v3567
        %v3607 = vadd.f32 %v3501, %v3571
        %v3608 = vadd.f32 %v3502, %v3575
        %v3609 = vadd.f32 %v3503, %v3579
        %v3610 = vadd.f32 %v3504, %v3583
        %v3611 = vadd.f32 %v3505, %v3587
        %v3612 = vtanh.pop %v3596
        %v3613 = vtanh.pop %v3597
        %v3614 = vtanh.pop %v3598
        %v3615 = vtanh.pop %v3599
        %v3616 = vtanh.pop %v3600
        %v3617 = vtanh.pop %v3601
        %v3618 = vtanh.pop %v3602
        %v3619 = vtanh.pop %v3603
        %v3620 = vtanh.pop %v3604
        %v3621 = vtanh.pop %v3605
        %v3622 = vtanh.pop %v3606
        %v3623 = vtanh.pop %v3607
        %v3624 = vtanh.pop %v3608
        %v3625 = vtanh.pop %v3609
        %v3626 = vtanh.pop %v3610
        %v3627 = vtanh.pop %v3611
        %v3629 = vlaneseq
        %v3630 = vshrl.u32 %v3629, 7
        %v3631 = vsub.s32 0, %v3630
        %v3632 = vrot.slane %v455, %v3631
        %v3634 = vmul.f32 %v3612, %v3632
        %v3635 = vmul.f32 %v3613, %v3632
        %v3636 = vmul.f32 %v3614, %v3632
        %v3637 = vmul.f32 %v3615, %v3632
        %v3638 = vmul.f32 %v3616, %v3632
        %v3639 = vmul.f32 %v3617, %v3632
        %v3640 = vmul.f32 %v3618, %v3632
        %v3641 = vmul.f32 %v3619, %v3632
        %v3642 = vmul.f32 %v3620, %v3632
        %v3643 = vmul.f32 %v3621, %v3632
        %v3644 = vmul.f32 %v3622, %v3632
        %v3645 = vmul.f32 %v3623, %v3632
        %v3646 = vmul.f32 %v3624, %v3632
        %v3647 = vmul.f32 %v3625, %v3632
        %v3648 = vmul.f32 %v3626, %v3632
        %v3649 = vmul.f32 %v3627, %v3632
        %3650 = vadd.xlane.f32.xlu0 %v3634
        %v3651 = vpop.xlane.xlu0 %3650
        %3652 = vadd.xlane.f32.xlu0 %v3635
        %v3653 = vpop.xlane.xlu0 %3652
        %3654 = vadd.xlane.f32.xlu0 %v3636
        %v3655 = vpop.xlane.xlu0 %3654
        %3656 = vadd.xlane.f32.xlu0 %v3637
        %v3657 = vpop.xlane.xlu0 %3656
        %3658 = vadd.xlane.f32.xlu0 %v3638
        %v3659 = vpop.xlane.xlu0 %3658
        %3660 = vadd.xlane.f32.xlu0 %v3639
        %v3661 = vpop.xlane.xlu0 %3660
        %3662 = vadd.xlane.f32.xlu0 %v3640
        %v3663 = vpop.xlane.xlu0 %3662
        %3664 = vadd.xlane.f32.xlu0 %v3641
        %v3665 = vpop.xlane.xlu0 %3664
        %3666 = vadd.xlane.f32.xlu0 %v3642
        %v3667 = vpop.xlane.xlu0 %3666
        %3668 = vadd.xlane.f32.xlu0 %v3643
        %v3669 = vpop.xlane.xlu0 %3668
        %3670 = vadd.xlane.f32.xlu0 %v3644
        %v3671 = vpop.xlane.xlu0 %3670
        %3672 = vadd.xlane.f32.xlu0 %v3645
        %v3673 = vpop.xlane.xlu0 %3672
        %3674 = vadd.xlane.f32.xlu0 %v3646
        %v3675 = vpop.xlane.xlu0 %3674
        %3676 = vadd.xlane.f32.xlu0 %v3647
        %v3677 = vpop.xlane.xlu0 %3676
        %3678 = vadd.xlane.f32.xlu0 %v3648
        %v3679 = vpop.xlane.xlu0 %3678
        %3680 = vadd.xlane.f32.xlu0 %v3649
        %v3681 = vpop.xlane.xlu0 %3680
        %vm3682 = vcmp.lt.f32.partialorder %v459, 1.0
        %vm3683 = vcmp.lt.f32.partialorder %v460, 1.0
        %v3684 = vsel %vm3682, 1, 0
        %v3685 = vsel %vm3683, 1, 0
        %v3686 = vlaneseq
        %v3687 = vshrl.u32 %v3686, 7
        %v3688 = vsub.s32 0, %v3687
        %v3689 = vrot.slane %v3684, %v3688
        %v3690 = vlaneseq
        %v3691 = vshrl.u32 %v3690, 7
        %v3692 = vsub.s32 0, %v3691
        %v3693 = vrot.slane %v3685, %v3692
        %vm3694 = vcmp.eq.s32.totalorder %v3689, 1
        %vm3695 = vcmp.eq.s32.totalorder %v3693, 1
        %v3712 = vlaneseq
        %v3713 = vand.u32 %v3712, 127
        %v3714 = vlaneseq
        %v3715 = vshrl.u32 %v3714, 7
        %v3716 = vsub.s32 %v3713, %v3715
        %v3717 = vrot.slane %v3651, %v3716
        %v3718 = vlaneseq
        %v3719 = vshrl.u32 %v3718, 7
        %v3720 = vsub.s32 %v3713, %v3719
        %v3721 = vrot.slane %v3653, %v3720
        %v3722 = vlaneseq
        %v3723 = vshrl.u32 %v3722, 7
        %v3724 = vsub.s32 %v3713, %v3723
        %v3725 = vrot.slane %v3655, %v3724
        %v3726 = vlaneseq
        %v3727 = vshrl.u32 %v3726, 7
        %v3728 = vsub.s32 %v3713, %v3727
        %v3729 = vrot.slane %v3657, %v3728
        %v3730 = vlaneseq
        %v3731 = vshrl.u32 %v3730, 7
        %v3732 = vsub.s32 %v3713, %v3731
        %v3733 = vrot.slane %v3659, %v3732
        %v3734 = vlaneseq
        %v3735 = vshrl.u32 %v3734, 7
        %v3736 = vsub.s32 %v3713, %v3735
        %v3737 = vrot.slane %v3661, %v3736
        %v3738 = vlaneseq
        %v3739 = vshrl.u32 %v3738, 7
        %v3740 = vsub.s32 %v3713, %v3739
        %v3741 = vrot.slane %v3663, %v3740
        %v3742 = vlaneseq
        %v3743 = vshrl.u32 %v3742, 7
        %v3744 = vsub.s32 %v3713, %v3743
        %v3745 = vrot.slane %v3665, %v3744
        %v3746 = vlaneseq
        %v3747 = vshrl.u32 %v3746, 7
        %v3748 = vsub.s32 %v3713, %v3747
        %v3749 = vrot.slane %v3667, %v3748
        %v3750 = vlaneseq
        %v3751 = vshrl.u32 %v3750, 7
        %v3752 = vsub.s32 %v3713, %v3751
        %v3753 = vrot.slane %v3669, %v3752
        %v3754 = vlaneseq
        %v3755 = vshrl.u32 %v3754, 7
        %v3756 = vsub.s32 %v3713, %v3755
        %v3757 = vrot.slane %v3671, %v3756
        %v3758 = vlaneseq
        %v3759 = vshrl.u32 %v3758, 7
        %v3760 = vsub.s32 %v3713, %v3759
        %v3761 = vrot.slane %v3673, %v3760
        %v3762 = vlaneseq
        %v3763 = vshrl.u32 %v3762, 7
        %v3764 = vsub.s32 %v3713, %v3763
        %v3765 = vrot.slane %v3675, %v3764
        %v3766 = vlaneseq
        %v3767 = vshrl.u32 %v3766, 7
        %v3768 = vsub.s32 %v3713, %v3767
        %v3769 = vrot.slane %v3677, %v3768
        %v3770 = vlaneseq
        %v3771 = vshrl.u32 %v3770, 7
        %v3772 = vsub.s32 %v3713, %v3771
        %v3773 = vrot.slane %v3679, %v3772
        %v3774 = vlaneseq
        %v3775 = vshrl.u32 %v3774, 7
        %v3776 = vsub.s32 %v3713, %v3775
        %v3777 = vrot.slane %v3681, %v3776
        %vm3778 = vcmask 1041409
        %v3779 = vsel %vm3778, %v3721, %v3717
        %vm3780 = vcmask 1042434
        %v3781 = vsel %vm3780, %v3725, %v3779
        %vm3782 = vcmask 1043459
        %v3783 = vsel %vm3782, %v3729, %v3781
        %vm3784 = vcmask 1044484
        %v3785 = vsel %vm3784, %v3733, %v3783
        %vm3786 = vcmask 1045509
        %v3787 = vsel %vm3786, %v3737, %v3785
        %vm3788 = vcmask 1046534
        %v3789 = vsel %vm3788, %v3741, %v3787
        %vm3790 = vcmask 1047559
        %v3791 = vsel %vm3790, %v3745, %v3789
        %v3792 = vsel %vm3778, %v3753, %v3749
        %v3793 = vsel %vm3780, %v3757, %v3792
        %v3794 = vsel %vm3782, %v3761, %v3793
        %v3795 = vsel %vm3784, %v3765, %v3794
        %v3796 = vsel %vm3786, %v3769, %v3795
        %v3797 = vsel %vm3788, %v3773, %v3796
        %v3798 = vsel %vm3790, %v3777, %v3797
        %v3801 = vsel %vm3694, -1e+10, %v3791
        %v3802 = vsel %vm3695, -1e+10, %v3798
        %vm3803 = vcmask 64512
        %v3804 = vsel %vm3803, %v3801, -inf
        %3805 = vmax.xlane.f32.xlu0 %v3804
        %v3806 = vpop.xlane.xlu0 %3805
        %v3807 = vsel %vm3803, %v3802, -inf
        %3808 = vmax.xlane.f32.xlu0 %v3807
        %v3809 = vpop.xlane.xlu0 %3808
        %v3810 = vsub.f32 %v3801, %v3806
        %v3811 = vsub.f32 %v3802, %v3809
        %v3812 = vmul.f32 %v3810, 1.442695
        %v3813 = vpow.pop %v3812
        %v3814 = vmul.f32 %v3811, 1.442695
        %v3815 = vpow.pop %v3814
        %v3816 = vsel %vm3803, %v3813, 0.0
        %3817 = vadd.xlane.f32.xlu0 %v3816
        %v3818 = vpop.xlane.xlu0 %3817
        %v3819 = vsel %vm3803, %v3815, 0.0
        %3820 = vadd.xlane.f32.xlu0 %v3819
        %v3821 = vpop.xlane.xlu0 %3820
        %v3823 = vsel %vm3803, %v3813, 0
        %3825 = vmatprep.subr.mxu0 0.0
        %3826 = vmatpush1.msra.mxu0 0.0
        %3827 = vmatprep.subr.mxu0 0.0
        %3828 = vmatpush1.msra.mxu0 0.0
        %3829 = vmatprep.subr.mxu0 0.0
        %3830 = vmatpush1.msra.mxu0 0.0
        %3831 = vmatprep.subr.mxu0 0.0
        %3832 = vmatpush1.msra.mxu0 0.0
        %3833 = vmatprep.subr.mxu0 0.0
        %3834 = vmatpush1.msra.mxu0 0.0
        %3835 = vmatprep.subr.mxu0 0.0
        %3836 = vmatpush1.msra.mxu0 0.0
        %3837 = vmatprep.subr.mxu0 0.0
        %3838 = vmatpush1.msra.mxu0 0.0
        %3839 = vmatprep.subr.mxu0 0.0
        %3840 = vmatpush1.msra.mxu0 0.0
        %3841 = vmatprep.subr.mxu0 0.0
        %3842 = vmatpush1.msra.mxu0 0.0
        %3843 = vmatprep.subr.mxu0 0.0
        %3844 = vmatpush1.msra.mxu0 0.0
        %3845 = vmatprep.subr.mxu0 0.0
        %3846 = vmatpush1.msra.mxu0 0.0
        %3847 = vmatprep.subr.mxu0 0.0
        %3848 = vmatpush1.msra.mxu0 0.0
        %3849 = vmatprep.subr.mxu0 0.0
        %3850 = vmatpush1.msra.mxu0 0.0
        %3851 = vmatprep.subr.mxu0 0.0
        %3852 = vmatpush1.msra.mxu0 0.0
        %3853 = vmatprep.subr.mxu0 0.0
        %3854 = vmatpush1.msra.mxu0 0.0
        %3855 = vmatprep.subr.mxu0 0.0
        %v3856 = vand.u32 %v457, 4294901760
        %3857 = vmatpush1.msra.mxu0 %v3856
        %3858 = vmatprep.subr.mxu0 0.0
        %3859 = vmatpush2.msra.mxu0 0.0
        %3860 = vmatprep.subr.mxu0 0.0
        %3861 = vmatpush2.msra.mxu0 0.0
        %3862 = vmatprep.subr.mxu0 0.0
        %3863 = vmatpush2.msra.mxu0 0.0
        %3864 = vmatprep.subr.mxu0 0.0
        %3865 = vmatpush2.msra.mxu0 0.0
        %3866 = vmatprep.subr.mxu0 0.0
        %3867 = vmatpush2.msra.mxu0 0.0
        %3868 = vmatprep.subr.mxu0 0.0
        %3869 = vmatpush2.msra.mxu0 0.0
        %3870 = vmatprep.subr.mxu0 0.0
        %3871 = vmatpush2.msra.mxu0 0.0
        %3872 = vmatprep.subr.mxu0 0.0
        %3873 = vmatpush2.msra.mxu0 0.0
        %3874 = vmatprep.subr.mxu0 0.0
        %3875 = vmatpush2.msra.mxu0 0.0
        %3876 = vmatprep.subr.mxu0 0.0
        %3877 = vmatpush2.msra.mxu0 0.0
        %3878 = vmatprep.subr.mxu0 0.0
        %3879 = vmatpush2.msra.mxu0 0.0
        %3880 = vmatprep.subr.mxu0 0.0
        %3881 = vmatpush2.msra.mxu0 0.0
        %3882 = vmatprep.subr.mxu0 0.0
        %3883 = vmatpush2.msra.mxu0 0.0
        %3884 = vmatprep.subr.mxu0 0.0
        %3885 = vmatpush2.msra.mxu0 0.0
        %3886 = vmatprep.subr.mxu0 0.0
        %3887 = vmatpush2.msra.mxu0 0.0
        %3888 = vmatprep.subr.mxu0 0.0
        %3889 = vmatpush2.msra.mxu0 0.0
        %3890 = vmatprep.mubr.f32.mxu0 0.0
        %v3891 = vand.u32 %v3823, 4294901760
        %v3892 = vsub.f32 %v3823, %v3891
        %v3893 = vand.u32 %v3892, 4294901760
        %v3894 = vsub.f32 %v3892, %v3893
        %v3895 = vand.u32 %v3894, 4294901760
        %3896 = vmatmul.mubr.f32.gmra.mxu0 %v3895
        %v3897 = vpop.f32.mrf.mxu0
        %v3898 = vadd.f32 0.0, %v3897
        %v3899 = vpop.f32.mrf.mxu0
        %3900 = vdwg.mxu0
        %3901 = vmatprep.subr.mxu0 0.0
        %3902 = vmatpush1.msra.mxu0 0.0
        %3903 = vmatprep.subr.mxu0 0.0
        %3904 = vmatpush1.msra.mxu0 0.0
        %3905 = vmatprep.subr.mxu0 0.0
        %3906 = vmatpush1.msra.mxu0 0.0
        %3907 = vmatprep.subr.mxu0 0.0
        %3908 = vmatpush1.msra.mxu0 0.0
        %3909 = vmatprep.subr.mxu0 0.0
        %3910 = vmatpush1.msra.mxu0 0.0
        %3911 = vmatprep.subr.mxu0 0.0
        %3912 = vmatpush1.msra.mxu0 0.0
        %3913 = vmatprep.subr.mxu0 0.0
        %3914 = vmatpush1.msra.mxu0 0.0
        %3915 = vmatprep.subr.mxu0 0.0
        %3916 = vmatpush1.msra.mxu0 0.0
        %3917 = vmatprep.subr.mxu0 0.0
        %3918 = vmatpush1.msra.mxu0 0.0
        %3919 = vmatprep.subr.mxu0 0.0
        %3920 = vmatpush1.msra.mxu0 0.0
        %3921 = vmatprep.subr.mxu0 0.0
        %3922 = vmatpush1.msra.mxu0 0.0
        %3923 = vmatprep.subr.mxu0 0.0
        %3924 = vmatpush1.msra.mxu0 0.0
        %3925 = vmatprep.subr.mxu0 0.0
        %3926 = vmatpush1.msra.mxu0 0.0
        %3927 = vmatprep.subr.mxu0 0.0
        %3928 = vmatpush1.msra.mxu0 0.0
        %3929 = vmatprep.subr.mxu0 0.0
        %3930 = vmatpush1.msra.mxu0 0.0
        %3931 = vmatprep.subr.mxu0 0.0
        %v3932 = vand.u32 %v457, 4294901760
        %v3933 = vsub.f32 %v457, %v3932
        %v3934 = vand.u32 %v3933, 4294901760
        %v3935 = vsub.f32 %v3933, %v3934
        %v3936 = vand.u32 %v3935, 4294901760
        %3937 = vmatpush1.msra.mxu0 %v3936
        %3938 = vmatprep.subr.mxu0 0.0
        %3939 = vmatpush2.msra.mxu0 0.0
        %3940 = vmatprep.subr.mxu0 0.0
        %3941 = vmatpush2.msra.mxu0 0.0
        %3942 = vmatprep.subr.mxu0 0.0
        %3943 = vmatpush2.msra.mxu0 0.0
        %3944 = vmatprep.subr.mxu0 0.0
        %3945 = vmatpush2.msra.mxu0 0.0
        %3946 = vmatprep.subr.mxu0 0.0
        %3947 = vmatpush2.msra.mxu0 0.0
        %3948 = vmatprep.subr.mxu0 0.0
        %3949 = vmatpush2.msra.mxu0 0.0
        %3950 = vmatprep.subr.mxu0 0.0
        %3951 = vmatpush2.msra.mxu0 0.0
        %3952 = vmatprep.subr.mxu0 0.0
        %3953 = vmatpush2.msra.mxu0 0.0
        %3954 = vmatprep.subr.mxu0 0.0
        %3955 = vmatpush2.msra.mxu0 0.0
        %3956 = vmatprep.subr.mxu0 0.0
        %3957 = vmatpush2.msra.mxu0 0.0
        %3958 = vmatprep.subr.mxu0 0.0
        %3959 = vmatpush2.msra.mxu0 0.0
        %3960 = vmatprep.subr.mxu0 0.0
        %3961 = vmatpush2.msra.mxu0 0.0
        %3962 = vmatprep.subr.mxu0 0.0
        %3963 = vmatpush2.msra.mxu0 0.0
        %3964 = vmatprep.subr.mxu0 0.0
        %3965 = vmatpush2.msra.mxu0 0.0
        %3966 = vmatprep.subr.mxu0 0.0
        %3967 = vmatpush2.msra.mxu0 0.0
        %3968 = vmatprep.subr.mxu0 0.0
        %3969 = vmatpush2.msra.mxu0 0.0
        %3970 = vmatprep.mubr.f32.mxu0 0.0
        %v3971 = vand.u32 %v3823, 4294901760
        %3972 = vmatmul.mubr.f32.gmra.mxu0 %v3971
        %v3973 = vpop.f32.mrf.mxu0
        %v3974 = vadd.f32 %v3898, %v3973
        %v3975 = vpop.f32.mrf.mxu0
        %3976 = vdwg.mxu0
        %3977 = vmatprep.subr.mxu0 0.0
        %3978 = vmatpush1.msra.mxu0 0.0
        %3979 = vmatprep.subr.mxu0 0.0
        %3980 = vmatpush1.msra.mxu0 0.0
        %3981 = vmatprep.subr.mxu0 0.0
        %3982 = vmatpush1.msra.mxu0 0.0
        %3983 = vmatprep.subr.mxu0 0.0
        %3984 = vmatpush1.msra.mxu0 0.0
        %3985 = vmatprep.subr.mxu0 0.0
        %3986 = vmatpush1.msra.mxu0 0.0
        %3987 = vmatprep.subr.mxu0 0.0
        %3988 = vmatpush1.msra.mxu0 0.0
        %3989 = vmatprep.subr.mxu0 0.0
        %3990 = vmatpush1.msra.mxu0 0.0
        %3991 = vmatprep.subr.mxu0 0.0
        %3992 = vmatpush1.msra.mxu0 0.0
        %3993 = vmatprep.subr.mxu0 0.0
        %3994 = vmatpush1.msra.mxu0 0.0
        %3995 = vmatprep.subr.mxu0 0.0
        %3996 = vmatpush1.msra.mxu0 0.0
        %3997 = vmatprep.subr.mxu0 0.0
        %3998 = vmatpush1.msra.mxu0 0.0
        %3999 = vmatprep.subr.mxu0 0.0
        %4000 = vmatpush1.msra.mxu0 0.0
        %4001 = vmatprep.subr.mxu0 0.0
        %4002 = vmatpush1.msra.mxu0 0.0
        %4003 = vmatprep.subr.mxu0 0.0
        %4004 = vmatpush1.msra.mxu0 0.0
        %4005 = vmatprep.subr.mxu0 0.0
        %4006 = vmatpush1.msra.mxu0 0.0
        %4007 = vmatprep.subr.mxu0 0.0
        %v4008 = vand.u32 %v457, 4294901760
        %v4009 = vsub.f32 %v457, %v4008
        %4010 = vmatpush1.msra.mxu0 %v4009
        %4011 = vmatprep.subr.mxu0 0.0
        %4012 = vmatpush2.msra.mxu0 0.0
        %4013 = vmatprep.subr.mxu0 0.0
        %4014 = vmatpush2.msra.mxu0 0.0
        %4015 = vmatprep.subr.mxu0 0.0
        %4016 = vmatpush2.msra.mxu0 0.0
        %4017 = vmatprep.subr.mxu0 0.0
        %4018 = vmatpush2.msra.mxu0 0.0
        %4019 = vmatprep.subr.mxu0 0.0
        %4020 = vmatpush2.msra.mxu0 0.0
        %4021 = vmatprep.subr.mxu0 0.0
        %4022 = vmatpush2.msra.mxu0 0.0
        %4023 = vmatprep.subr.mxu0 0.0
        %4024 = vmatpush2.msra.mxu0 0.0
        %4025 = vmatprep.subr.mxu0 0.0
        %4026 = vmatpush2.msra.mxu0 0.0
        %4027 = vmatprep.subr.mxu0 0.0
        %4028 = vmatpush2.msra.mxu0 0.0
        %4029 = vmatprep.subr.mxu0 0.0
        %4030 = vmatpush2.msra.mxu0 0.0
        %4031 = vmatprep.subr.mxu0 0.0
        %4032 = vmatpush2.msra.mxu0 0.0
        %4033 = vmatprep.subr.mxu0 0.0
        %4034 = vmatpush2.msra.mxu0 0.0
        %4035 = vmatprep.subr.mxu0 0.0
        %4036 = vmatpush2.msra.mxu0 0.0
        %4037 = vmatprep.subr.mxu0 0.0
        %4038 = vmatpush2.msra.mxu0 0.0
        %4039 = vmatprep.subr.mxu0 0.0
        %4040 = vmatpush2.msra.mxu0 0.0
        %4041 = vmatprep.subr.mxu0 0.0
        %4042 = vmatpush2.msra.mxu0 0.0
        %4043 = vmatprep.mubr.f32.mxu0 0.0
        %v4044 = vand.u32 %v3823, 4294901760
        %v4045 = vsub.f32 %v3823, %v4044
        %4046 = vmatmul.mubr.f32.gmra.mxu0 %v4045
        %v4047 = vpop.f32.mrf.mxu0
        %v4048 = vadd.f32 %v3974, %v4047
        %v4049 = vpop.f32.mrf.mxu0
        %4050 = vdwg.mxu0
        %4051 = vmatprep.subr.mxu0 0.0
        %4052 = vmatpush1.msra.mxu0 0.0
        %4053 = vmatprep.subr.mxu0 0.0
        %4054 = vmatpush1.msra.mxu0 0.0
        %4055 = vmatprep.subr.mxu0 0.0
        %4056 = vmatpush1.msra.mxu0 0.0
        %4057 = vmatprep.subr.mxu0 0.0
        %4058 = vmatpush1.msra.mxu0 0.0
        %4059 = vmatprep.subr.mxu0 0.0
        %4060 = vmatpush1.msra.mxu0 0.0
        %4061 = vmatprep.subr.mxu0 0.0
        %4062 = vmatpush1.msra.mxu0 0.0
        %4063 = vmatprep.subr.mxu0 0.0
        %4064 = vmatpush1.msra.mxu0 0.0
        %4065 = vmatprep.subr.mxu0 0.0
        %4066 = vmatpush1.msra.mxu0 0.0
        %4067 = vmatprep.subr.mxu0 0.0
        %4068 = vmatpush1.msra.mxu0 0.0
        %4069 = vmatprep.subr.mxu0 0.0
        %4070 = vmatpush1.msra.mxu0 0.0
        %4071 = vmatprep.subr.mxu0 0.0
        %4072 = vmatpush1.msra.mxu0 0.0
        %4073 = vmatprep.subr.mxu0 0.0
        %4074 = vmatpush1.msra.mxu0 0.0
        %4075 = vmatprep.subr.mxu0 0.0
        %4076 = vmatpush1.msra.mxu0 0.0
        %4077 = vmatprep.subr.mxu0 0.0
        %4078 = vmatpush1.msra.mxu0 0.0
        %4079 = vmatprep.subr.mxu0 0.0
        %4080 = vmatpush1.msra.mxu0 0.0
        %4081 = vmatprep.subr.mxu0 0.0
        %v4082 = vand.u32 %v457, 4294901760
        %4083 = vmatpush1.msra.mxu0 %v4082
        %4084 = vmatprep.subr.mxu0 0.0
        %4085 = vmatpush2.msra.mxu0 0.0
        %4086 = vmatprep.subr.mxu0 0.0
        %4087 = vmatpush2.msra.mxu0 0.0
        %4088 = vmatprep.subr.mxu0 0.0
        %4089 = vmatpush2.msra.mxu0 0.0
        %4090 = vmatprep.subr.mxu0 0.0
        %4091 = vmatpush2.msra.mxu0 0.0
        %4092 = vmatprep.subr.mxu0 0.0
        %4093 = vmatpush2.msra.mxu0 0.0
        %4094 = vmatprep.subr.mxu0 0.0
        %4095 = vmatpush2.msra.mxu0 0.0
        %4096 = vmatprep.subr.mxu0 0.0
        %4097 = vmatpush2.msra.mxu0 0.0
        %4098 = vmatprep.subr.mxu0 0.0
        %4099 = vmatpush2.msra.mxu0 0.0
        %4100 = vmatprep.subr.mxu0 0.0
        %4101 = vmatpush2.msra.mxu0 0.0
        %4102 = vmatprep.subr.mxu0 0.0
        %4103 = vmatpush2.msra.mxu0 0.0
        %4104 = vmatprep.subr.mxu0 0.0
        %4105 = vmatpush2.msra.mxu0 0.0
        %4106 = vmatprep.subr.mxu0 0.0
        %4107 = vmatpush2.msra.mxu0 0.0
        %4108 = vmatprep.subr.mxu0 0.0
        %4109 = vmatpush2.msra.mxu0 0.0
        %4110 = vmatprep.subr.mxu0 0.0
        %4111 = vmatpush2.msra.mxu0 0.0
        %4112 = vmatprep.subr.mxu0 0.0
        %4113 = vmatpush2.msra.mxu0 0.0
        %4114 = vmatprep.subr.mxu0 0.0
        %4115 = vmatpush2.msra.mxu0 0.0
        %4116 = vmatprep.mubr.f32.mxu0 0.0
        %v4117 = vand.u32 %v3823, 4294901760
        %v4118 = vsub.f32 %v3823, %v4117
        %v4119 = vand.u32 %v4118, 4294901760
        %4120 = vmatmul.mubr.f32.gmra.mxu0 %v4119
        %v4121 = vpop.f32.mrf.mxu0
        %v4122 = vadd.f32 %v4048, %v4121
        %v4123 = vpop.f32.mrf.mxu0
        %4124 = vdwg.mxu0
        %4125 = vmatprep.subr.mxu0 0.0
        %4126 = vmatpush1.msra.mxu0 0.0
        %4127 = vmatprep.subr.mxu0 0.0
        %4128 = vmatpush1.msra.mxu0 0.0
        %4129 = vmatprep.subr.mxu0 0.0
        %4130 = vmatpush1.msra.mxu0 0.0
        %4131 = vmatprep.subr.mxu0 0.0
        %4132 = vmatpush1.msra.mxu0 0.0
        %4133 = vmatprep.subr.mxu0 0.0
        %4134 = vmatpush1.msra.mxu0 0.0
        %4135 = vmatprep.subr.mxu0 0.0
        %4136 = vmatpush1.msra.mxu0 0.0
        %4137 = vmatprep.subr.mxu0 0.0
        %4138 = vmatpush1.msra.mxu0 0.0
        %4139 = vmatprep.subr.mxu0 0.0
        %4140 = vmatpush1.msra.mxu0 0.0
        %4141 = vmatprep.subr.mxu0 0.0
        %4142 = vmatpush1.msra.mxu0 0.0
        %4143 = vmatprep.subr.mxu0 0.0
        %4144 = vmatpush1.msra.mxu0 0.0
        %4145 = vmatprep.subr.mxu0 0.0
        %4146 = vmatpush1.msra.mxu0 0.0
        %4147 = vmatprep.subr.mxu0 0.0
        %4148 = vmatpush1.msra.mxu0 0.0
        %4149 = vmatprep.subr.mxu0 0.0
        %4150 = vmatpush1.msra.mxu0 0.0
        %4151 = vmatprep.subr.mxu0 0.0
        %4152 = vmatpush1.msra.mxu0 0.0
        %4153 = vmatprep.subr.mxu0 0.0
        %4154 = vmatpush1.msra.mxu0 0.0
        %4155 = vmatprep.subr.mxu0 0.0
        %v4156 = vand.u32 %v457, 4294901760
        %v4157 = vsub.f32 %v457, %v4156
        %v4158 = vand.u32 %v4157, 4294901760
        %4159 = vmatpush1.msra.mxu0 %v4158
        %4160 = vmatprep.subr.mxu0 0.0
        %4161 = vmatpush2.msra.mxu0 0.0
        %4162 = vmatprep.subr.mxu0 0.0
        %4163 = vmatpush2.msra.mxu0 0.0
        %4164 = vmatprep.subr.mxu0 0.0
        %4165 = vmatpush2.msra.mxu0 0.0
        %4166 = vmatprep.subr.mxu0 0.0
        %4167 = vmatpush2.msra.mxu0 0.0
        %4168 = vmatprep.subr.mxu0 0.0
        %4169 = vmatpush2.msra.mxu0 0.0
        %4170 = vmatprep.subr.mxu0 0.0
        %4171 = vmatpush2.msra.mxu0 0.0
        %4172 = vmatprep.subr.mxu0 0.0
        %4173 = vmatpush2.msra.mxu0 0.0
        %4174 = vmatprep.subr.mxu0 0.0
        %4175 = vmatpush2.msra.mxu0 0.0
        %4176 = vmatprep.subr.mxu0 0.0
        %4177 = vmatpush2.msra.mxu0 0.0
        %4178 = vmatprep.subr.mxu0 0.0
        %4179 = vmatpush2.msra.mxu0 0.0
        %4180 = vmatprep.subr.mxu0 0.0
        %4181 = vmatpush2.msra.mxu0 0.0
        %4182 = vmatprep.subr.mxu0 0.0
        %4183 = vmatpush2.msra.mxu0 0.0
        %4184 = vmatprep.subr.mxu0 0.0
        %4185 = vmatpush2.msra.mxu0 0.0
        %4186 = vmatprep.subr.mxu0 0.0
        %4187 = vmatpush2.msra.mxu0 0.0
        %4188 = vmatprep.subr.mxu0 0.0
        %4189 = vmatpush2.msra.mxu0 0.0
        %4190 = vmatprep.subr.mxu0 0.0
        %4191 = vmatpush2.msra.mxu0 0.0
        %4192 = vmatprep.mubr.f32.mxu0 0.0
        %v4193 = vand.u32 %v3823, 4294901760
        %4194 = vmatmul.mubr.f32.gmra.mxu0 %v4193
        %v4195 = vpop.f32.mrf.mxu0
        %v4196 = vadd.f32 %v4122, %v4195
        %v4197 = vpop.f32.mrf.mxu0
        %4198 = vdwg.mxu0
        %4199 = vmatprep.subr.mxu0 0.0
        %4200 = vmatpush1.msra.mxu0 0.0
        %4201 = vmatprep.subr.mxu0 0.0
        %4202 = vmatpush1.msra.mxu0 0.0
        %4203 = vmatprep.subr.mxu0 0.0
        %4204 = vmatpush1.msra.mxu0 0.0
        %4205 = vmatprep.subr.mxu0 0.0
        %4206 = vmatpush1.msra.mxu0 0.0
        %4207 = vmatprep.subr.mxu0 0.0
        %4208 = vmatpush1.msra.mxu0 0.0
        %4209 = vmatprep.subr.mxu0 0.0
        %4210 = vmatpush1.msra.mxu0 0.0
        %4211 = vmatprep.subr.mxu0 0.0
        %4212 = vmatpush1.msra.mxu0 0.0
        %4213 = vmatprep.subr.mxu0 0.0
        %4214 = vmatpush1.msra.mxu0 0.0
        %4215 = vmatprep.subr.mxu0 0.0
        %4216 = vmatpush1.msra.mxu0 0.0
        %4217 = vmatprep.subr.mxu0 0.0
        %4218 = vmatpush1.msra.mxu0 0.0
        %4219 = vmatprep.subr.mxu0 0.0
        %4220 = vmatpush1.msra.mxu0 0.0
        %4221 = vmatprep.subr.mxu0 0.0
        %4222 = vmatpush1.msra.mxu0 0.0
        %4223 = vmatprep.subr.mxu0 0.0
        %4224 = vmatpush1.msra.mxu0 0.0
        %4225 = vmatprep.subr.mxu0 0.0
        %4226 = vmatpush1.msra.mxu0 0.0
        %4227 = vmatprep.subr.mxu0 0.0
        %4228 = vmatpush1.msra.mxu0 0.0
        %4229 = vmatprep.subr.mxu0 0.0
        %v4230 = vand.u32 %v457, 4294901760
        %4231 = vmatpush1.msra.mxu0 %v4230
        %4232 = vmatprep.subr.mxu0 0.0
        %4233 = vmatpush2.msra.mxu0 0.0
        %4234 = vmatprep.subr.mxu0 0.0
        %4235 = vmatpush2.msra.mxu0 0.0
        %4236 = vmatprep.subr.mxu0 0.0
        %4237 = vmatpush2.msra.mxu0 0.0
        %4238 = vmatprep.subr.mxu0 0.0
        %4239 = vmatpush2.msra.mxu0 0.0
        %4240 = vmatprep.subr.mxu0 0.0
        %4241 = vmatpush2.msra.mxu0 0.0
        %4242 = vmatprep.subr.mxu0 0.0
        %4243 = vmatpush2.msra.mxu0 0.0
        %4244 = vmatprep.subr.mxu0 0.0
        %4245 = vmatpush2.msra.mxu0 0.0
        %4246 = vmatprep.subr.mxu0 0.0
        %4247 = vmatpush2.msra.mxu0 0.0
        %4248 = vmatprep.subr.mxu0 0.0
        %4249 = vmatpush2.msra.mxu0 0.0
        %4250 = vmatprep.subr.mxu0 0.0
        %4251 = vmatpush2.msra.mxu0 0.0
        %4252 = vmatprep.subr.mxu0 0.0
        %4253 = vmatpush2.msra.mxu0 0.0
        %4254 = vmatprep.subr.mxu0 0.0
        %4255 = vmatpush2.msra.mxu0 0.0
        %4256 = vmatprep.subr.mxu0 0.0
        %4257 = vmatpush2.msra.mxu0 0.0
        %4258 = vmatprep.subr.mxu0 0.0
        %4259 = vmatpush2.msra.mxu0 0.0
        %4260 = vmatprep.subr.mxu0 0.0
        %4261 = vmatpush2.msra.mxu0 0.0
        %4262 = vmatprep.subr.mxu0 0.0
        %4263 = vmatpush2.msra.mxu0 0.0
        %4264 = vmatprep.mubr.f32.mxu0 0.0
        %v4265 = vand.u32 %v3823, 4294901760
        %4266 = vmatmul.mubr.f32.gmra.mxu0 %v4265
        %v4267 = vpop.f32.mrf.mxu0
        %v4268 = vadd.f32 %v4196, %v4267
        %v4269 = vpop.f32.mrf.mxu0
        %4270 = vdwg.mxu0
        %v4272 = vsel %vm3803, %v3815, 0
        %4274 = vmatprep.subr.mxu0 0.0
        %4275 = vmatpush1.msra.mxu0 0.0
        %4276 = vmatprep.subr.mxu0 0.0
        %4277 = vmatpush1.msra.mxu0 0.0
        %4278 = vmatprep.subr.mxu0 0.0
        %4279 = vmatpush1.msra.mxu0 0.0
        %4280 = vmatprep.subr.mxu0 0.0
        %4281 = vmatpush1.msra.mxu0 0.0
        %4282 = vmatprep.subr.mxu0 0.0
        %4283 = vmatpush1.msra.mxu0 0.0
        %4284 = vmatprep.subr.mxu0 0.0
        %4285 = vmatpush1.msra.mxu0 0.0
        %4286 = vmatprep.subr.mxu0 0.0
        %4287 = vmatpush1.msra.mxu0 0.0
        %4288 = vmatprep.subr.mxu0 0.0
        %4289 = vmatpush1.msra.mxu0 0.0
        %4290 = vmatprep.subr.mxu0 0.0
        %4291 = vmatpush1.msra.mxu0 0.0
        %4292 = vmatprep.subr.mxu0 0.0
        %4293 = vmatpush1.msra.mxu0 0.0
        %4294 = vmatprep.subr.mxu0 0.0
        %4295 = vmatpush1.msra.mxu0 0.0
        %4296 = vmatprep.subr.mxu0 0.0
        %4297 = vmatpush1.msra.mxu0 0.0
        %4298 = vmatprep.subr.mxu0 0.0
        %4299 = vmatpush1.msra.mxu0 0.0
        %4300 = vmatprep.subr.mxu0 0.0
        %4301 = vmatpush1.msra.mxu0 0.0
        %4302 = vmatprep.subr.mxu0 0.0
        %4303 = vmatpush1.msra.mxu0 0.0
        %4304 = vmatprep.subr.mxu0 0.0
        %v4305 = vand.u32 %v458, 4294901760
        %4306 = vmatpush1.msra.mxu0 %v4305
        %4307 = vmatprep.subr.mxu0 0.0
        %4308 = vmatpush2.msra.mxu0 0.0
        %4309 = vmatprep.subr.mxu0 0.0
        %4310 = vmatpush2.msra.mxu0 0.0
        %4311 = vmatprep.subr.mxu0 0.0
        %4312 = vmatpush2.msra.mxu0 0.0
        %4313 = vmatprep.subr.mxu0 0.0
        %4314 = vmatpush2.msra.mxu0 0.0
        %4315 = vmatprep.subr.mxu0 0.0
        %4316 = vmatpush2.msra.mxu0 0.0
        %4317 = vmatprep.subr.mxu0 0.0
        %4318 = vmatpush2.msra.mxu0 0.0
        %4319 = vmatprep.subr.mxu0 0.0
        %4320 = vmatpush2.msra.mxu0 0.0
        %4321 = vmatprep.subr.mxu0 0.0
        %4322 = vmatpush2.msra.mxu0 0.0
        %4323 = vmatprep.subr.mxu0 0.0
        %4324 = vmatpush2.msra.mxu0 0.0
        %4325 = vmatprep.subr.mxu0 0.0
        %4326 = vmatpush2.msra.mxu0 0.0
        %4327 = vmatprep.subr.mxu0 0.0
        %4328 = vmatpush2.msra.mxu0 0.0
        %4329 = vmatprep.subr.mxu0 0.0
        %4330 = vmatpush2.msra.mxu0 0.0
        %4331 = vmatprep.subr.mxu0 0.0
        %4332 = vmatpush2.msra.mxu0 0.0
        %4333 = vmatprep.subr.mxu0 0.0
        %4334 = vmatpush2.msra.mxu0 0.0
        %4335 = vmatprep.subr.mxu0 0.0
        %4336 = vmatpush2.msra.mxu0 0.0
        %4337 = vmatprep.subr.mxu0 0.0
        %4338 = vmatpush2.msra.mxu0 0.0
        %4339 = vmatprep.mubr.f32.mxu0 0.0
        %v4340 = vand.u32 %v4272, 4294901760
        %v4341 = vsub.f32 %v4272, %v4340
        %v4342 = vand.u32 %v4341, 4294901760
        %v4343 = vsub.f32 %v4341, %v4342
        %v4344 = vand.u32 %v4343, 4294901760
        %4345 = vmatmul.mubr.f32.gmra.mxu0 %v4344
        %v4346 = vpop.f32.mrf.mxu0
        %v4347 = vadd.f32 0.0, %v4346
        %v4348 = vpop.f32.mrf.mxu0
        %4349 = vdwg.mxu0
        %4350 = vmatprep.subr.mxu0 0.0
        %4351 = vmatpush1.msra.mxu0 0.0
        %4352 = vmatprep.subr.mxu0 0.0
        %4353 = vmatpush1.msra.mxu0 0.0
        %4354 = vmatprep.subr.mxu0 0.0
        %4355 = vmatpush1.msra.mxu0 0.0
        %4356 = vmatprep.subr.mxu0 0.0
        %4357 = vmatpush1.msra.mxu0 0.0
        %4358 = vmatprep.subr.mxu0 0.0
        %4359 = vmatpush1.msra.mxu0 0.0
        %4360 = vmatprep.subr.mxu0 0.0
        %4361 = vmatpush1.msra.mxu0 0.0
        %4362 = vmatprep.subr.mxu0 0.0
        %4363 = vmatpush1.msra.mxu0 0.0
        %4364 = vmatprep.subr.mxu0 0.0
        %4365 = vmatpush1.msra.mxu0 0.0
        %4366 = vmatprep.subr.mxu0 0.0
        %4367 = vmatpush1.msra.mxu0 0.0
        %4368 = vmatprep.subr.mxu0 0.0
        %4369 = vmatpush1.msra.mxu0 0.0
        %4370 = vmatprep.subr.mxu0 0.0
        %4371 = vmatpush1.msra.mxu0 0.0
        %4372 = vmatprep.subr.mxu0 0.0
        %4373 = vmatpush1.msra.mxu0 0.0
        %4374 = vmatprep.subr.mxu0 0.0
        %4375 = vmatpush1.msra.mxu0 0.0
        %4376 = vmatprep.subr.mxu0 0.0
        %4377 = vmatpush1.msra.mxu0 0.0
        %4378 = vmatprep.subr.mxu0 0.0
        %4379 = vmatpush1.msra.mxu0 0.0
        %4380 = vmatprep.subr.mxu0 0.0
        %v4381 = vand.u32 %v458, 4294901760
        %v4382 = vsub.f32 %v458, %v4381
        %v4383 = vand.u32 %v4382, 4294901760
        %v4384 = vsub.f32 %v4382, %v4383
        %v4385 = vand.u32 %v4384, 4294901760
        %4386 = vmatpush1.msra.mxu0 %v4385
        %4387 = vmatprep.subr.mxu0 0.0
        %4388 = vmatpush2.msra.mxu0 0.0
        %4389 = vmatprep.subr.mxu0 0.0
        %4390 = vmatpush2.msra.mxu0 0.0
        %4391 = vmatprep.subr.mxu0 0.0
        %4392 = vmatpush2.msra.mxu0 0.0
        %4393 = vmatprep.subr.mxu0 0.0
        %4394 = vmatpush2.msra.mxu0 0.0
        %4395 = vmatprep.subr.mxu0 0.0
        %4396 = vmatpush2.msra.mxu0 0.0
        %4397 = vmatprep.subr.mxu0 0.0
        %4398 = vmatpush2.msra.mxu0 0.0
        %4399 = vmatprep.subr.mxu0 0.0
        %4400 = vmatpush2.msra.mxu0 0.0
        %4401 = vmatprep.subr.mxu0 0.0
        %4402 = vmatpush2.msra.mxu0 0.0
        %4403 = vmatprep.subr.mxu0 0.0
        %4404 = vmatpush2.msra.mxu0 0.0
        %4405 = vmatprep.subr.mxu0 0.0
        %4406 = vmatpush2.msra.mxu0 0.0
        %4407 = vmatprep.subr.mxu0 0.0
        %4408 = vmatpush2.msra.mxu0 0.0
        %4409 = vmatprep.subr.mxu0 0.0
        %4410 = vmatpush2.msra.mxu0 0.0
        %4411 = vmatprep.subr.mxu0 0.0
        %4412 = vmatpush2.msra.mxu0 0.0
        %4413 = vmatprep.subr.mxu0 0.0
        %4414 = vmatpush2.msra.mxu0 0.0
        %4415 = vmatprep.subr.mxu0 0.0
        %4416 = vmatpush2.msra.mxu0 0.0
        %4417 = vmatprep.subr.mxu0 0.0
        %4418 = vmatpush2.msra.mxu0 0.0
        %4419 = vmatprep.mubr.f32.mxu0 0.0
        %v4420 = vand.u32 %v4272, 4294901760
        %4421 = vmatmul.mubr.f32.gmra.mxu0 %v4420
        %v4422 = vpop.f32.mrf.mxu0
        %v4423 = vadd.f32 %v4347, %v4422
        %v4424 = vpop.f32.mrf.mxu0
        %4425 = vdwg.mxu0
        %4426 = vmatprep.subr.mxu0 0.0
        %4427 = vmatpush1.msra.mxu0 0.0
        %4428 = vmatprep.subr.mxu0 0.0
        %4429 = vmatpush1.msra.mxu0 0.0
        %4430 = vmatprep.subr.mxu0 0.0
        %4431 = vmatpush1.msra.mxu0 0.0
        %4432 = vmatprep.subr.mxu0 0.0
        %4433 = vmatpush1.msra.mxu0 0.0
        %4434 = vmatprep.subr.mxu0 0.0
        %4435 = vmatpush1.msra.mxu0 0.0
        %4436 = vmatprep.subr.mxu0 0.0
        %4437 = vmatpush1.msra.mxu0 0.0
        %4438 = vmatprep.subr.mxu0 0.0
        %4439 = vmatpush1.msra.mxu0 0.0
        %4440 = vmatprep.subr.mxu0 0.0
        %4441 = vmatpush1.msra.mxu0 0.0
        %4442 = vmatprep.subr.mxu0 0.0
        %4443 = vmatpush1.msra.mxu0 0.0
        %4444 = vmatprep.subr.mxu0 0.0
        %4445 = vmatpush1.msra.mxu0 0.0
        %4446 = vmatprep.subr.mxu0 0.0
        %4447 = vmatpush1.msra.mxu0 0.0
        %4448 = vmatprep.subr.mxu0 0.0
        %4449 = vmatpush1.msra.mxu0 0.0
        %4450 = vmatprep.subr.mxu0 0.0
        %4451 = vmatpush1.msra.mxu0 0.0
        %4452 = vmatprep.subr.mxu0 0.0
        %4453 = vmatpush1.msra.mxu0 0.0
        %4454 = vmatprep.subr.mxu0 0.0
        %4455 = vmatpush1.msra.mxu0 0.0
        %4456 = vmatprep.subr.mxu0 0.0
        %v4457 = vand.u32 %v458, 4294901760
        %v4458 = vsub.f32 %v458, %v4457
        %4459 = vmatpush1.msra.mxu0 %v4458
        %4460 = vmatprep.subr.mxu0 0.0
        %4461 = vmatpush2.msra.mxu0 0.0
        %4462 = vmatprep.subr.mxu0 0.0
        %4463 = vmatpush2.msra.mxu0 0.0
        %4464 = vmatprep.subr.mxu0 0.0
        %4465 = vmatpush2.msra.mxu0 0.0
        %4466 = vmatprep.subr.mxu0 0.0
        %4467 = vmatpush2.msra.mxu0 0.0
        %4468 = vmatprep.subr.mxu0 0.0
        %4469 = vmatpush2.msra.mxu0 0.0
        %4470 = vmatprep.subr.mxu0 0.0
        %4471 = vmatpush2.msra.mxu0 0.0
        %4472 = vmatprep.subr.mxu0 0.0
        %4473 = vmatpush2.msra.mxu0 0.0
        %4474 = vmatprep.subr.mxu0 0.0
        %4475 = vmatpush2.msra.mxu0 0.0
        %4476 = vmatprep.subr.mxu0 0.0
        %4477 = vmatpush2.msra.mxu0 0.0
        %4478 = vmatprep.subr.mxu0 0.0
        %4479 = vmatpush2.msra.mxu0 0.0
        %4480 = vmatprep.subr.mxu0 0.0
        %4481 = vmatpush2.msra.mxu0 0.0
        %4482 = vmatprep.subr.mxu0 0.0
        %4483 = vmatpush2.msra.mxu0 0.0
        %4484 = vmatprep.subr.mxu0 0.0
        %4485 = vmatpush2.msra.mxu0 0.0
        %4486 = vmatprep.subr.mxu0 0.0
        %4487 = vmatpush2.msra.mxu0 0.0
        %4488 = vmatprep.subr.mxu0 0.0
        %4489 = vmatpush2.msra.mxu0 0.0
        %4490 = vmatprep.subr.mxu0 0.0
        %4491 = vmatpush2.msra.mxu0 0.0
        %4492 = vmatprep.mubr.f32.mxu0 0.0
        %v4493 = vand.u32 %v4272, 4294901760
        %v4494 = vsub.f32 %v4272, %v4493
        %4495 = vmatmul.mubr.f32.gmra.mxu0 %v4494
        %v4496 = vpop.f32.mrf.mxu0
        %v4497 = vadd.f32 %v4423, %v4496
        %v4498 = vpop.f32.mrf.mxu0
        %4499 = vdwg.mxu0
        %4500 = vmatprep.subr.mxu0 0.0
        %4501 = vmatpush1.msra.mxu0 0.0
        %4502 = vmatprep.subr.mxu0 0.0
        %4503 = vmatpush1.msra.mxu0 0.0
        %4504 = vmatprep.subr.mxu0 0.0
        %4505 = vmatpush1.msra.mxu0 0.0
        %4506 = vmatprep.subr.mxu0 0.0
        %4507 = vmatpush1.msra.mxu0 0.0
        %4508 = vmatprep.subr.mxu0 0.0
        %4509 = vmatpush1.msra.mxu0 0.0
        %4510 = vmatprep.subr.mxu0 0.0
        %4511 = vmatpush1.msra.mxu0 0.0
        %4512 = vmatprep.subr.mxu0 0.0
        %4513 = vmatpush1.msra.mxu0 0.0
        %4514 = vmatprep.subr.mxu0 0.0
        %4515 = vmatpush1.msra.mxu0 0.0
        %4516 = vmatprep.subr.mxu0 0.0
        %4517 = vmatpush1.msra.mxu0 0.0
        %4518 = vmatprep.subr.mxu0 0.0
        %4519 = vmatpush1.msra.mxu0 0.0
        %4520 = vmatprep.subr.mxu0 0.0
        %4521 = vmatpush1.msra.mxu0 0.0
        %4522 = vmatprep.subr.mxu0 0.0
        %4523 = vmatpush1.msra.mxu0 0.0
        %4524 = vmatprep.subr.mxu0 0.0
        %4525 = vmatpush1.msra.mxu0 0.0
        %4526 = vmatprep.subr.mxu0 0.0
        %4527 = vmatpush1.msra.mxu0 0.0
        %4528 = vmatprep.subr.mxu0 0.0
        %4529 = vmatpush1.msra.mxu0 0.0
        %4530 = vmatprep.subr.mxu0 0.0
        %v4531 = vand.u32 %v458, 4294901760
        %4532 = vmatpush1.msra.mxu0 %v4531
        %4533 = vmatprep.subr.mxu0 0.0
        %4534 = vmatpush2.msra.mxu0 0.0
        %4535 = vmatprep.subr.mxu0 0.0
        %4536 = vmatpush2.msra.mxu0 0.0
        %4537 = vmatprep.subr.mxu0 0.0
        %4538 = vmatpush2.msra.mxu0 0.0
        %4539 = vmatprep.subr.mxu0 0.0
        %4540 = vmatpush2.msra.mxu0 0.0
        %4541 = vmatprep.subr.mxu0 0.0
        %4542 = vmatpush2.msra.mxu0 0.0
        %4543 = vmatprep.subr.mxu0 0.0
        %4544 = vmatpush2.msra.mxu0 0.0
        %4545 = vmatprep.subr.mxu0 0.0
        %4546 = vmatpush2.msra.mxu0 0.0
        %4547 = vmatprep.subr.mxu0 0.0
        %4548 = vmatpush2.msra.mxu0 0.0
        %4549 = vmatprep.subr.mxu0 0.0
        %4550 = vmatpush2.msra.mxu0 0.0
        %4551 = vmatprep.subr.mxu0 0.0
        %4552 = vmatpush2.msra.mxu0 0.0
        %4553 = vmatprep.subr.mxu0 0.0
        %4554 = vmatpush2.msra.mxu0 0.0
        %4555 = vmatprep.subr.mxu0 0.0
        %4556 = vmatpush2.msra.mxu0 0.0
        %4557 = vmatprep.subr.mxu0 0.0
        %4558 = vmatpush2.msra.mxu0 0.0
        %4559 = vmatprep.subr.mxu0 0.0
        %4560 = vmatpush2.msra.mxu0 0.0
        %4561 = vmatprep.subr.mxu0 0.0
        %4562 = vmatpush2.msra.mxu0 0.0
        %4563 = vmatprep.subr.mxu0 0.0
        %4564 = vmatpush2.msra.mxu0 0.0
        %4565 = vmatprep.mubr.f32.mxu0 0.0
        %v4566 = vand.u32 %v4272, 4294901760
        %v4567 = vsub.f32 %v4272, %v4566
        %v4568 = vand.u32 %v4567, 4294901760
        %4569 = vmatmul.mubr.f32.gmra.mxu0 %v4568
        %v4570 = vpop.f32.mrf.mxu0
        %v4571 = vadd.f32 %v4497, %v4570
        %v4572 = vpop.f32.mrf.mxu0
        %4573 = vdwg.mxu0
        %4574 = vmatprep.subr.mxu0 0.0
        %4575 = vmatpush1.msra.mxu0 0.0
        %4576 = vmatprep.subr.mxu0 0.0
        %4577 = vmatpush1.msra.mxu0 0.0
        %4578 = vmatprep.subr.mxu0 0.0
        %4579 = vmatpush1.msra.mxu0 0.0
        %4580 = vmatprep.subr.mxu0 0.0
        %4581 = vmatpush1.msra.mxu0 0.0
        %4582 = vmatprep.subr.mxu0 0.0
        %4583 = vmatpush1.msra.mxu0 0.0
        %4584 = vmatprep.subr.mxu0 0.0
        %4585 = vmatpush1.msra.mxu0 0.0
        %4586 = vmatprep.subr.mxu0 0.0
        %4587 = vmatpush1.msra.mxu0 0.0
        %4588 = vmatprep.subr.mxu0 0.0
        %4589 = vmatpush1.msra.mxu0 0.0
        %4590 = vmatprep.subr.mxu0 0.0
        %4591 = vmatpush1.msra.mxu0 0.0
        %4592 = vmatprep.subr.mxu0 0.0
        %4593 = vmatpush1.msra.mxu0 0.0
        %4594 = vmatprep.subr.mxu0 0.0
        %4595 = vmatpush1.msra.mxu0 0.0
        %4596 = vmatprep.subr.mxu0 0.0
        %4597 = vmatpush1.msra.mxu0 0.0
        %4598 = vmatprep.subr.mxu0 0.0
        %4599 = vmatpush1.msra.mxu0 0.0
        %4600 = vmatprep.subr.mxu0 0.0
        %4601 = vmatpush1.msra.mxu0 0.0
        %4602 = vmatprep.subr.mxu0 0.0
        %4603 = vmatpush1.msra.mxu0 0.0
        %4604 = vmatprep.subr.mxu0 0.0
        %v4605 = vand.u32 %v458, 4294901760
        %v4606 = vsub.f32 %v458, %v4605
        %v4607 = vand.u32 %v4606, 4294901760
        %4608 = vmatpush1.msra.mxu0 %v4607
        %4609 = vmatprep.subr.mxu0 0.0
        %4610 = vmatpush2.msra.mxu0 0.0
        %4611 = vmatprep.subr.mxu0 0.0
        %4612 = vmatpush2.msra.mxu0 0.0
        %4613 = vmatprep.subr.mxu0 0.0
        %4614 = vmatpush2.msra.mxu0 0.0
        %4615 = vmatprep.subr.mxu0 0.0
        %4616 = vmatpush2.msra.mxu0 0.0
        %4617 = vmatprep.subr.mxu0 0.0
        %4618 = vmatpush2.msra.mxu0 0.0
        %4619 = vmatprep.subr.mxu0 0.0
        %4620 = vmatpush2.msra.mxu0 0.0
        %4621 = vmatprep.subr.mxu0 0.0
        %4622 = vmatpush2.msra.mxu0 0.0
        %4623 = vmatprep.subr.mxu0 0.0
        %4624 = vmatpush2.msra.mxu0 0.0
        %4625 = vmatprep.subr.mxu0 0.0
        %4626 = vmatpush2.msra.mxu0 0.0
        %4627 = vmatprep.subr.mxu0 0.0
        %4628 = vmatpush2.msra.mxu0 0.0
        %4629 = vmatprep.subr.mxu0 0.0
        %4630 = vmatpush2.msra.mxu0 0.0
        %4631 = vmatprep.subr.mxu0 0.0
        %4632 = vmatpush2.msra.mxu0 0.0
        %4633 = vmatprep.subr.mxu0 0.0
        %4634 = vmatpush2.msra.mxu0 0.0
        %4635 = vmatprep.subr.mxu0 0.0
        %4636 = vmatpush2.msra.mxu0 0.0
        %4637 = vmatprep.subr.mxu0 0.0
        %4638 = vmatpush2.msra.mxu0 0.0
        %4639 = vmatprep.subr.mxu0 0.0
        %4640 = vmatpush2.msra.mxu0 0.0
        %4641 = vmatprep.mubr.f32.mxu0 0.0
        %v4642 = vand.u32 %v4272, 4294901760
        %4643 = vmatmul.mubr.f32.gmra.mxu0 %v4642
        %v4644 = vpop.f32.mrf.mxu0
        %v4645 = vadd.f32 %v4571, %v4644
        %v4646 = vpop.f32.mrf.mxu0
        %4647 = vdwg.mxu0
        %4648 = vmatprep.subr.mxu0 0.0
        %4649 = vmatpush1.msra.mxu0 0.0
        %4650 = vmatprep.subr.mxu0 0.0
        %4651 = vmatpush1.msra.mxu0 0.0
        %4652 = vmatprep.subr.mxu0 0.0
        %4653 = vmatpush1.msra.mxu0 0.0
        %4654 = vmatprep.subr.mxu0 0.0
        %4655 = vmatpush1.msra.mxu0 0.0
        %4656 = vmatprep.subr.mxu0 0.0
        %4657 = vmatpush1.msra.mxu0 0.0
        %4658 = vmatprep.subr.mxu0 0.0
        %4659 = vmatpush1.msra.mxu0 0.0
        %4660 = vmatprep.subr.mxu0 0.0
        %4661 = vmatpush1.msra.mxu0 0.0
        %4662 = vmatprep.subr.mxu0 0.0
        %4663 = vmatpush1.msra.mxu0 0.0
        %4664 = vmatprep.subr.mxu0 0.0
        %4665 = vmatpush1.msra.mxu0 0.0
        %4666 = vmatprep.subr.mxu0 0.0
        %4667 = vmatpush1.msra.mxu0 0.0
        %4668 = vmatprep.subr.mxu0 0.0
        %4669 = vmatpush1.msra.mxu0 0.0
        %4670 = vmatprep.subr.mxu0 0.0
        %4671 = vmatpush1.msra.mxu0 0.0
        %4672 = vmatprep.subr.mxu0 0.0
        %4673 = vmatpush1.msra.mxu0 0.0
        %4674 = vmatprep.subr.mxu0 0.0
        %4675 = vmatpush1.msra.mxu0 0.0
        %4676 = vmatprep.subr.mxu0 0.0
        %4677 = vmatpush1.msra.mxu0 0.0
        %4678 = vmatprep.subr.mxu0 0.0
        %v4679 = vand.u32 %v458, 4294901760
        %4680 = vmatpush1.msra.mxu0 %v4679
        %4681 = vmatprep.subr.mxu0 0.0
        %4682 = vmatpush2.msra.mxu0 0.0
        %4683 = vmatprep.subr.mxu0 0.0
        %4684 = vmatpush2.msra.mxu0 0.0
        %4685 = vmatprep.subr.mxu0 0.0
        %4686 = vmatpush2.msra.mxu0 0.0
        %4687 = vmatprep.subr.mxu0 0.0
        %4688 = vmatpush2.msra.mxu0 0.0
        %4689 = vmatprep.subr.mxu0 0.0
        %4690 = vmatpush2.msra.mxu0 0.0
        %4691 = vmatprep.subr.mxu0 0.0
        %4692 = vmatpush2.msra.mxu0 0.0
        %4693 = vmatprep.subr.mxu0 0.0
        %4694 = vmatpush2.msra.mxu0 0.0
        %4695 = vmatprep.subr.mxu0 0.0
        %4696 = vmatpush2.msra.mxu0 0.0
        %4697 = vmatprep.subr.mxu0 0.0
        %4698 = vmatpush2.msra.mxu0 0.0
        %4699 = vmatprep.subr.mxu0 0.0
        %4700 = vmatpush2.msra.mxu0 0.0
        %4701 = vmatprep.subr.mxu0 0.0
        %4702 = vmatpush2.msra.mxu0 0.0
        %4703 = vmatprep.subr.mxu0 0.0
        %4704 = vmatpush2.msra.mxu0 0.0
        %4705 = vmatprep.subr.mxu0 0.0
        %4706 = vmatpush2.msra.mxu0 0.0
        %4707 = vmatprep.subr.mxu0 0.0
        %4708 = vmatpush2.msra.mxu0 0.0
        %4709 = vmatprep.subr.mxu0 0.0
        %4710 = vmatpush2.msra.mxu0 0.0
        %4711 = vmatprep.subr.mxu0 0.0
        %4712 = vmatpush2.msra.mxu0 0.0
        %4713 = vmatprep.mubr.f32.mxu0 0.0
        %v4714 = vand.u32 %v4272, 4294901760
        %4715 = vmatmul.mubr.f32.gmra.mxu0 %v4714
        %v4716 = vpop.f32.mrf.mxu0
        %v4717 = vadd.f32 %v4645, %v4716
        %v4718 = vpop.f32.mrf.mxu0
        %4719 = vdwg.mxu0
        %v4720 = vrcp.pop %v3818
        %v4721 = vrcp.pop %v3821
        %v4722 = vmul.f32 %v4268, %v4720
        %v4723 = vmul.f32 %v4717, %v4721
        %v4724 = vsub.f32 %v441, %v4722
        %v4725 = vsub.f32 %v441, %v4723
        %v4726 = vand.u32 2147483647, %v4724
        %v4727 = vand.u32 2147483647, %v4725
        %v4728 = vmul.f32 %v441, %v4722
        %v4729 = vmul.f32 %v441, %v4723
        %v4731 = vsel %vm461, %v4726, 0
        %v4734 = vsel %vm461, %v4727, 0
        %4736 = vmatprep.subr.mxu0 0.0
        %4737 = vmatpush1.msra.mxu0 0.0
        %4738 = vmatprep.subr.mxu0 0.0
        %4739 = vmatpush1.msra.mxu0 0.0
        %4740 = vmatprep.subr.mxu0 0.0
        %4741 = vmatpush1.msra.mxu0 0.0
        %4742 = vmatprep.subr.mxu0 0.0
        %4743 = vmatpush1.msra.mxu0 0.0
        %4744 = vmatprep.subr.mxu0 0.0
        %4745 = vmatpush1.msra.mxu0 0.0
        %4746 = vmatprep.subr.mxu0 0.0
        %4747 = vmatpush1.msra.mxu0 0.0
        %4748 = vmatprep.subr.mxu0 0.0
        %4749 = vmatpush1.msra.mxu0 0.0
        %4750 = vmatprep.subr.mxu0 0.0
        %4751 = vmatpush1.msra.mxu0 0.0
        %4752 = vmatprep.subr.mxu0 0.0
        %4753 = vmatpush1.msra.mxu0 0.0
        %4754 = vmatprep.subr.mxu0 0.0
        %4755 = vmatpush1.msra.mxu0 0.0
        %4756 = vmatprep.subr.mxu0 0.0
        %4757 = vmatpush1.msra.mxu0 0.0
        %4758 = vmatprep.subr.mxu0 0.0
        %4759 = vmatpush1.msra.mxu0 0.0
        %4760 = vmatprep.subr.mxu0 0.0
        %v4761 = vand.u32 %v450, 4294901760
        %4762 = vmatpush1.msra.mxu0 %v4761
        %4763 = vmatprep.subr.mxu0 0.0
        %v4764 = vand.u32 %v449, 4294901760
        %4765 = vmatpush1.msra.mxu0 %v4764
        %4766 = vmatprep.subr.mxu0 0.0
        %v4767 = vand.u32 %v448, 4294901760
        %4768 = vmatpush1.msra.mxu0 %v4767
        %4769 = vmatprep.subr.mxu0 0.0
        %v4770 = vand.u32 %v447, 4294901760
        %4771 = vmatpush1.msra.mxu0 %v4770
        %4772 = vmatprep.subr.mxu0 0.0
        %4773 = vmatpush2.msra.mxu0 0.0
        %4774 = vmatprep.subr.mxu0 0.0
        %4775 = vmatpush2.msra.mxu0 0.0
        %4776 = vmatprep.subr.mxu0 0.0
        %4777 = vmatpush2.msra.mxu0 0.0
        %4778 = vmatprep.subr.mxu0 0.0
        %4779 = vmatpush2.msra.mxu0 0.0
        %4780 = vmatprep.subr.mxu0 0.0
        %4781 = vmatpush2.msra.mxu0 0.0
        %4782 = vmatprep.subr.mxu0 0.0
        %4783 = vmatpush2.msra.mxu0 0.0
        %4784 = vmatprep.subr.mxu0 0.0
        %4785 = vmatpush2.msra.mxu0 0.0
        %4786 = vmatprep.subr.mxu0 0.0
        %4787 = vmatpush2.msra.mxu0 0.0
        %4788 = vmatprep.subr.mxu0 0.0
        %4789 = vmatpush2.msra.mxu0 0.0
        %4790 = vmatprep.subr.mxu0 0.0
        %4791 = vmatpush2.msra.mxu0 0.0
        %4792 = vmatprep.subr.mxu0 0.0
        %4793 = vmatpush2.msra.mxu0 0.0
        %4794 = vmatprep.subr.mxu0 0.0
        %4795 = vmatpush2.msra.mxu0 0.0
        %4796 = vmatprep.subr.mxu0 0.0
        %4797 = vmatpush2.msra.mxu0 0.0
        %4798 = vmatprep.subr.mxu0 0.0
        %4799 = vmatpush2.msra.mxu0 0.0
        %4800 = vmatprep.subr.mxu0 0.0
        %4801 = vmatpush2.msra.mxu0 0.0
        %4802 = vmatprep.subr.mxu0 0.0
        %4803 = vmatpush2.msra.mxu0 0.0
        %4804 = vmatprep.mubr.f32.mxu0 0.0
        %v4805 = vand.u32 %v4731, 4294901760
        %v4806 = vsub.f32 %v4731, %v4805
        %v4807 = vand.u32 %v4806, 4294901760
        %v4808 = vsub.f32 %v4806, %v4807
        %v4809 = vand.u32 %v4808, 4294901760
        %4810 = vmatmul.mubr.f32.gmra.mxu0 %v4809
        %v4811 = vpop.f32.mrf.mxu0
        %v4812 = vadd.f32 0.0, %v4811
        %v4813 = vpop.f32.mrf.mxu0
        %4814 = vmatprep.mubr.f32.mxu0 0.0
        %v4815 = vand.u32 %v4734, 4294901760
        %v4816 = vsub.f32 %v4734, %v4815
        %v4817 = vand.u32 %v4816, 4294901760
        %v4818 = vsub.f32 %v4816, %v4817
        %v4819 = vand.u32 %v4818, 4294901760
        %4820 = vmatmul.mubr.f32.gmra.mxu0 %v4819
        %v4821 = vpop.f32.mrf.mxu0
        %v4822 = vadd.f32 0.0, %v4821
        %v4823 = vpop.f32.mrf.mxu0
        %4824 = vdwg.mxu0
        %4825 = vmatprep.subr.mxu0 0.0
        %4826 = vmatpush1.msra.mxu0 0.0
        %4827 = vmatprep.subr.mxu0 0.0
        %4828 = vmatpush1.msra.mxu0 0.0
        %4829 = vmatprep.subr.mxu0 0.0
        %4830 = vmatpush1.msra.mxu0 0.0
        %4831 = vmatprep.subr.mxu0 0.0
        %4832 = vmatpush1.msra.mxu0 0.0
        %4833 = vmatprep.subr.mxu0 0.0
        %4834 = vmatpush1.msra.mxu0 0.0
        %4835 = vmatprep.subr.mxu0 0.0
        %4836 = vmatpush1.msra.mxu0 0.0
        %4837 = vmatprep.subr.mxu0 0.0
        %4838 = vmatpush1.msra.mxu0 0.0
        %4839 = vmatprep.subr.mxu0 0.0
        %4840 = vmatpush1.msra.mxu0 0.0
        %4841 = vmatprep.subr.mxu0 0.0
        %4842 = vmatpush1.msra.mxu0 0.0
        %4843 = vmatprep.subr.mxu0 0.0
        %4844 = vmatpush1.msra.mxu0 0.0
        %4845 = vmatprep.subr.mxu0 0.0
        %4846 = vmatpush1.msra.mxu0 0.0
        %4847 = vmatprep.subr.mxu0 0.0
        %4848 = vmatpush1.msra.mxu0 0.0
        %4849 = vmatprep.subr.mxu0 0.0
        %v4850 = vand.u32 %v450, 4294901760
        %v4851 = vsub.f32 %v450, %v4850
        %v4852 = vand.u32 %v4851, 4294901760
        %v4853 = vsub.f32 %v4851, %v4852
        %v4854 = vand.u32 %v4853, 4294901760
        %4855 = vmatpush1.msra.mxu0 %v4854
        %4856 = vmatprep.subr.mxu0 0.0
        %v4857 = vand.u32 %v449, 4294901760
        %v4858 = vsub.f32 %v449, %v4857
        %v4859 = vand.u32 %v4858, 4294901760
        %v4860 = vsub.f32 %v4858, %v4859
        %v4861 = vand.u32 %v4860, 4294901760
        %4862 = vmatpush1.msra.mxu0 %v4861
        %4863 = vmatprep.subr.mxu0 0.0
        %v4864 = vand.u32 %v448, 4294901760
        %v4865 = vsub.f32 %v448, %v4864
        %v4866 = vand.u32 %v4865, 4294901760
        %v4867 = vsub.f32 %v4865, %v4866
        %v4868 = vand.u32 %v4867, 4294901760
        %4869 = vmatpush1.msra.mxu0 %v4868
        %4870 = vmatprep.subr.mxu0 0.0
        %v4871 = vand.u32 %v447, 4294901760
        %v4872 = vsub.f32 %v447, %v4871
        %v4873 = vand.u32 %v4872, 4294901760
        %v4874 = vsub.f32 %v4872, %v4873
        %v4875 = vand.u32 %v4874, 4294901760
        %4876 = vmatpush1.msra.mxu0 %v4875
        %4877 = vmatprep.subr.mxu0 0.0
        %4878 = vmatpush2.msra.mxu0 0.0
        %4879 = vmatprep.subr.mxu0 0.0
        %4880 = vmatpush2.msra.mxu0 0.0
        %4881 = vmatprep.subr.mxu0 0.0
        %4882 = vmatpush2.msra.mxu0 0.0
        %4883 = vmatprep.subr.mxu0 0.0
        %4884 = vmatpush2.msra.mxu0 0.0
        %4885 = vmatprep.subr.mxu0 0.0
        %4886 = vmatpush2.msra.mxu0 0.0
        %4887 = vmatprep.subr.mxu0 0.0
        %4888 = vmatpush2.msra.mxu0 0.0
        %4889 = vmatprep.subr.mxu0 0.0
        %4890 = vmatpush2.msra.mxu0 0.0
        %4891 = vmatprep.subr.mxu0 0.0
        %4892 = vmatpush2.msra.mxu0 0.0
        %4893 = vmatprep.subr.mxu0 0.0
        %4894 = vmatpush2.msra.mxu0 0.0
        %4895 = vmatprep.subr.mxu0 0.0
        %4896 = vmatpush2.msra.mxu0 0.0
        %4897 = vmatprep.subr.mxu0 0.0
        %4898 = vmatpush2.msra.mxu0 0.0
        %4899 = vmatprep.subr.mxu0 0.0
        %4900 = vmatpush2.msra.mxu0 0.0
        %4901 = vmatprep.subr.mxu0 0.0
        %4902 = vmatpush2.msra.mxu0 0.0
        %4903 = vmatprep.subr.mxu0 0.0
        %4904 = vmatpush2.msra.mxu0 0.0
        %4905 = vmatprep.subr.mxu0 0.0
        %4906 = vmatpush2.msra.mxu0 0.0
        %4907 = vmatprep.subr.mxu0 0.0
        %4908 = vmatpush2.msra.mxu0 0.0
        %4909 = vmatprep.mubr.f32.mxu0 0.0
        %v4910 = vand.u32 %v4731, 4294901760
        %4911 = vmatmul.mubr.f32.gmra.mxu0 %v4910
        %v4912 = vpop.f32.mrf.mxu0
        %v4913 = vadd.f32 %v4812, %v4912
        %v4914 = vpop.f32.mrf.mxu0
        %4915 = vmatprep.mubr.f32.mxu0 0.0
        %v4916 = vand.u32 %v4734, 4294901760
        %4917 = vmatmul.mubr.f32.gmra.mxu0 %v4916
        %v4918 = vpop.f32.mrf.mxu0
        %v4919 = vadd.f32 %v4822, %v4918
        %v4920 = vpop.f32.mrf.mxu0
        %4921 = vdwg.mxu0
        %4922 = vmatprep.subr.mxu0 0.0
        %4923 = vmatpush1.msra.mxu0 0.0
        %4924 = vmatprep.subr.mxu0 0.0
        %4925 = vmatpush1.msra.mxu0 0.0
        %4926 = vmatprep.subr.mxu0 0.0
        %4927 = vmatpush1.msra.mxu0 0.0
        %4928 = vmatprep.subr.mxu0 0.0
        %4929 = vmatpush1.msra.mxu0 0.0
        %4930 = vmatprep.subr.mxu0 0.0
        %4931 = vmatpush1.msra.mxu0 0.0
        %4932 = vmatprep.subr.mxu0 0.0
        %4933 = vmatpush1.msra.mxu0 0.0
        %4934 = vmatprep.subr.mxu0 0.0
        %4935 = vmatpush1.msra.mxu0 0.0
        %4936 = vmatprep.subr.mxu0 0.0
        %4937 = vmatpush1.msra.mxu0 0.0
        %4938 = vmatprep.subr.mxu0 0.0
        %4939 = vmatpush1.msra.mxu0 0.0
        %4940 = vmatprep.subr.mxu0 0.0
        %4941 = vmatpush1.msra.mxu0 0.0
        %4942 = vmatprep.subr.mxu0 0.0
        %4943 = vmatpush1.msra.mxu0 0.0
        %4944 = vmatprep.subr.mxu0 0.0
        %4945 = vmatpush1.msra.mxu0 0.0
        %4946 = vmatprep.subr.mxu0 0.0
        %v4947 = vand.u32 %v450, 4294901760
        %v4948 = vsub.f32 %v450, %v4947
        %4949 = vmatpush1.msra.mxu0 %v4948
        %4950 = vmatprep.subr.mxu0 0.0
        %v4951 = vand.u32 %v449, 4294901760
        %v4952 = vsub.f32 %v449, %v4951
        %4953 = vmatpush1.msra.mxu0 %v4952
        %4954 = vmatprep.subr.mxu0 0.0
        %v4955 = vand.u32 %v448, 4294901760
        %v4956 = vsub.f32 %v448, %v4955
        %4957 = vmatpush1.msra.mxu0 %v4956
        %4958 = vmatprep.subr.mxu0 0.0
        %v4959 = vand.u32 %v447, 4294901760
        %v4960 = vsub.f32 %v447, %v4959
        %4961 = vmatpush1.msra.mxu0 %v4960
        %4962 = vmatprep.subr.mxu0 0.0
        %4963 = vmatpush2.msra.mxu0 0.0
        %4964 = vmatprep.subr.mxu0 0.0
        %4965 = vmatpush2.msra.mxu0 0.0
        %4966 = vmatprep.subr.mxu0 0.0
        %4967 = vmatpush2.msra.mxu0 0.0
        %4968 = vmatprep.subr.mxu0 0.0
        %4969 = vmatpush2.msra.mxu0 0.0
        %4970 = vmatprep.subr.mxu0 0.0
        %4971 = vmatpush2.msra.mxu0 0.0
        %4972 = vmatprep.subr.mxu0 0.0
        %4973 = vmatpush2.msra.mxu0 0.0
        %4974 = vmatprep.subr.mxu0 0.0
        %4975 = vmatpush2.msra.mxu0 0.0
        %4976 = vmatprep.subr.mxu0 0.0
        %4977 = vmatpush2.msra.mxu0 0.0
        %4978 = vmatprep.subr.mxu0 0.0
        %4979 = vmatpush2.msra.mxu0 0.0
        %4980 = vmatprep.subr.mxu0 0.0
        %4981 = vmatpush2.msra.mxu0 0.0
        %4982 = vmatprep.subr.mxu0 0.0
        %4983 = vmatpush2.msra.mxu0 0.0
        %4984 = vmatprep.subr.mxu0 0.0
        %4985 = vmatpush2.msra.mxu0 0.0
        %4986 = vmatprep.subr.mxu0 0.0
        %4987 = vmatpush2.msra.mxu0 0.0
        %4988 = vmatprep.subr.mxu0 0.0
        %4989 = vmatpush2.msra.mxu0 0.0
        %4990 = vmatprep.subr.mxu0 0.0
        %4991 = vmatpush2.msra.mxu0 0.0
        %4992 = vmatprep.subr.mxu0 0.0
        %4993 = vmatpush2.msra.mxu0 0.0
        %4994 = vmatprep.mubr.f32.mxu0 0.0
        %v4995 = vand.u32 %v4731, 4294901760
        %v4996 = vsub.f32 %v4731, %v4995
        %4997 = vmatmul.mubr.f32.gmra.mxu0 %v4996
        %v4998 = vpop.f32.mrf.mxu0
        %v4999 = vadd.f32 %v4913, %v4998
        %v5000 = vpop.f32.mrf.mxu0
        %5001 = vmatprep.mubr.f32.mxu0 0.0
        %v5002 = vand.u32 %v4734, 4294901760
        %v5003 = vsub.f32 %v4734, %v5002
        %5004 = vmatmul.mubr.f32.gmra.mxu0 %v5003
        %v5005 = vpop.f32.mrf.mxu0
        %v5006 = vadd.f32 %v4919, %v5005
        %v5007 = vpop.f32.mrf.mxu0
        %5008 = vdwg.mxu0
        %5009 = vmatprep.subr.mxu0 0.0
        %5010 = vmatpush1.msra.mxu0 0.0
        %5011 = vmatprep.subr.mxu0 0.0
        %5012 = vmatpush1.msra.mxu0 0.0
        %5013 = vmatprep.subr.mxu0 0.0
        %5014 = vmatpush1.msra.mxu0 0.0
        %5015 = vmatprep.subr.mxu0 0.0
        %5016 = vmatpush1.msra.mxu0 0.0
        %5017 = vmatprep.subr.mxu0 0.0
        %5018 = vmatpush1.msra.mxu0 0.0
        %5019 = vmatprep.subr.mxu0 0.0
        %5020 = vmatpush1.msra.mxu0 0.0
        %5021 = vmatprep.subr.mxu0 0.0
        %5022 = vmatpush1.msra.mxu0 0.0
        %5023 = vmatprep.subr.mxu0 0.0
        %5024 = vmatpush1.msra.mxu0 0.0
        %5025 = vmatprep.subr.mxu0 0.0
        %5026 = vmatpush1.msra.mxu0 0.0
        %5027 = vmatprep.subr.mxu0 0.0
        %5028 = vmatpush1.msra.mxu0 0.0
        %5029 = vmatprep.subr.mxu0 0.0
        %5030 = vmatpush1.msra.mxu0 0.0
        %5031 = vmatprep.subr.mxu0 0.0
        %5032 = vmatpush1.msra.mxu0 0.0
        %5033 = vmatprep.subr.mxu0 0.0
        %v5034 = vand.u32 %v450, 4294901760
        %5035 = vmatpush1.msra.mxu0 %v5034
        %5036 = vmatprep.subr.mxu0 0.0
        %v5037 = vand.u32 %v449, 4294901760
        %5038 = vmatpush1.msra.mxu0 %v5037
        %5039 = vmatprep.subr.mxu0 0.0
        %v5040 = vand.u32 %v448, 4294901760
        %5041 = vmatpush1.msra.mxu0 %v5040
        %5042 = vmatprep.subr.mxu0 0.0
        %v5043 = vand.u32 %v447, 4294901760
        %5044 = vmatpush1.msra.mxu0 %v5043
        %5045 = vmatprep.subr.mxu0 0.0
        %5046 = vmatpush2.msra.mxu0 0.0
        %5047 = vmatprep.subr.mxu0 0.0
        %5048 = vmatpush2.msra.mxu0 0.0
        %5049 = vmatprep.subr.mxu0 0.0
        %5050 = vmatpush2.msra.mxu0 0.0
        %5051 = vmatprep.subr.mxu0 0.0
        %5052 = vmatpush2.msra.mxu0 0.0
        %5053 = vmatprep.subr.mxu0 0.0
        %5054 = vmatpush2.msra.mxu0 0.0
        %5055 = vmatprep.subr.mxu0 0.0
        %5056 = vmatpush2.msra.mxu0 0.0
        %5057 = vmatprep.subr.mxu0 0.0
        %5058 = vmatpush2.msra.mxu0 0.0
        %5059 = vmatprep.subr.mxu0 0.0
        %5060 = vmatpush2.msra.mxu0 0.0
        %5061 = vmatprep.subr.mxu0 0.0
        %5062 = vmatpush2.msra.mxu0 0.0
        %5063 = vmatprep.subr.mxu0 0.0
        %5064 = vmatpush2.msra.mxu0 0.0
        %5065 = vmatprep.subr.mxu0 0.0
        %5066 = vmatpush2.msra.mxu0 0.0
        %5067 = vmatprep.subr.mxu0 0.0
        %5068 = vmatpush2.msra.mxu0 0.0
        %5069 = vmatprep.subr.mxu0 0.0
        %5070 = vmatpush2.msra.mxu0 0.0
        %5071 = vmatprep.subr.mxu0 0.0
        %5072 = vmatpush2.msra.mxu0 0.0
        %5073 = vmatprep.subr.mxu0 0.0
        %5074 = vmatpush2.msra.mxu0 0.0
        %5075 = vmatprep.subr.mxu0 0.0
        %5076 = vmatpush2.msra.mxu0 0.0
        %5077 = vmatprep.mubr.f32.mxu0 0.0
        %v5078 = vand.u32 %v4731, 4294901760
        %v5079 = vsub.f32 %v4731, %v5078
        %v5080 = vand.u32 %v5079, 4294901760
        %5081 = vmatmul.mubr.f32.gmra.mxu0 %v5080
        %v5082 = vpop.f32.mrf.mxu0
        %v5083 = vadd.f32 %v4999, %v5082
        %v5084 = vpop.f32.mrf.mxu0
        %5085 = vmatprep.mubr.f32.mxu0 0.0
        %v5086 = vand.u32 %v4734, 4294901760
        %v5087 = vsub.f32 %v4734, %v5086
        %v5088 = vand.u32 %v5087, 4294901760
        %5089 = vmatmul.mubr.f32.gmra.mxu0 %v5088
        %v5090 = vpop.f32.mrf.mxu0
        %v5091 = vadd.f32 %v5006, %v5090
        %v5092 = vpop.f32.mrf.mxu0
        %5093 = vdwg.mxu0
        %5094 = vmatprep.subr.mxu0 0.0
        %5095 = vmatpush1.msra.mxu0 0.0
        %5096 = vmatprep.subr.mxu0 0.0
        %5097 = vmatpush1.msra.mxu0 0.0
        %5098 = vmatprep.subr.mxu0 0.0
        %5099 = vmatpush1.msra.mxu0 0.0
        %5100 = vmatprep.subr.mxu0 0.0
        %5101 = vmatpush1.msra.mxu0 0.0
        %5102 = vmatprep.subr.mxu0 0.0
        %5103 = vmatpush1.msra.mxu0 0.0
        %5104 = vmatprep.subr.mxu0 0.0
        %5105 = vmatpush1.msra.mxu0 0.0
        %5106 = vmatprep.subr.mxu0 0.0
        %5107 = vmatpush1.msra.mxu0 0.0
        %5108 = vmatprep.subr.mxu0 0.0
        %5109 = vmatpush1.msra.mxu0 0.0
        %5110 = vmatprep.subr.mxu0 0.0
        %5111 = vmatpush1.msra.mxu0 0.0
        %5112 = vmatprep.subr.mxu0 0.0
        %5113 = vmatpush1.msra.mxu0 0.0
        %5114 = vmatprep.subr.mxu0 0.0
        %5115 = vmatpush1.msra.mxu0 0.0
        %5116 = vmatprep.subr.mxu0 0.0
        %5117 = vmatpush1.msra.mxu0 0.0
        %5118 = vmatprep.subr.mxu0 0.0
        %v5119 = vand.u32 %v450, 4294901760
        %v5120 = vsub.f32 %v450, %v5119
        %v5121 = vand.u32 %v5120, 4294901760
        %5122 = vmatpush1.msra.mxu0 %v5121
        %5123 = vmatprep.subr.mxu0 0.0
        %v5124 = vand.u32 %v449, 4294901760
        %v5125 = vsub.f32 %v449, %v5124
        %v5126 = vand.u32 %v5125, 4294901760
        %5127 = vmatpush1.msra.mxu0 %v5126
        %5128 = vmatprep.subr.mxu0 0.0
        %v5129 = vand.u32 %v448, 4294901760
        %v5130 = vsub.f32 %v448, %v5129
        %v5131 = vand.u32 %v5130, 4294901760
        %5132 = vmatpush1.msra.mxu0 %v5131
        %5133 = vmatprep.subr.mxu0 0.0
        %v5134 = vand.u32 %v447, 4294901760
        %v5135 = vsub.f32 %v447, %v5134
        %v5136 = vand.u32 %v5135, 4294901760
        %5137 = vmatpush1.msra.mxu0 %v5136
        %5138 = vmatprep.subr.mxu0 0.0
        %5139 = vmatpush2.msra.mxu0 0.0
        %5140 = vmatprep.subr.mxu0 0.0
        %5141 = vmatpush2.msra.mxu0 0.0
        %5142 = vmatprep.subr.mxu0 0.0
        %5143 = vmatpush2.msra.mxu0 0.0
        %5144 = vmatprep.subr.mxu0 0.0
        %5145 = vmatpush2.msra.mxu0 0.0
        %5146 = vmatprep.subr.mxu0 0.0
        %5147 = vmatpush2.msra.mxu0 0.0
        %5148 = vmatprep.subr.mxu0 0.0
        %5149 = vmatpush2.msra.mxu0 0.0
        %5150 = vmatprep.subr.mxu0 0.0
        %5151 = vmatpush2.msra.mxu0 0.0
        %5152 = vmatprep.subr.mxu0 0.0
        %5153 = vmatpush2.msra.mxu0 0.0
        %5154 = vmatprep.subr.mxu0 0.0
        %5155 = vmatpush2.msra.mxu0 0.0
        %5156 = vmatprep.subr.mxu0 0.0
        %5157 = vmatpush2.msra.mxu0 0.0
        %5158 = vmatprep.subr.mxu0 0.0
        %5159 = vmatpush2.msra.mxu0 0.0
        %5160 = vmatprep.subr.mxu0 0.0
        %5161 = vmatpush2.msra.mxu0 0.0
        %5162 = vmatprep.subr.mxu0 0.0
        %5163 = vmatpush2.msra.mxu0 0.0
        %5164 = vmatprep.subr.mxu0 0.0
        %5165 = vmatpush2.msra.mxu0 0.0
        %5166 = vmatprep.subr.mxu0 0.0
        %5167 = vmatpush2.msra.mxu0 0.0
        %5168 = vmatprep.subr.mxu0 0.0
        %5169 = vmatpush2.msra.mxu0 0.0
        %5170 = vmatprep.mubr.f32.mxu0 0.0
        %v5171 = vand.u32 %v4731, 4294901760
        %5172 = vmatmul.mubr.f32.gmra.mxu0 %v5171
        %v5173 = vpop.f32.mrf.mxu0
        %v5174 = vadd.f32 %v5083, %v5173
        %v5175 = vpop.f32.mrf.mxu0
        %5176 = vmatprep.mubr.f32.mxu0 0.0
        %v5177 = vand.u32 %v4734, 4294901760
        %5178 = vmatmul.mubr.f32.gmra.mxu0 %v5177
        %v5179 = vpop.f32.mrf.mxu0
        %v5180 = vadd.f32 %v5091, %v5179
        %v5181 = vpop.f32.mrf.mxu0
        %5182 = vdwg.mxu0
        %5183 = vmatprep.subr.mxu0 0.0
        %5184 = vmatpush1.msra.mxu0 0.0
        %5185 = vmatprep.subr.mxu0 0.0
        %5186 = vmatpush1.msra.mxu0 0.0
        %5187 = vmatprep.subr.mxu0 0.0
        %5188 = vmatpush1.msra.mxu0 0.0
        %5189 = vmatprep.subr.mxu0 0.0
        %5190 = vmatpush1.msra.mxu0 0.0
        %5191 = vmatprep.subr.mxu0 0.0
        %5192 = vmatpush1.msra.mxu0 0.0
        %5193 = vmatprep.subr.mxu0 0.0
        %5194 = vmatpush1.msra.mxu0 0.0
        %5195 = vmatprep.subr.mxu0 0.0
        %5196 = vmatpush1.msra.mxu0 0.0
        %5197 = vmatprep.subr.mxu0 0.0
        %5198 = vmatpush1.msra.mxu0 0.0
        %5199 = vmatprep.subr.mxu0 0.0
        %5200 = vmatpush1.msra.mxu0 0.0
        %5201 = vmatprep.subr.mxu0 0.0
        %5202 = vmatpush1.msra.mxu0 0.0
        %5203 = vmatprep.subr.mxu0 0.0
        %5204 = vmatpush1.msra.mxu0 0.0
        %5205 = vmatprep.subr.mxu0 0.0
        %5206 = vmatpush1.msra.mxu0 0.0
        %5207 = vmatprep.subr.mxu0 0.0
        %v5208 = vand.u32 %v450, 4294901760
        %5209 = vmatpush1.msra.mxu0 %v5208
        %5210 = vmatprep.subr.mxu0 0.0
        %v5211 = vand.u32 %v449, 4294901760
        %5212 = vmatpush1.msra.mxu0 %v5211
        %5213 = vmatprep.subr.mxu0 0.0
        %v5214 = vand.u32 %v448, 4294901760
        %5215 = vmatpush1.msra.mxu0 %v5214
        %5216 = vmatprep.subr.mxu0 0.0
        %v5217 = vand.u32 %v447, 4294901760
        %5218 = vmatpush1.msra.mxu0 %v5217
        %5219 = vmatprep.subr.mxu0 0.0
        %5220 = vmatpush2.msra.mxu0 0.0
        %5221 = vmatprep.subr.mxu0 0.0
        %5222 = vmatpush2.msra.mxu0 0.0
        %5223 = vmatprep.subr.mxu0 0.0
        %5224 = vmatpush2.msra.mxu0 0.0
        %5225 = vmatprep.subr.mxu0 0.0
        %5226 = vmatpush2.msra.mxu0 0.0
        %5227 = vmatprep.subr.mxu0 0.0
        %5228 = vmatpush2.msra.mxu0 0.0
        %5229 = vmatprep.subr.mxu0 0.0
        %5230 = vmatpush2.msra.mxu0 0.0
        %5231 = vmatprep.subr.mxu0 0.0
        %5232 = vmatpush2.msra.mxu0 0.0
        %5233 = vmatprep.subr.mxu0 0.0
        %5234 = vmatpush2.msra.mxu0 0.0
        %5235 = vmatprep.subr.mxu0 0.0
        %5236 = vmatpush2.msra.mxu0 0.0
        %5237 = vmatprep.subr.mxu0 0.0
        %5238 = vmatpush2.msra.mxu0 0.0
        %5239 = vmatprep.subr.mxu0 0.0
        %5240 = vmatpush2.msra.mxu0 0.0
        %5241 = vmatprep.subr.mxu0 0.0
        %5242 = vmatpush2.msra.mxu0 0.0
        %5243 = vmatprep.subr.mxu0 0.0
        %5244 = vmatpush2.msra.mxu0 0.0
        %5245 = vmatprep.subr.mxu0 0.0
        %5246 = vmatpush2.msra.mxu0 0.0
        %5247 = vmatprep.subr.mxu0 0.0
        %5248 = vmatpush2.msra.mxu0 0.0
        %5249 = vmatprep.subr.mxu0 0.0
        %5250 = vmatpush2.msra.mxu0 0.0
        %5251 = vmatprep.mubr.f32.mxu0 0.0
        %v5252 = vand.u32 %v4731, 4294901760
        %5253 = vmatmul.mubr.f32.gmra.mxu0 %v5252
        %v5254 = vpop.f32.mrf.mxu0
        %v5255 = vadd.f32 %v5174, %v5254
        %v5256 = vpop.f32.mrf.mxu0
        %5257 = vmatprep.mubr.f32.mxu0 0.0
        %v5258 = vand.u32 %v4734, 4294901760
        %5259 = vmatmul.mubr.f32.gmra.mxu0 %v5258
        %v5260 = vpop.f32.mrf.mxu0
        %v5261 = vadd.f32 %v5180, %v5260
        %v5262 = vpop.f32.mrf.mxu0
        %5263 = vdwg.mxu0
        %v5265 = vsel %vm461, %v4722, 0
        %v5268 = vsel %vm461, %v4723, 0
        %5270 = vmatprep.subr.mxu0 0.0
        %5271 = vmatpush1.msra.mxu0 0.0
        %5272 = vmatprep.subr.mxu0 0.0
        %5273 = vmatpush1.msra.mxu0 0.0
        %5274 = vmatprep.subr.mxu0 0.0
        %5275 = vmatpush1.msra.mxu0 0.0
        %5276 = vmatprep.subr.mxu0 0.0
        %5277 = vmatpush1.msra.mxu0 0.0
        %5278 = vmatprep.subr.mxu0 0.0
        %5279 = vmatpush1.msra.mxu0 0.0
        %5280 = vmatprep.subr.mxu0 0.0
        %5281 = vmatpush1.msra.mxu0 0.0
        %5282 = vmatprep.subr.mxu0 0.0
        %5283 = vmatpush1.msra.mxu0 0.0
        %5284 = vmatprep.subr.mxu0 0.0
        %5285 = vmatpush1.msra.mxu0 0.0
        %5286 = vmatprep.subr.mxu0 0.0
        %5287 = vmatpush1.msra.mxu0 0.0
        %5288 = vmatprep.subr.mxu0 0.0
        %5289 = vmatpush1.msra.mxu0 0.0
        %5290 = vmatprep.subr.mxu0 0.0
        %5291 = vmatpush1.msra.mxu0 0.0
        %5292 = vmatprep.subr.mxu0 0.0
        %5293 = vmatpush1.msra.mxu0 0.0
        %5294 = vmatprep.subr.mxu0 0.0
        %v5295 = vand.u32 %v446, 4294901760
        %5296 = vmatpush1.msra.mxu0 %v5295
        %5297 = vmatprep.subr.mxu0 0.0
        %v5298 = vand.u32 %v445, 4294901760
        %5299 = vmatpush1.msra.mxu0 %v5298
        %5300 = vmatprep.subr.mxu0 0.0
        %v5301 = vand.u32 %v444, 4294901760
        %5302 = vmatpush1.msra.mxu0 %v5301
        %5303 = vmatprep.subr.mxu0 0.0
        %v5304 = vand.u32 %v443, 4294901760
        %5305 = vmatpush1.msra.mxu0 %v5304
        %5306 = vmatprep.subr.mxu0 0.0
        %5307 = vmatpush2.msra.mxu0 0.0
        %5308 = vmatprep.subr.mxu0 0.0
        %5309 = vmatpush2.msra.mxu0 0.0
        %5310 = vmatprep.subr.mxu0 0.0
        %5311 = vmatpush2.msra.mxu0 0.0
        %5312 = vmatprep.subr.mxu0 0.0
        %5313 = vmatpush2.msra.mxu0 0.0
        %5314 = vmatprep.subr.mxu0 0.0
        %5315 = vmatpush2.msra.mxu0 0.0
        %5316 = vmatprep.subr.mxu0 0.0
        %5317 = vmatpush2.msra.mxu0 0.0
        %5318 = vmatprep.subr.mxu0 0.0
        %5319 = vmatpush2.msra.mxu0 0.0
        %5320 = vmatprep.subr.mxu0 0.0
        %5321 = vmatpush2.msra.mxu0 0.0
        %5322 = vmatprep.subr.mxu0 0.0
        %5323 = vmatpush2.msra.mxu0 0.0
        %5324 = vmatprep.subr.mxu0 0.0
        %5325 = vmatpush2.msra.mxu0 0.0
        %5326 = vmatprep.subr.mxu0 0.0
        %5327 = vmatpush2.msra.mxu0 0.0
        %5328 = vmatprep.subr.mxu0 0.0
        %5329 = vmatpush2.msra.mxu0 0.0
        %5330 = vmatprep.subr.mxu0 0.0
        %5331 = vmatpush2.msra.mxu0 0.0
        %5332 = vmatprep.subr.mxu0 0.0
        %5333 = vmatpush2.msra.mxu0 0.0
        %5334 = vmatprep.subr.mxu0 0.0
        %5335 = vmatpush2.msra.mxu0 0.0
        %5336 = vmatprep.subr.mxu0 0.0
        %5337 = vmatpush2.msra.mxu0 0.0
        %5338 = vmatprep.mubr.f32.mxu0 0.0
        %v5339 = vand.u32 %v5265, 4294901760
        %v5340 = vsub.f32 %v5265, %v5339
        %v5341 = vand.u32 %v5340, 4294901760
        %v5342 = vsub.f32 %v5340, %v5341
        %v5343 = vand.u32 %v5342, 4294901760
        %5344 = vmatmul.mubr.f32.gmra.mxu0 %v5343
        %v5345 = vpop.f32.mrf.mxu0
        %v5346 = vadd.f32 %v5255, %v5345
        %v5347 = vpop.f32.mrf.mxu0
        %5348 = vmatprep.mubr.f32.mxu0 0.0
        %v5349 = vand.u32 %v5268, 4294901760
        %v5350 = vsub.f32 %v5268, %v5349
        %v5351 = vand.u32 %v5350, 4294901760
        %v5352 = vsub.f32 %v5350, %v5351
        %v5353 = vand.u32 %v5352, 4294901760
        %5354 = vmatmul.mubr.f32.gmra.mxu0 %v5353
        %v5355 = vpop.f32.mrf.mxu0
        %v5356 = vadd.f32 %v5261, %v5355
        %v5357 = vpop.f32.mrf.mxu0
        %5358 = vdwg.mxu0
        %5359 = vmatprep.subr.mxu0 0.0
        %5360 = vmatpush1.msra.mxu0 0.0
        %5361 = vmatprep.subr.mxu0 0.0
        %5362 = vmatpush1.msra.mxu0 0.0
        %5363 = vmatprep.subr.mxu0 0.0
        %5364 = vmatpush1.msra.mxu0 0.0
        %5365 = vmatprep.subr.mxu0 0.0
        %5366 = vmatpush1.msra.mxu0 0.0
        %5367 = vmatprep.subr.mxu0 0.0
        %5368 = vmatpush1.msra.mxu0 0.0
        %5369 = vmatprep.subr.mxu0 0.0
        %5370 = vmatpush1.msra.mxu0 0.0
        %5371 = vmatprep.subr.mxu0 0.0
        %5372 = vmatpush1.msra.mxu0 0.0
        %5373 = vmatprep.subr.mxu0 0.0
        %5374 = vmatpush1.msra.mxu0 0.0
        %5375 = vmatprep.subr.mxu0 0.0
        %5376 = vmatpush1.msra.mxu0 0.0
        %5377 = vmatprep.subr.mxu0 0.0
        %5378 = vmatpush1.msra.mxu0 0.0
        %5379 = vmatprep.subr.mxu0 0.0
        %5380 = vmatpush1.msra.mxu0 0.0
        %5381 = vmatprep.subr.mxu0 0.0
        %5382 = vmatpush1.msra.mxu0 0.0
        %5383 = vmatprep.subr.mxu0 0.0
        %v5384 = vand.u32 %v446, 4294901760
        %v5385 = vsub.f32 %v446, %v5384
        %v5386 = vand.u32 %v5385, 4294901760
        %v5387 = vsub.f32 %v5385, %v5386
        %v5388 = vand.u32 %v5387, 4294901760
        %5389 = vmatpush1.msra.mxu0 %v5388
        %5390 = vmatprep.subr.mxu0 0.0
        %v5391 = vand.u32 %v445, 4294901760
        %v5392 = vsub.f32 %v445, %v5391
        %v5393 = vand.u32 %v5392, 4294901760
        %v5394 = vsub.f32 %v5392, %v5393
        %v5395 = vand.u32 %v5394, 4294901760
        %5396 = vmatpush1.msra.mxu0 %v5395
        %5397 = vmatprep.subr.mxu0 0.0
        %v5398 = vand.u32 %v444, 4294901760
        %v5399 = vsub.f32 %v444, %v5398
        %v5400 = vand.u32 %v5399, 4294901760
        %v5401 = vsub.f32 %v5399, %v5400
        %v5402 = vand.u32 %v5401, 4294901760
        %5403 = vmatpush1.msra.mxu0 %v5402
        %5404 = vmatprep.subr.mxu0 0.0
        %v5405 = vand.u32 %v443, 4294901760
        %v5406 = vsub.f32 %v443, %v5405
        %v5407 = vand.u32 %v5406, 4294901760
        %v5408 = vsub.f32 %v5406, %v5407
        %v5409 = vand.u32 %v5408, 4294901760
        %5410 = vmatpush1.msra.mxu0 %v5409
        %5411 = vmatprep.subr.mxu0 0.0
        %5412 = vmatpush2.msra.mxu0 0.0
        %5413 = vmatprep.subr.mxu0 0.0
        %5414 = vmatpush2.msra.mxu0 0.0
        %5415 = vmatprep.subr.mxu0 0.0
        %5416 = vmatpush2.msra.mxu0 0.0
        %5417 = vmatprep.subr.mxu0 0.0
        %5418 = vmatpush2.msra.mxu0 0.0
        %5419 = vmatprep.subr.mxu0 0.0
        %5420 = vmatpush2.msra.mxu0 0.0
        %5421 = vmatprep.subr.mxu0 0.0
        %5422 = vmatpush2.msra.mxu0 0.0
        %5423 = vmatprep.subr.mxu0 0.0
        %5424 = vmatpush2.msra.mxu0 0.0
        %5425 = vmatprep.subr.mxu0 0.0
        %5426 = vmatpush2.msra.mxu0 0.0
        %5427 = vmatprep.subr.mxu0 0.0
        %5428 = vmatpush2.msra.mxu0 0.0
        %5429 = vmatprep.subr.mxu0 0.0
        %5430 = vmatpush2.msra.mxu0 0.0
        %5431 = vmatprep.subr.mxu0 0.0
        %5432 = vmatpush2.msra.mxu0 0.0
        %5433 = vmatprep.subr.mxu0 0.0
        %5434 = vmatpush2.msra.mxu0 0.0
        %5435 = vmatprep.subr.mxu0 0.0
        %5436 = vmatpush2.msra.mxu0 0.0
        %5437 = vmatprep.subr.mxu0 0.0
        %5438 = vmatpush2.msra.mxu0 0.0
        %5439 = vmatprep.subr.mxu0 0.0
        %5440 = vmatpush2.msra.mxu0 0.0
        %5441 = vmatprep.subr.mxu0 0.0
        %5442 = vmatpush2.msra.mxu0 0.0
        %5443 = vmatprep.mubr.f32.mxu0 0.0
        %v5444 = vand.u32 %v5265, 4294901760
        %5445 = vmatmul.mubr.f32.gmra.mxu0 %v5444
        %v5446 = vpop.f32.mrf.mxu0
        %v5447 = vadd.f32 %v5346, %v5446
        %v5448 = vpop.f32.mrf.mxu0
        %5449 = vmatprep.mubr.f32.mxu0 0.0
        %v5450 = vand.u32 %v5268, 4294901760
        %5451 = vmatmul.mubr.f32.gmra.mxu0 %v5450
        %v5452 = vpop.f32.mrf.mxu0
        %v5453 = vadd.f32 %v5356, %v5452
        %v5454 = vpop.f32.mrf.mxu0
        %5455 = vdwg.mxu0
        %5456 = vmatprep.subr.mxu0 0.0
        %5457 = vmatpush1.msra.mxu0 0.0
        %5458 = vmatprep.subr.mxu0 0.0
        %5459 = vmatpush1.msra.mxu0 0.0
        %5460 = vmatprep.subr.mxu0 0.0
        %5461 = vmatpush1.msra.mxu0 0.0
        %5462 = vmatprep.subr.mxu0 0.0
        %5463 = vmatpush1.msra.mxu0 0.0
        %5464 = vmatprep.subr.mxu0 0.0
        %5465 = vmatpush1.msra.mxu0 0.0
        %5466 = vmatprep.subr.mxu0 0.0
        %5467 = vmatpush1.msra.mxu0 0.0
        %5468 = vmatprep.subr.mxu0 0.0
        %5469 = vmatpush1.msra.mxu0 0.0
        %5470 = vmatprep.subr.mxu0 0.0
        %5471 = vmatpush1.msra.mxu0 0.0
        %5472 = vmatprep.subr.mxu0 0.0
        %5473 = vmatpush1.msra.mxu0 0.0
        %5474 = vmatprep.subr.mxu0 0.0
        %5475 = vmatpush1.msra.mxu0 0.0
        %5476 = vmatprep.subr.mxu0 0.0
        %5477 = vmatpush1.msra.mxu0 0.0
        %5478 = vmatprep.subr.mxu0 0.0
        %5479 = vmatpush1.msra.mxu0 0.0
        %5480 = vmatprep.subr.mxu0 0.0
        %v5481 = vand.u32 %v446, 4294901760
        %v5482 = vsub.f32 %v446, %v5481
        %5483 = vmatpush1.msra.mxu0 %v5482
        %5484 = vmatprep.subr.mxu0 0.0
        %v5485 = vand.u32 %v445, 4294901760
        %v5486 = vsub.f32 %v445, %v5485
        %5487 = vmatpush1.msra.mxu0 %v5486
        %5488 = vmatprep.subr.mxu0 0.0
        %v5489 = vand.u32 %v444, 4294901760
        %v5490 = vsub.f32 %v444, %v5489
        %5491 = vmatpush1.msra.mxu0 %v5490
        %5492 = vmatprep.subr.mxu0 0.0
        %v5493 = vand.u32 %v443, 4294901760
        %v5494 = vsub.f32 %v443, %v5493
        %5495 = vmatpush1.msra.mxu0 %v5494
        %5496 = vmatprep.subr.mxu0 0.0
        %5497 = vmatpush2.msra.mxu0 0.0
        %5498 = vmatprep.subr.mxu0 0.0
        %5499 = vmatpush2.msra.mxu0 0.0
        %5500 = vmatprep.subr.mxu0 0.0
        %5501 = vmatpush2.msra.mxu0 0.0
        %5502 = vmatprep.subr.mxu0 0.0
        %5503 = vmatpush2.msra.mxu0 0.0
        %5504 = vmatprep.subr.mxu0 0.0
        %5505 = vmatpush2.msra.mxu0 0.0
        %5506 = vmatprep.subr.mxu0 0.0
        %5507 = vmatpush2.msra.mxu0 0.0
        %5508 = vmatprep.subr.mxu0 0.0
        %5509 = vmatpush2.msra.mxu0 0.0
        %5510 = vmatprep.subr.mxu0 0.0
        %5511 = vmatpush2.msra.mxu0 0.0
        %5512 = vmatprep.subr.mxu0 0.0
        %5513 = vmatpush2.msra.mxu0 0.0
        %5514 = vmatprep.subr.mxu0 0.0
        %5515 = vmatpush2.msra.mxu0 0.0
        %5516 = vmatprep.subr.mxu0 0.0
        %5517 = vmatpush2.msra.mxu0 0.0
        %5518 = vmatprep.subr.mxu0 0.0
        %5519 = vmatpush2.msra.mxu0 0.0
        %5520 = vmatprep.subr.mxu0 0.0
        %5521 = vmatpush2.msra.mxu0 0.0
        %5522 = vmatprep.subr.mxu0 0.0
        %5523 = vmatpush2.msra.mxu0 0.0
        %5524 = vmatprep.subr.mxu0 0.0
        %5525 = vmatpush2.msra.mxu0 0.0
        %5526 = vmatprep.subr.mxu0 0.0
        %5527 = vmatpush2.msra.mxu0 0.0
        %5528 = vmatprep.mubr.f32.mxu0 0.0
        %v5529 = vand.u32 %v5265, 4294901760
        %v5530 = vsub.f32 %v5265, %v5529
        %5531 = vmatmul.mubr.f32.gmra.mxu0 %v5530
        %v5532 = vpop.f32.mrf.mxu0
        %v5533 = vadd.f32 %v5447, %v5532
        %v5534 = vpop.f32.mrf.mxu0
        %5535 = vmatprep.mubr.f32.mxu0 0.0
        %v5536 = vand.u32 %v5268, 4294901760
        %v5537 = vsub.f32 %v5268, %v5536
        %5538 = vmatmul.mubr.f32.gmra.mxu0 %v5537
        %v5539 = vpop.f32.mrf.mxu0
        %v5540 = vadd.f32 %v5453, %v5539
        %v5541 = vpop.f32.mrf.mxu0
        %5542 = vdwg.mxu0
        %5543 = vmatprep.subr.mxu0 0.0
        %5544 = vmatpush1.msra.mxu0 0.0
        %5545 = vmatprep.subr.mxu0 0.0
        %5546 = vmatpush1.msra.mxu0 0.0
        %5547 = vmatprep.subr.mxu0 0.0
        %5548 = vmatpush1.msra.mxu0 0.0
        %5549 = vmatprep.subr.mxu0 0.0
        %5550 = vmatpush1.msra.mxu0 0.0
        %5551 = vmatprep.subr.mxu0 0.0
        %5552 = vmatpush1.msra.mxu0 0.0
        %5553 = vmatprep.subr.mxu0 0.0
        %5554 = vmatpush1.msra.mxu0 0.0
        %5555 = vmatprep.subr.mxu0 0.0
        %5556 = vmatpush1.msra.mxu0 0.0
        %5557 = vmatprep.subr.mxu0 0.0
        %5558 = vmatpush1.msra.mxu0 0.0
        %5559 = vmatprep.subr.mxu0 0.0
        %5560 = vmatpush1.msra.mxu0 0.0
        %5561 = vmatprep.subr.mxu0 0.0
        %5562 = vmatpush1.msra.mxu0 0.0
        %5563 = vmatprep.subr.mxu0 0.0
        %5564 = vmatpush1.msra.mxu0 0.0
        %5565 = vmatprep.subr.mxu0 0.0
        %5566 = vmatpush1.msra.mxu0 0.0
        %5567 = vmatprep.subr.mxu0 0.0
        %v5568 = vand.u32 %v446, 4294901760
        %5569 = vmatpush1.msra.mxu0 %v5568
        %5570 = vmatprep.subr.mxu0 0.0
        %v5571 = vand.u32 %v445, 4294901760
        %5572 = vmatpush1.msra.mxu0 %v5571
        %5573 = vmatprep.subr.mxu0 0.0
        %v5574 = vand.u32 %v444, 4294901760
        %5575 = vmatpush1.msra.mxu0 %v5574
        %5576 = vmatprep.subr.mxu0 0.0
        %v5577 = vand.u32 %v443, 4294901760
        %5578 = vmatpush1.msra.mxu0 %v5577
        %5579 = vmatprep.subr.mxu0 0.0
        %5580 = vmatpush2.msra.mxu0 0.0
        %5581 = vmatprep.subr.mxu0 0.0
        %5582 = vmatpush2.msra.mxu0 0.0
        %5583 = vmatprep.subr.mxu0 0.0
        %5584 = vmatpush2.msra.mxu0 0.0
        %5585 = vmatprep.subr.mxu0 0.0
        %5586 = vmatpush2.msra.mxu0 0.0
        %5587 = vmatprep.subr.mxu0 0.0
        %5588 = vmatpush2.msra.mxu0 0.0
        %5589 = vmatprep.subr.mxu0 0.0
        %5590 = vmatpush2.msra.mxu0 0.0
        %5591 = vmatprep.subr.mxu0 0.0
        %5592 = vmatpush2.msra.mxu0 0.0
        %5593 = vmatprep.subr.mxu0 0.0
        %5594 = vmatpush2.msra.mxu0 0.0
        %5595 = vmatprep.subr.mxu0 0.0
        %5596 = vmatpush2.msra.mxu0 0.0
        %5597 = vmatprep.subr.mxu0 0.0
        %5598 = vmatpush2.msra.mxu0 0.0
        %5599 = vmatprep.subr.mxu0 0.0
        %5600 = vmatpush2.msra.mxu0 0.0
        %5601 = vmatprep.subr.mxu0 0.0
        %5602 = vmatpush2.msra.mxu0 0.0
        %5603 = vmatprep.subr.mxu0 0.0
        %5604 = vmatpush2.msra.mxu0 0.0
        %5605 = vmatprep.subr.mxu0 0.0
        %5606 = vmatpush2.msra.mxu0 0.0
        %5607 = vmatprep.subr.mxu0 0.0
        %5608 = vmatpush2.msra.mxu0 0.0
        %5609 = vmatprep.subr.mxu0 0.0
        %5610 = vmatpush2.msra.mxu0 0.0
        %5611 = vmatprep.mubr.f32.mxu0 0.0
        %v5612 = vand.u32 %v5265, 4294901760
        %v5613 = vsub.f32 %v5265, %v5612
        %v5614 = vand.u32 %v5613, 4294901760
        %5615 = vmatmul.mubr.f32.gmra.mxu0 %v5614
        %v5616 = vpop.f32.mrf.mxu0
        %v5617 = vadd.f32 %v5533, %v5616
        %v5618 = vpop.f32.mrf.mxu0
        %5619 = vmatprep.mubr.f32.mxu0 0.0
        %v5620 = vand.u32 %v5268, 4294901760
        %v5621 = vsub.f32 %v5268, %v5620
        %v5622 = vand.u32 %v5621, 4294901760
        %5623 = vmatmul.mubr.f32.gmra.mxu0 %v5622
        %v5624 = vpop.f32.mrf.mxu0
        %v5625 = vadd.f32 %v5540, %v5624
        %v5626 = vpop.f32.mrf.mxu0
        %5627 = vdwg.mxu0
        %5628 = vmatprep.subr.mxu0 0.0
        %5629 = vmatpush1.msra.mxu0 0.0
        %5630 = vmatprep.subr.mxu0 0.0
        %5631 = vmatpush1.msra.mxu0 0.0
        %5632 = vmatprep.subr.mxu0 0.0
        %5633 = vmatpush1.msra.mxu0 0.0
        %5634 = vmatprep.subr.mxu0 0.0
        %5635 = vmatpush1.msra.mxu0 0.0
        %5636 = vmatprep.subr.mxu0 0.0
        %5637 = vmatpush1.msra.mxu0 0.0
        %5638 = vmatprep.subr.mxu0 0.0
        %5639 = vmatpush1.msra.mxu0 0.0
        %5640 = vmatprep.subr.mxu0 0.0
        %5641 = vmatpush1.msra.mxu0 0.0
        %5642 = vmatprep.subr.mxu0 0.0
        %5643 = vmatpush1.msra.mxu0 0.0
        %5644 = vmatprep.subr.mxu0 0.0
        %5645 = vmatpush1.msra.mxu0 0.0
        %5646 = vmatprep.subr.mxu0 0.0
        %5647 = vmatpush1.msra.mxu0 0.0
        %5648 = vmatprep.subr.mxu0 0.0
        %5649 = vmatpush1.msra.mxu0 0.0
        %5650 = vmatprep.subr.mxu0 0.0
        %5651 = vmatpush1.msra.mxu0 0.0
        %5652 = vmatprep.subr.mxu0 0.0
        %v5653 = vand.u32 %v446, 4294901760
        %v5654 = vsub.f32 %v446, %v5653
        %v5655 = vand.u32 %v5654, 4294901760
        %5656 = vmatpush1.msra.mxu0 %v5655
        %5657 = vmatprep.subr.mxu0 0.0
        %v5658 = vand.u32 %v445, 4294901760
        %v5659 = vsub.f32 %v445, %v5658
        %v5660 = vand.u32 %v5659, 4294901760
        %5661 = vmatpush1.msra.mxu0 %v5660
        %5662 = vmatprep.subr.mxu0 0.0
        %v5663 = vand.u32 %v444, 4294901760
        %v5664 = vsub.f32 %v444, %v5663
        %v5665 = vand.u32 %v5664, 4294901760
        %5666 = vmatpush1.msra.mxu0 %v5665
        %5667 = vmatprep.subr.mxu0 0.0
        %v5668 = vand.u32 %v443, 4294901760
        %v5669 = vsub.f32 %v443, %v5668
        %v5670 = vand.u32 %v5669, 4294901760
        %5671 = vmatpush1.msra.mxu0 %v5670
        %5672 = vmatprep.subr.mxu0 0.0
        %5673 = vmatpush2.msra.mxu0 0.0
        %5674 = vmatprep.subr.mxu0 0.0
        %5675 = vmatpush2.msra.mxu0 0.0
        %5676 = vmatprep.subr.mxu0 0.0
        %5677 = vmatpush2.msra.mxu0 0.0
        %5678 = vmatprep.subr.mxu0 0.0
        %5679 = vmatpush2.msra.mxu0 0.0
        %5680 = vmatprep.subr.mxu0 0.0
        %5681 = vmatpush2.msra.mxu0 0.0
        %5682 = vmatprep.subr.mxu0 0.0
        %5683 = vmatpush2.msra.mxu0 0.0
        %5684 = vmatprep.subr.mxu0 0.0
        %5685 = vmatpush2.msra.mxu0 0.0
        %5686 = vmatprep.subr.mxu0 0.0
        %5687 = vmatpush2.msra.mxu0 0.0
        %5688 = vmatprep.subr.mxu0 0.0
        %5689 = vmatpush2.msra.mxu0 0.0
        %5690 = vmatprep.subr.mxu0 0.0
        %5691 = vmatpush2.msra.mxu0 0.0
        %5692 = vmatprep.subr.mxu0 0.0
        %5693 = vmatpush2.msra.mxu0 0.0
        %5694 = vmatprep.subr.mxu0 0.0
        %5695 = vmatpush2.msra.mxu0 0.0
        %5696 = vmatprep.subr.mxu0 0.0
        %5697 = vmatpush2.msra.mxu0 0.0
        %5698 = vmatprep.subr.mxu0 0.0
        %5699 = vmatpush2.msra.mxu0 0.0
        %5700 = vmatprep.subr.mxu0 0.0
        %5701 = vmatpush2.msra.mxu0 0.0
        %5702 = vmatprep.subr.mxu0 0.0
        %5703 = vmatpush2.msra.mxu0 0.0
        %5704 = vmatprep.mubr.f32.mxu0 0.0
        %v5705 = vand.u32 %v5265, 4294901760
        %5706 = vmatmul.mubr.f32.gmra.mxu0 %v5705
        %v5707 = vpop.f32.mrf.mxu0
        %v5708 = vadd.f32 %v5617, %v5707
        %v5709 = vpop.f32.mrf.mxu0
        %5710 = vmatprep.mubr.f32.mxu0 0.0
        %v5711 = vand.u32 %v5268, 4294901760
        %5712 = vmatmul.mubr.f32.gmra.mxu0 %v5711
        %v5713 = vpop.f32.mrf.mxu0
        %v5714 = vadd.f32 %v5625, %v5713
        %v5715 = vpop.f32.mrf.mxu0
        %5716 = vdwg.mxu0
        %5717 = vmatprep.subr.mxu0 0.0
        %5718 = vmatpush1.msra.mxu0 0.0
        %5719 = vmatprep.subr.mxu0 0.0
        %5720 = vmatpush1.msra.mxu0 0.0
        %5721 = vmatprep.subr.mxu0 0.0
        %5722 = vmatpush1.msra.mxu0 0.0
        %5723 = vmatprep.subr.mxu0 0.0
        %5724 = vmatpush1.msra.mxu0 0.0
        %5725 = vmatprep.subr.mxu0 0.0
        %5726 = vmatpush1.msra.mxu0 0.0
        %5727 = vmatprep.subr.mxu0 0.0
        %5728 = vmatpush1.msra.mxu0 0.0
        %5729 = vmatprep.subr.mxu0 0.0
        %5730 = vmatpush1.msra.mxu0 0.0
        %5731 = vmatprep.subr.mxu0 0.0
        %5732 = vmatpush1.msra.mxu0 0.0
        %5733 = vmatprep.subr.mxu0 0.0
        %5734 = vmatpush1.msra.mxu0 0.0
        %5735 = vmatprep.subr.mxu0 0.0
        %5736 = vmatpush1.msra.mxu0 0.0
        %5737 = vmatprep.subr.mxu0 0.0
        %5738 = vmatpush1.msra.mxu0 0.0
        %5739 = vmatprep.subr.mxu0 0.0
        %5740 = vmatpush1.msra.mxu0 0.0
        %5741 = vmatprep.subr.mxu0 0.0
        %v5742 = vand.u32 %v446, 4294901760
        %5743 = vmatpush1.msra.mxu0 %v5742
        %5744 = vmatprep.subr.mxu0 0.0
        %v5745 = vand.u32 %v445, 4294901760
        %5746 = vmatpush1.msra.mxu0 %v5745
        %5747 = vmatprep.subr.mxu0 0.0
        %v5748 = vand.u32 %v444, 4294901760
        %5749 = vmatpush1.msra.mxu0 %v5748
        %5750 = vmatprep.subr.mxu0 0.0
        %v5751 = vand.u32 %v443, 4294901760
        %5752 = vmatpush1.msra.mxu0 %v5751
        %5753 = vmatprep.subr.mxu0 0.0
        %5754 = vmatpush2.msra.mxu0 0.0
        %5755 = vmatprep.subr.mxu0 0.0
        %5756 = vmatpush2.msra.mxu0 0.0
        %5757 = vmatprep.subr.mxu0 0.0
        %5758 = vmatpush2.msra.mxu0 0.0
        %5759 = vmatprep.subr.mxu0 0.0
        %5760 = vmatpush2.msra.mxu0 0.0
        %5761 = vmatprep.subr.mxu0 0.0
        %5762 = vmatpush2.msra.mxu0 0.0
        %5763 = vmatprep.subr.mxu0 0.0
        %5764 = vmatpush2.msra.mxu0 0.0
        %5765 = vmatprep.subr.mxu0 0.0
        %5766 = vmatpush2.msra.mxu0 0.0
        %5767 = vmatprep.subr.mxu0 0.0
        %5768 = vmatpush2.msra.mxu0 0.0
        %5769 = vmatprep.subr.mxu0 0.0
        %5770 = vmatpush2.msra.mxu0 0.0
        %5771 = vmatprep.subr.mxu0 0.0
        %5772 = vmatpush2.msra.mxu0 0.0
        %5773 = vmatprep.subr.mxu0 0.0
        %5774 = vmatpush2.msra.mxu0 0.0
        %5775 = vmatprep.subr.mxu0 0.0
        %5776 = vmatpush2.msra.mxu0 0.0
        %5777 = vmatprep.subr.mxu0 0.0
        %5778 = vmatpush2.msra.mxu0 0.0
        %5779 = vmatprep.subr.mxu0 0.0
        %5780 = vmatpush2.msra.mxu0 0.0
        %5781 = vmatprep.subr.mxu0 0.0
        %5782 = vmatpush2.msra.mxu0 0.0
        %5783 = vmatprep.subr.mxu0 0.0
        %5784 = vmatpush2.msra.mxu0 0.0
        %5785 = vmatprep.mubr.f32.mxu0 0.0
        %v5786 = vand.u32 %v5265, 4294901760
        %5787 = vmatmul.mubr.f32.gmra.mxu0 %v5786
        %v5788 = vpop.f32.mrf.mxu0
        %v5789 = vadd.f32 %v5708, %v5788
        %v5790 = vpop.f32.mrf.mxu0
        %5791 = vmatprep.mubr.f32.mxu0 0.0
        %v5792 = vand.u32 %v5268, 4294901760
        %5793 = vmatmul.mubr.f32.gmra.mxu0 %v5792
        %v5794 = vpop.f32.mrf.mxu0
        %v5795 = vadd.f32 %v5714, %v5794
        %v5796 = vpop.f32.mrf.mxu0
        %5797 = vdwg.mxu0
        %v5799 = vsel %vm461, %v4728, 0
        %v5802 = vsel %vm461, %v4729, 0
        %5804 = vmatprep.subr.mxu0 0.0
        %5805 = vmatpush1.msra.mxu0 0.0
        %5806 = vmatprep.subr.mxu0 0.0
        %5807 = vmatpush1.msra.mxu0 0.0
        %5808 = vmatprep.subr.mxu0 0.0
        %5809 = vmatpush1.msra.mxu0 0.0
        %5810 = vmatprep.subr.mxu0 0.0
        %5811 = vmatpush1.msra.mxu0 0.0
        %5812 = vmatprep.subr.mxu0 0.0
        %5813 = vmatpush1.msra.mxu0 0.0
        %5814 = vmatprep.subr.mxu0 0.0
        %5815 = vmatpush1.msra.mxu0 0.0
        %5816 = vmatprep.subr.mxu0 0.0
        %5817 = vmatpush1.msra.mxu0 0.0
        %5818 = vmatprep.subr.mxu0 0.0
        %5819 = vmatpush1.msra.mxu0 0.0
        %5820 = vmatprep.subr.mxu0 0.0
        %5821 = vmatpush1.msra.mxu0 0.0
        %5822 = vmatprep.subr.mxu0 0.0
        %5823 = vmatpush1.msra.mxu0 0.0
        %5824 = vmatprep.subr.mxu0 0.0
        %5825 = vmatpush1.msra.mxu0 0.0
        %5826 = vmatprep.subr.mxu0 0.0
        %5827 = vmatpush1.msra.mxu0 0.0
        %5828 = vmatprep.subr.mxu0 0.0
        %v5829 = vand.u32 %v454, 4294901760
        %5830 = vmatpush1.msra.mxu0 %v5829
        %5831 = vmatprep.subr.mxu0 0.0
        %v5832 = vand.u32 %v453, 4294901760
        %5833 = vmatpush1.msra.mxu0 %v5832
        %5834 = vmatprep.subr.mxu0 0.0
        %v5835 = vand.u32 %v452, 4294901760
        %5836 = vmatpush1.msra.mxu0 %v5835
        %5837 = vmatprep.subr.mxu0 0.0
        %v5838 = vand.u32 %v451, 4294901760
        %5839 = vmatpush1.msra.mxu0 %v5838
        %5840 = vmatprep.subr.mxu0 0.0
        %5841 = vmatpush2.msra.mxu0 0.0
        %5842 = vmatprep.subr.mxu0 0.0
        %5843 = vmatpush2.msra.mxu0 0.0
        %5844 = vmatprep.subr.mxu0 0.0
        %5845 = vmatpush2.msra.mxu0 0.0
        %5846 = vmatprep.subr.mxu0 0.0
        %5847 = vmatpush2.msra.mxu0 0.0
        %5848 = vmatprep.subr.mxu0 0.0
        %5849 = vmatpush2.msra.mxu0 0.0
        %5850 = vmatprep.subr.mxu0 0.0
        %5851 = vmatpush2.msra.mxu0 0.0
        %5852 = vmatprep.subr.mxu0 0.0
        %5853 = vmatpush2.msra.mxu0 0.0
        %5854 = vmatprep.subr.mxu0 0.0
        %5855 = vmatpush2.msra.mxu0 0.0
        %5856 = vmatprep.subr.mxu0 0.0
        %5857 = vmatpush2.msra.mxu0 0.0
        %5858 = vmatprep.subr.mxu0 0.0
        %5859 = vmatpush2.msra.mxu0 0.0
        %5860 = vmatprep.subr.mxu0 0.0
        %5861 = vmatpush2.msra.mxu0 0.0
        %5862 = vmatprep.subr.mxu0 0.0
        %5863 = vmatpush2.msra.mxu0 0.0
        %5864 = vmatprep.subr.mxu0 0.0
        %5865 = vmatpush2.msra.mxu0 0.0
        %5866 = vmatprep.subr.mxu0 0.0
        %5867 = vmatpush2.msra.mxu0 0.0
        %5868 = vmatprep.subr.mxu0 0.0
        %5869 = vmatpush2.msra.mxu0 0.0
        %5870 = vmatprep.subr.mxu0 0.0
        %5871 = vmatpush2.msra.mxu0 0.0
        %5872 = vmatprep.mubr.f32.mxu0 0.0
        %v5873 = vand.u32 %v5799, 4294901760
        %v5874 = vsub.f32 %v5799, %v5873
        %v5875 = vand.u32 %v5874, 4294901760
        %v5876 = vsub.f32 %v5874, %v5875
        %v5877 = vand.u32 %v5876, 4294901760
        %5878 = vmatmul.mubr.f32.gmra.mxu0 %v5877
        %v5879 = vpop.f32.mrf.mxu0
        %v5880 = vadd.f32 0.0, %v5879
        %v5881 = vpop.f32.mrf.mxu0
        %5882 = vmatprep.mubr.f32.mxu0 0.0
        %v5883 = vand.u32 %v5802, 4294901760
        %v5884 = vsub.f32 %v5802, %v5883
        %v5885 = vand.u32 %v5884, 4294901760
        %v5886 = vsub.f32 %v5884, %v5885
        %v5887 = vand.u32 %v5886, 4294901760
        %5888 = vmatmul.mubr.f32.gmra.mxu0 %v5887
        %v5889 = vpop.f32.mrf.mxu0
        %v5890 = vadd.f32 0.0, %v5889
        %v5891 = vpop.f32.mrf.mxu0
        %5892 = vdwg.mxu0
        %5893 = vmatprep.subr.mxu0 0.0
        %5894 = vmatpush1.msra.mxu0 0.0
        %5895 = vmatprep.subr.mxu0 0.0
        %5896 = vmatpush1.msra.mxu0 0.0
        %5897 = vmatprep.subr.mxu0 0.0
        %5898 = vmatpush1.msra.mxu0 0.0
        %5899 = vmatprep.subr.mxu0 0.0
        %5900 = vmatpush1.msra.mxu0 0.0
        %5901 = vmatprep.subr.mxu0 0.0
        %5902 = vmatpush1.msra.mxu0 0.0
        %5903 = vmatprep.subr.mxu0 0.0
        %5904 = vmatpush1.msra.mxu0 0.0
        %5905 = vmatprep.subr.mxu0 0.0
        %5906 = vmatpush1.msra.mxu0 0.0
        %5907 = vmatprep.subr.mxu0 0.0
        %5908 = vmatpush1.msra.mxu0 0.0
        %5909 = vmatprep.subr.mxu0 0.0
        %5910 = vmatpush1.msra.mxu0 0.0
        %5911 = vmatprep.subr.mxu0 0.0
        %5912 = vmatpush1.msra.mxu0 0.0
        %5913 = vmatprep.subr.mxu0 0.0
        %5914 = vmatpush1.msra.mxu0 0.0
        %5915 = vmatprep.subr.mxu0 0.0
        %5916 = vmatpush1.msra.mxu0 0.0
        %5917 = vmatprep.subr.mxu0 0.0
        %v5918 = vand.u32 %v454, 4294901760
        %v5919 = vsub.f32 %v454, %v5918
        %v5920 = vand.u32 %v5919, 4294901760
        %v5921 = vsub.f32 %v5919, %v5920
        %v5922 = vand.u32 %v5921, 4294901760
        %5923 = vmatpush1.msra.mxu0 %v5922
        %5924 = vmatprep.subr.mxu0 0.0
        %v5925 = vand.u32 %v453, 4294901760
        %v5926 = vsub.f32 %v453, %v5925
        %v5927 = vand.u32 %v5926, 4294901760
        %v5928 = vsub.f32 %v5926, %v5927
        %v5929 = vand.u32 %v5928, 4294901760
        %5930 = vmatpush1.msra.mxu0 %v5929
        %5931 = vmatprep.subr.mxu0 0.0
        %v5932 = vand.u32 %v452, 4294901760
        %v5933 = vsub.f32 %v452, %v5932
        %v5934 = vand.u32 %v5933, 4294901760
        %v5935 = vsub.f32 %v5933, %v5934
        %v5936 = vand.u32 %v5935, 4294901760
        %5937 = vmatpush1.msra.mxu0 %v5936
        %5938 = vmatprep.subr.mxu0 0.0
        %v5939 = vand.u32 %v451, 4294901760
        %v5940 = vsub.f32 %v451, %v5939
        %v5941 = vand.u32 %v5940, 4294901760
        %v5942 = vsub.f32 %v5940, %v5941
        %v5943 = vand.u32 %v5942, 4294901760
        %5944 = vmatpush1.msra.mxu0 %v5943
        %5945 = vmatprep.subr.mxu0 0.0
        %5946 = vmatpush2.msra.mxu0 0.0
        %5947 = vmatprep.subr.mxu0 0.0
        %5948 = vmatpush2.msra.mxu0 0.0
        %5949 = vmatprep.subr.mxu0 0.0
        %5950 = vmatpush2.msra.mxu0 0.0
        %5951 = vmatprep.subr.mxu0 0.0
        %5952 = vmatpush2.msra.mxu0 0.0
        %5953 = vmatprep.subr.mxu0 0.0
        %5954 = vmatpush2.msra.mxu0 0.0
        %5955 = vmatprep.subr.mxu0 0.0
        %5956 = vmatpush2.msra.mxu0 0.0
        %5957 = vmatprep.subr.mxu0 0.0
        %5958 = vmatpush2.msra.mxu0 0.0
        %5959 = vmatprep.subr.mxu0 0.0
        %5960 = vmatpush2.msra.mxu0 0.0
        %5961 = vmatprep.subr.mxu0 0.0
        %5962 = vmatpush2.msra.mxu0 0.0
        %5963 = vmatprep.subr.mxu0 0.0
        %5964 = vmatpush2.msra.mxu0 0.0
        %5965 = vmatprep.subr.mxu0 0.0
        %5966 = vmatpush2.msra.mxu0 0.0
        %5967 = vmatprep.subr.mxu0 0.0
        %5968 = vmatpush2.msra.mxu0 0.0
        %5969 = vmatprep.subr.mxu0 0.0
        %5970 = vmatpush2.msra.mxu0 0.0
        %5971 = vmatprep.subr.mxu0 0.0
        %5972 = vmatpush2.msra.mxu0 0.0
        %5973 = vmatprep.subr.mxu0 0.0
        %5974 = vmatpush2.msra.mxu0 0.0
        %5975 = vmatprep.subr.mxu0 0.0
        %5976 = vmatpush2.msra.mxu0 0.0
        %5977 = vmatprep.mubr.f32.mxu0 0.0
        %v5978 = vand.u32 %v5799, 4294901760
        %5979 = vmatmul.mubr.f32.gmra.mxu0 %v5978
        %v5980 = vpop.f32.mrf.mxu0
        %v5981 = vadd.f32 %v5880, %v5980
        %v5982 = vpop.f32.mrf.mxu0
        %5983 = vmatprep.mubr.f32.mxu0 0.0
        %v5984 = vand.u32 %v5802, 4294901760
        %5985 = vmatmul.mubr.f32.gmra.mxu0 %v5984
        %v5986 = vpop.f32.mrf.mxu0
        %v5987 = vadd.f32 %v5890, %v5986
        %v5988 = vpop.f32.mrf.mxu0
        %5989 = vdwg.mxu0
        %5990 = vmatprep.subr.mxu0 0.0
        %5991 = vmatpush1.msra.mxu0 0.0
        %5992 = vmatprep.subr.mxu0 0.0
        %5993 = vmatpush1.msra.mxu0 0.0
        %5994 = vmatprep.subr.mxu0 0.0
        %5995 = vmatpush1.msra.mxu0 0.0
        %5996 = vmatprep.subr.mxu0 0.0
        %5997 = vmatpush1.msra.mxu0 0.0
        %5998 = vmatprep.subr.mxu0 0.0
        %5999 = vmatpush1.msra.mxu0 0.0
        %6000 = vmatprep.subr.mxu0 0.0
        %6001 = vmatpush1.msra.mxu0 0.0
        %6002 = vmatprep.subr.mxu0 0.0
        %6003 = vmatpush1.msra.mxu0 0.0
        %6004 = vmatprep.subr.mxu0 0.0
        %6005 = vmatpush1.msra.mxu0 0.0
        %6006 = vmatprep.subr.mxu0 0.0
        %6007 = vmatpush1.msra.mxu0 0.0
        %6008 = vmatprep.subr.mxu0 0.0
        %6009 = vmatpush1.msra.mxu0 0.0
        %6010 = vmatprep.subr.mxu0 0.0
        %6011 = vmatpush1.msra.mxu0 0.0
        %6012 = vmatprep.subr.mxu0 0.0
        %6013 = vmatpush1.msra.mxu0 0.0
        %6014 = vmatprep.subr.mxu0 0.0
        %v6015 = vand.u32 %v454, 4294901760
        %v6016 = vsub.f32 %v454, %v6015
        %6017 = vmatpush1.msra.mxu0 %v6016
        %6018 = vmatprep.subr.mxu0 0.0
        %v6019 = vand.u32 %v453, 4294901760
        %v6020 = vsub.f32 %v453, %v6019
        %6021 = vmatpush1.msra.mxu0 %v6020
        %6022 = vmatprep.subr.mxu0 0.0
        %v6023 = vand.u32 %v452, 4294901760
        %v6024 = vsub.f32 %v452, %v6023
        %6025 = vmatpush1.msra.mxu0 %v6024
        %6026 = vmatprep.subr.mxu0 0.0
        %v6027 = vand.u32 %v451, 4294901760
        %v6028 = vsub.f32 %v451, %v6027
        %6029 = vmatpush1.msra.mxu0 %v6028
        %6030 = vmatprep.subr.mxu0 0.0
        %6031 = vmatpush2.msra.mxu0 0.0
        %6032 = vmatprep.subr.mxu0 0.0
        %6033 = vmatpush2.msra.mxu0 0.0
        %6034 = vmatprep.subr.mxu0 0.0
        %6035 = vmatpush2.msra.mxu0 0.0
        %6036 = vmatprep.subr.mxu0 0.0
        %6037 = vmatpush2.msra.mxu0 0.0
        %6038 = vmatprep.subr.mxu0 0.0
        %6039 = vmatpush2.msra.mxu0 0.0
        %6040 = vmatprep.subr.mxu0 0.0
        %6041 = vmatpush2.msra.mxu0 0.0
        %6042 = vmatprep.subr.mxu0 0.0
        %6043 = vmatpush2.msra.mxu0 0.0
        %6044 = vmatprep.subr.mxu0 0.0
        %6045 = vmatpush2.msra.mxu0 0.0
        %6046 = vmatprep.subr.mxu0 0.0
        %6047 = vmatpush2.msra.mxu0 0.0
        %6048 = vmatprep.subr.mxu0 0.0
        %6049 = vmatpush2.msra.mxu0 0.0
        %6050 = vmatprep.subr.mxu0 0.0
        %6051 = vmatpush2.msra.mxu0 0.0
        %6052 = vmatprep.subr.mxu0 0.0
        %6053 = vmatpush2.msra.mxu0 0.0
        %6054 = vmatprep.subr.mxu0 0.0
        %6055 = vmatpush2.msra.mxu0 0.0
        %6056 = vmatprep.subr.mxu0 0.0
        %6057 = vmatpush2.msra.mxu0 0.0
        %6058 = vmatprep.subr.mxu0 0.0
        %6059 = vmatpush2.msra.mxu0 0.0
        %6060 = vmatprep.subr.mxu0 0.0
        %6061 = vmatpush2.msra.mxu0 0.0
        %6062 = vmatprep.mubr.f32.mxu0 0.0
        %v6063 = vand.u32 %v5799, 4294901760
        %v6064 = vsub.f32 %v5799, %v6063
        %6065 = vmatmul.mubr.f32.gmra.mxu0 %v6064
        %v6066 = vpop.f32.mrf.mxu0
        %v6067 = vadd.f32 %v5981, %v6066
        %v6068 = vpop.f32.mrf.mxu0
        %6069 = vmatprep.mubr.f32.mxu0 0.0
        %v6070 = vand.u32 %v5802, 4294901760
        %v6071 = vsub.f32 %v5802, %v6070
        %6072 = vmatmul.mubr.f32.gmra.mxu0 %v6071
        %v6073 = vpop.f32.mrf.mxu0
        %v6074 = vadd.f32 %v5987, %v6073
        %v6075 = vpop.f32.mrf.mxu0
        %6076 = vdwg.mxu0
        %6077 = vmatprep.subr.mxu0 0.0
        %6078 = vmatpush1.msra.mxu0 0.0
        %6079 = vmatprep.subr.mxu0 0.0
        %6080 = vmatpush1.msra.mxu0 0.0
        %6081 = vmatprep.subr.mxu0 0.0
        %6082 = vmatpush1.msra.mxu0 0.0
        %6083 = vmatprep.subr.mxu0 0.0
        %6084 = vmatpush1.msra.mxu0 0.0
        %6085 = vmatprep.subr.mxu0 0.0
        %6086 = vmatpush1.msra.mxu0 0.0
        %6087 = vmatprep.subr.mxu0 0.0
        %6088 = vmatpush1.msra.mxu0 0.0
        %6089 = vmatprep.subr.mxu0 0.0
        %6090 = vmatpush1.msra.mxu0 0.0
        %6091 = vmatprep.subr.mxu0 0.0
        %6092 = vmatpush1.msra.mxu0 0.0
        %6093 = vmatprep.subr.mxu0 0.0
        %6094 = vmatpush1.msra.mxu0 0.0
        %6095 = vmatprep.subr.mxu0 0.0
        %6096 = vmatpush1.msra.mxu0 0.0
        %6097 = vmatprep.subr.mxu0 0.0
        %6098 = vmatpush1.msra.mxu0 0.0
        %6099 = vmatprep.subr.mxu0 0.0
        %6100 = vmatpush1.msra.mxu0 0.0
        %6101 = vmatprep.subr.mxu0 0.0
        %v6102 = vand.u32 %v454, 4294901760
        %6103 = vmatpush1.msra.mxu0 %v6102
        %6104 = vmatprep.subr.mxu0 0.0
        %v6105 = vand.u32 %v453, 4294901760
        %6106 = vmatpush1.msra.mxu0 %v6105
        %6107 = vmatprep.subr.mxu0 0.0
        %v6108 = vand.u32 %v452, 4294901760
        %6109 = vmatpush1.msra.mxu0 %v6108
        %6110 = vmatprep.subr.mxu0 0.0
        %v6111 = vand.u32 %v451, 4294901760
        %6112 = vmatpush1.msra.mxu0 %v6111
        %6113 = vmatprep.subr.mxu0 0.0
        %6114 = vmatpush2.msra.mxu0 0.0
        %6115 = vmatprep.subr.mxu0 0.0
        %6116 = vmatpush2.msra.mxu0 0.0
        %6117 = vmatprep.subr.mxu0 0.0
        %6118 = vmatpush2.msra.mxu0 0.0
        %6119 = vmatprep.subr.mxu0 0.0
        %6120 = vmatpush2.msra.mxu0 0.0
        %6121 = vmatprep.subr.mxu0 0.0
        %6122 = vmatpush2.msra.mxu0 0.0
        %6123 = vmatprep.subr.mxu0 0.0
        %6124 = vmatpush2.msra.mxu0 0.0
        %6125 = vmatprep.subr.mxu0 0.0
        %6126 = vmatpush2.msra.mxu0 0.0
        %6127 = vmatprep.subr.mxu0 0.0
        %6128 = vmatpush2.msra.mxu0 0.0
        %6129 = vmatprep.subr.mxu0 0.0
        %6130 = vmatpush2.msra.mxu0 0.0
        %6131 = vmatprep.subr.mxu0 0.0
        %6132 = vmatpush2.msra.mxu0 0.0
        %6133 = vmatprep.subr.mxu0 0.0
        %6134 = vmatpush2.msra.mxu0 0.0
        %6135 = vmatprep.subr.mxu0 0.0
        %6136 = vmatpush2.msra.mxu0 0.0
        %6137 = vmatprep.subr.mxu0 0.0
        %6138 = vmatpush2.msra.mxu0 0.0
        %6139 = vmatprep.subr.mxu0 0.0
        %6140 = vmatpush2.msra.mxu0 0.0
        %6141 = vmatprep.subr.mxu0 0.0
        %6142 = vmatpush2.msra.mxu0 0.0
        %6143 = vmatprep.subr.mxu0 0.0
        %6144 = vmatpush2.msra.mxu0 0.0
        %6145 = vmatprep.mubr.f32.mxu0 0.0
        %v6146 = vand.u32 %v5799, 4294901760
        %v6147 = vsub.f32 %v5799, %v6146
        %v6148 = vand.u32 %v6147, 4294901760
        %6149 = vmatmul.mubr.f32.gmra.mxu0 %v6148
        %v6150 = vpop.f32.mrf.mxu0
        %v6151 = vadd.f32 %v6067, %v6150
        %v6152 = vpop.f32.mrf.mxu0
        %6153 = vmatprep.mubr.f32.mxu0 0.0
        %v6154 = vand.u32 %v5802, 4294901760
        %v6155 = vsub.f32 %v5802, %v6154
        %v6156 = vand.u32 %v6155, 4294901760
        %6157 = vmatmul.mubr.f32.gmra.mxu0 %v6156
        %v6158 = vpop.f32.mrf.mxu0
        %v6159 = vadd.f32 %v6074, %v6158
        %v6160 = vpop.f32.mrf.mxu0
        %6161 = vdwg.mxu0
        %6162 = vmatprep.subr.mxu0 0.0
        %6163 = vmatpush1.msra.mxu0 0.0
        %6164 = vmatprep.subr.mxu0 0.0
        %6165 = vmatpush1.msra.mxu0 0.0
        %6166 = vmatprep.subr.mxu0 0.0
        %6167 = vmatpush1.msra.mxu0 0.0
        %6168 = vmatprep.subr.mxu0 0.0
        %6169 = vmatpush1.msra.mxu0 0.0
        %6170 = vmatprep.subr.mxu0 0.0
        %6171 = vmatpush1.msra.mxu0 0.0
        %6172 = vmatprep.subr.mxu0 0.0
        %6173 = vmatpush1.msra.mxu0 0.0
        %6174 = vmatprep.subr.mxu0 0.0
        %6175 = vmatpush1.msra.mxu0 0.0
        %6176 = vmatprep.subr.mxu0 0.0
        %6177 = vmatpush1.msra.mxu0 0.0
        %6178 = vmatprep.subr.mxu0 0.0
        %6179 = vmatpush1.msra.mxu0 0.0
        %6180 = vmatprep.subr.mxu0 0.0
        %6181 = vmatpush1.msra.mxu0 0.0
        %6182 = vmatprep.subr.mxu0 0.0
        %6183 = vmatpush1.msra.mxu0 0.0
        %6184 = vmatprep.subr.mxu0 0.0
        %6185 = vmatpush1.msra.mxu0 0.0
        %6186 = vmatprep.subr.mxu0 0.0
        %v6187 = vand.u32 %v454, 4294901760
        %v6188 = vsub.f32 %v454, %v6187
        %v6189 = vand.u32 %v6188, 4294901760
        %6190 = vmatpush1.msra.mxu0 %v6189
        %6191 = vmatprep.subr.mxu0 0.0
        %v6192 = vand.u32 %v453, 4294901760
        %v6193 = vsub.f32 %v453, %v6192
        %v6194 = vand.u32 %v6193, 4294901760
        %6195 = vmatpush1.msra.mxu0 %v6194
        %6196 = vmatprep.subr.mxu0 0.0
        %v6197 = vand.u32 %v452, 4294901760
        %v6198 = vsub.f32 %v452, %v6197
        %v6199 = vand.u32 %v6198, 4294901760
        %6200 = vmatpush1.msra.mxu0 %v6199
        %6201 = vmatprep.subr.mxu0 0.0
        %v6202 = vand.u32 %v451, 4294901760
        %v6203 = vsub.f32 %v451, %v6202
        %v6204 = vand.u32 %v6203, 4294901760
        %6205 = vmatpush1.msra.mxu0 %v6204
        %6206 = vmatprep.subr.mxu0 0.0
        %6207 = vmatpush2.msra.mxu0 0.0
        %6208 = vmatprep.subr.mxu0 0.0
        %6209 = vmatpush2.msra.mxu0 0.0
        %6210 = vmatprep.subr.mxu0 0.0
        %6211 = vmatpush2.msra.mxu0 0.0
        %6212 = vmatprep.subr.mxu0 0.0
        %6213 = vmatpush2.msra.mxu0 0.0
        %6214 = vmatprep.subr.mxu0 0.0
        %6215 = vmatpush2.msra.mxu0 0.0
        %6216 = vmatprep.subr.mxu0 0.0
        %6217 = vmatpush2.msra.mxu0 0.0
        %6218 = vmatprep.subr.mxu0 0.0
        %6219 = vmatpush2.msra.mxu0 0.0
        %6220 = vmatprep.subr.mxu0 0.0
        %6221 = vmatpush2.msra.mxu0 0.0
        %6222 = vmatprep.subr.mxu0 0.0
        %6223 = vmatpush2.msra.mxu0 0.0
        %6224 = vmatprep.subr.mxu0 0.0
        %6225 = vmatpush2.msra.mxu0 0.0
        %6226 = vmatprep.subr.mxu0 0.0
        %6227 = vmatpush2.msra.mxu0 0.0
        %6228 = vmatprep.subr.mxu0 0.0
        %6229 = vmatpush2.msra.mxu0 0.0
        %6230 = vmatprep.subr.mxu0 0.0
        %6231 = vmatpush2.msra.mxu0 0.0
        %6232 = vmatprep.subr.mxu0 0.0
        %6233 = vmatpush2.msra.mxu0 0.0
        %6234 = vmatprep.subr.mxu0 0.0
        %6235 = vmatpush2.msra.mxu0 0.0
        %6236 = vmatprep.subr.mxu0 0.0
        %6237 = vmatpush2.msra.mxu0 0.0
        %6238 = vmatprep.mubr.f32.mxu0 0.0
        %v6239 = vand.u32 %v5799, 4294901760
        %6240 = vmatmul.mubr.f32.gmra.mxu0 %v6239
        %v6241 = vpop.f32.mrf.mxu0
        %v6242 = vadd.f32 %v6151, %v6241
        %v6243 = vpop.f32.mrf.mxu0
        %6244 = vmatprep.mubr.f32.mxu0 0.0
        %v6245 = vand.u32 %v5802, 4294901760
        %6246 = vmatmul.mubr.f32.gmra.mxu0 %v6245
        %v6247 = vpop.f32.mrf.mxu0
        %v6248 = vadd.f32 %v6159, %v6247
        %v6249 = vpop.f32.mrf.mxu0
        %6250 = vdwg.mxu0
        %6251 = vmatprep.subr.mxu0 0.0
        %6252 = vmatpush1.msra.mxu0 0.0
        %6253 = vmatprep.subr.mxu0 0.0
        %6254 = vmatpush1.msra.mxu0 0.0
        %6255 = vmatprep.subr.mxu0 0.0
        %6256 = vmatpush1.msra.mxu0 0.0
        %6257 = vmatprep.subr.mxu0 0.0
        %6258 = vmatpush1.msra.mxu0 0.0
        %6259 = vmatprep.subr.mxu0 0.0
        %6260 = vmatpush1.msra.mxu0 0.0
        %6261 = vmatprep.subr.mxu0 0.0
        %6262 = vmatpush1.msra.mxu0 0.0
        %6263 = vmatprep.subr.mxu0 0.0
        %6264 = vmatpush1.msra.mxu0 0.0
        %6265 = vmatprep.subr.mxu0 0.0
        %6266 = vmatpush1.msra.mxu0 0.0
        %6267 = vmatprep.subr.mxu0 0.0
        %6268 = vmatpush1.msra.mxu0 0.0
        %6269 = vmatprep.subr.mxu0 0.0
        %6270 = vmatpush1.msra.mxu0 0.0
        %6271 = vmatprep.subr.mxu0 0.0
        %6272 = vmatpush1.msra.mxu0 0.0
        %6273 = vmatprep.subr.mxu0 0.0
        %6274 = vmatpush1.msra.mxu0 0.0
        %6275 = vmatprep.subr.mxu0 0.0
        %v6276 = vand.u32 %v454, 4294901760
        %6277 = vmatpush1.msra.mxu0 %v6276
        %6278 = vmatprep.subr.mxu0 0.0
        %v6279 = vand.u32 %v453, 4294901760
        %6280 = vmatpush1.msra.mxu0 %v6279
        %6281 = vmatprep.subr.mxu0 0.0
        %v6282 = vand.u32 %v452, 4294901760
        %6283 = vmatpush1.msra.mxu0 %v6282
        %6284 = vmatprep.subr.mxu0 0.0
        %v6285 = vand.u32 %v451, 4294901760
        %6286 = vmatpush1.msra.mxu0 %v6285
        %6287 = vmatprep.subr.mxu0 0.0
        %6288 = vmatpush2.msra.mxu0 0.0
        %6289 = vmatprep.subr.mxu0 0.0
        %6290 = vmatpush2.msra.mxu0 0.0
        %6291 = vmatprep.subr.mxu0 0.0
        %6292 = vmatpush2.msra.mxu0 0.0
        %6293 = vmatprep.subr.mxu0 0.0
        %6294 = vmatpush2.msra.mxu0 0.0
        %6295 = vmatprep.subr.mxu0 0.0
        %6296 = vmatpush2.msra.mxu0 0.0
        %6297 = vmatprep.subr.mxu0 0.0
        %6298 = vmatpush2.msra.mxu0 0.0
        %6299 = vmatprep.subr.mxu0 0.0
        %6300 = vmatpush2.msra.mxu0 0.0
        %6301 = vmatprep.subr.mxu0 0.0
        %6302 = vmatpush2.msra.mxu0 0.0
        %6303 = vmatprep.subr.mxu0 0.0
        %6304 = vmatpush2.msra.mxu0 0.0
        %6305 = vmatprep.subr.mxu0 0.0
        %6306 = vmatpush2.msra.mxu0 0.0
        %6307 = vmatprep.subr.mxu0 0.0
        %6308 = vmatpush2.msra.mxu0 0.0
        %6309 = vmatprep.subr.mxu0 0.0
        %6310 = vmatpush2.msra.mxu0 0.0
        %6311 = vmatprep.subr.mxu0 0.0
        %6312 = vmatpush2.msra.mxu0 0.0
        %6313 = vmatprep.subr.mxu0 0.0
        %6314 = vmatpush2.msra.mxu0 0.0
        %6315 = vmatprep.subr.mxu0 0.0
        %6316 = vmatpush2.msra.mxu0 0.0
        %6317 = vmatprep.subr.mxu0 0.0
        %6318 = vmatpush2.msra.mxu0 0.0
        %6319 = vmatprep.mubr.f32.mxu0 0.0
        %v6320 = vand.u32 %v5799, 4294901760
        %6321 = vmatmul.mubr.f32.gmra.mxu0 %v6320
        %v6322 = vpop.f32.mrf.mxu0
        %v6323 = vadd.f32 %v6242, %v6322
        %v6324 = vpop.f32.mrf.mxu0
        %6325 = vmatprep.mubr.f32.mxu0 0.0
        %v6326 = vand.u32 %v5802, 4294901760
        %6327 = vmatmul.mubr.f32.gmra.mxu0 %v6326
        %v6328 = vpop.f32.mrf.mxu0
        %v6329 = vadd.f32 %v6248, %v6328
        %v6330 = vpop.f32.mrf.mxu0
        %6331 = vdwg.mxu0
        %v6332 = vadd.f32 %v5789, %v6323
        %v6333 = vadd.f32 %v5795, %v6329
        %v6334 = vadd.f32 %v6332, %v442
        %v6335 = vadd.f32 %v6333, %v442
        %v6336 = vtanh.pop %v6334
        %v6337 = vtanh.pop %v6335
        %v6338 = vmul.f32 %v6336, %v3632
        %v6339 = vmul.f32 %v6337, %v3632
        %6340 = vadd.xlane.f32.xlu0 %v6338
        %v6341 = vpop.xlane.xlu0 %6340
        %6342 = vadd.xlane.f32.xlu0 %v6339
        %v6343 = vpop.xlane.xlu0 %6342
        %v6344 = vstv %s456
        %v6345 = vadd.f32 %v6341, %v6344
        %v6346 = vadd.f32 %v6343, %v6344
        %v6349 = vlaneseq
        %v6350 = vshrl.u32 %v6349, 7
        %v6351 = vsub.s32 %v3713, %v6350
        %v6352 = vrot.slane %v6345, %v6351
        %v6353 = vlaneseq
        %v6354 = vshrl.u32 %v6353, 7
        %v6355 = vsub.s32 %v3713, %v6354
        %v6356 = vrot.slane %v6346, %v6355
        %v6357 = vsel %vm3778, %v6356, %v6352
        %vm6359 = vcmask 58368
        %6360 = vst.msk [vmem:[%s434] sm:$0x3] %vm6359, %v6357
        %s6361 = sand.u32 %s237, 1
        %s6362 = scalar_lea.sflag [#allocation5], %s6361
        %s6363 = sand.u32 %s237, 1
        %s6364 = smul.addr %s6363, 2
        %s6365 = scalar_lea.vmem [#allocation14], %s6364
        // Predicated region
        $region81: #{tpu_custom_call.1} parent=55 // pred_check
          %p6366 = pneg %p247
        $region82: #{tpu_custom_call.1} parent=55 // pred_check_branch
          %6368 = sbr.rel (%p6366) target = $region84
        $region83: #{tpu_custom_call.1} parent=55 // pred_region
          %s6370 = ssub.s32 32, 32
          %6371 = vsyncadd %s6362, %s6370
          %s6372 = smul.addr %s30, 32
          %s6373 = scalar_lea.hbm %s9, %s6372
          %s6375 = sshll.u32 %s6365, 4
          %s6376 = int_to_ptr.vmem [resolvable:$true] %s6375
          %6378 = dma.vmem_to_hbm [thread:$0]  %s6376, 32, %s6373, %s6362
        $region84: #{tpu_custom_call.1} parent=55 // pred_fallthru
          _
      $region56: #{tpu_custom_call.1} parent=5 // pred_fallthru
        _
      %p6379 = scmp.le.s32.totalorder 2, %s25
      // Predicated region
      $region85: #{tpu_custom_call.1} parent=5 // pred_check
        %p6380 = pneg %p6379
      $region86: #{tpu_custom_call.1} parent=5 // pred_check_branch
        %6382 = sbr.rel (%p6380) target = $region88
      $region87: #{tpu_custom_call.1} parent=5 // pred_region
        %s6383 = ssub.s32 %s25, 2
        // Predicated region
        $region89: #{tpu_custom_call.1} parent=87 // pred_check
          %p6384 = pneg %p253
        $region90: #{tpu_custom_call.1} parent=87 // pred_check_branch
          %6386 = sbr.rel (%p6384) target = $region92
        $region91: #{tpu_custom_call.1} parent=87 // pred_region
          %s6387 = sand.u32 %s238, 1
          %s6388 = scalar_lea.sflag [#allocation5], %s6387
          %s6389 = sand.u32 %s238, 1
          %s6390 = smul.addr %s6389, 2
          %s6391 = scalar_lea.vmem [#allocation14], %s6390
          %6392 = dma.done %s6388, 32
        $region92: #{tpu_custom_call.1} parent=87 // pred_fallthru
          _
      $region88: #{tpu_custom_call.1} parent=5 // pred_fallthru
        _
    $region6: #{tpu_custom_call.1} parent=1 // loop_footer
      %s29 = sadd.s32 1, %s25
    $region7: #{tpu_custom_call.1} parent=1 // loop_footer_branch
      %24 = sbr.rel target = $region3
    $region8: #{tpu_custom_call.1} parent=1 // loop_exit
      _
    %6393 = vsyncpa [#allocation4], 1
    %s6394 = scalar_lea.sflag [#allocation4], 1
    %6395 = vsyncpa %s6394, 1
    %6396 = vsyncpa [#allocation7], 1
    %6397 = vsyncpa [#allocation10], 1
    %6398 = vsyncpa [#allocation13], 1
    %s6399 = scalar_lea.sflag [#allocation13], 1
    %6400 = vsyncpa %s6399, 1
    %6401 = vsyncpa [#allocation5], 1
    %s6402 = scalar_lea.sflag [#allocation5], 1
    %6403 = vsyncpa %s6402, 1

</llo_original>
